<compile_context>
chip_gen: v6e
topology: v6e:2x2x1
jax: 0.10.0
libtpu: 0.0.40
codegen_flags: <defaults>
</compile_context>

<pallas_src>
import functools

import jax
import jax.numpy as jnp
from jax.experimental import pallas as pl
from jax.experimental.pallas import tpu as pltpu


# ------------------------------ helpers -------------------------------------

def _round_up(x, m):
    return (x + m - 1) // m * m


def _pick_batch_block(n, h1, w1, target_m=512):
    """Largest divisor Nb of n with Nb*H1*W1 <= max(target_m, H1*W1)."""
    best = 1
    for cand in range(1, n + 1):
        if n % cand == 0 and cand * h1 * w1 <= max(target_m, h1 * w1):
            best = cand
    return best


# ----------------------------- fused kernel ---------------------------------

def _make_fused_kernel(pool, d, Nb, Hp, Wp, Cin, Coutp, H1, W1, H2, W2):
    """Fused pool + conv1 + relu + conv2 + relu for static shapes."""

    def kernel(x_ref, w1_ref, b1_ref, w2_ref, b2_ref, o_ref, pad1, pad2):
        # ---- 2x2 max pool: one contiguous block, max taken in-kernel -------
        if pool:
            xr = x_ref[...]                                  # (Nb, 2Hp, Wp, 2Cin)
            xw = jnp.maximum(xr[..., :Cin], xr[..., Cin:])   # max over W pair
            xw = xw.reshape(Nb, Hp, 2, Wp, Cin)              # split major dim only
            x0 = jnp.maximum(xw[:, :, 0], xw[:, :, 1])       # max over H pair
        else:
            x0 = x_ref[...]                                  # (Nb, Hp, Wp, Cin)

        # ---- conv1: pad into VMEM scratch (border-only zeroing) ------------
        row0 = jnp.zeros((Nb, 1, Wp + 2, Cin), pad1.dtype)
        col0 = jnp.zeros((Nb, Hp + 2, 1, Cin), pad1.dtype)
        pad1[:, 0:1, :, :] = row0
        pad1[:, Hp + 1:Hp + 2, :, :] = row0
        pad1[:, :, 0:1, :] = col0
        pad1[:, :, Wp + 1:Wp + 2, :] = col0
        pad1[:, 1:Hp + 1, 1:Wp + 1, :] = x0.astype(pad1.dtype)

        M1 = Nb * H1 * W1
        acc1 = jnp.zeros((M1, Coutp), jnp.float32)
        for kh in range(3):
            for kw in range(3):
                win = pad1[:, kh * d:kh * d + H1, kw * d:kw * d + W1, :]
                acc1 = acc1 + jnp.dot(win.reshape(M1, Cin), w1_ref[kh, kw],
                                      preferred_element_type=jnp.float32)
        act1 = jnp.maximum(acc1 + b1_ref[...], 0.0)          # (M1, Coutp) f32

        # ---- conv2: act1 stays in VMEM, lane-dense (Coutp) channels --------
        row1 = jnp.zeros((Nb, 1, W1 + 2, Coutp), pad2.dtype)
        col1 = jnp.zeros((Nb, H1 + 2, 1, Coutp), pad2.dtype)
        pad2[:, 0:1, :, :] = row1
        pad2[:, H1 + 1:H1 + 2, :, :] = row1
        pad2[:, :, 0:1, :] = col1
        pad2[:, :, W1 + 1:W1 + 2, :] = col1
        pad2[:, 1:H1 + 1, 1:W1 + 1, :] = (
            act1.reshape(Nb, H1, W1, Coutp).astype(pad2.dtype))

        M2 = Nb * H2 * W2
        acc2 = jnp.zeros((M2, Coutp), jnp.float32)
        for kh in range(3):
            for kw in range(3):
                win = pad2[:, kh * d:kh * d + H2, kw * d:kw * d + W2, :]
                acc2 = acc2 + jnp.dot(win.reshape(M2, Coutp), w2_ref[kh, kw],
                                      preferred_element_type=jnp.float32)
        act2 = jnp.maximum(acc2 + b2_ref[...], 0.0)          # (M2, Coutp)

        # Dense 128-lane store (unmasked vst); wrapper slices padding off.
        o_ref[...] = act2.reshape(Nb, H2, W2, Coutp).astype(o_ref.dtype)

    return kernel


# ------------------------------- wrapper ------------------------------------

def down_block(x, params, dilation=1, pool=True, compute_dtype=jnp.float32):
    """x: (N, Cin, H, W) NCHW; returns NCHW, matching the PyTorch DownBlock."""
    N, Cin, H, W = x.shape
    d = int(dilation)
    w1, b1, w2, b2 = params["w1"], params["b1"], params["w2"], params["b2"]
    Cout = w1.shape[0]

    # NCHW -> NHWC once per block (TODO(synk): keep NHWC across blocks).
    xh = jnp.transpose(x, (0, 2, 3, 1))

    if pool:
        Hp, Wp = H // 2, W // 2                   # PyTorch floor behavior
        xh = xh[:, :2 * Hp, :2 * Wp, :]
        # Free reshape: each W-pair's channels become one last-dim group, so
        # the kernel gets ONE contiguous block and pools in-VMEM.
        x_in = xh.reshape(N, 2 * Hp, Wp, 2 * Cin)
    else:
        Hp, Wp = H, W
        x_in = xh

    # nn.Conv2d(k=3, padding=1, dilation=d): out = in + 2 - 2*d
    H1, W1 = Hp + 2 - 2 * d, Wp + 2 - 2 * d
    H2, W2 = H1 + 2 - 2 * d, W1 + 2 - 2 * d
    assert H1 > 0 and W1 > 0 and H2 > 0 and W2 > 0, (
        f"dilation={d} too large for pooled input {Hp}x{Wp}: "
        f"conv outputs would be {H1}x{W1} / {H2}x{W2}")

    cdt = compute_dtype
    Coutp = _round_up(Cout, 128)   # lane-dense matmul columns / result lanes

    # (Cout, Cin, 3, 3) -> (3, 3, Cin, Coutp): one padded (Cin, Coutp) matrix
    # per tap; zero-padded channels contribute nothing and are sliced off.
    w1t = jnp.transpose(w1, (2, 3, 1, 0)).astype(cdt)
    w2t = jnp.transpose(w2, (2, 3, 1, 0)).astype(cdt)
    w1p = jnp.zeros((3, 3, Cin, Coutp), cdt).at[..., :Cout].set(w1t)
    w2p = jnp.zeros((3, 3, Coutp, Coutp), cdt).at[:, :, :Cout, :Cout].set(w2t)
    b1p = jnp.zeros((1, Coutp), jnp.float32).at[:, :Cout].set(b1.reshape(1, Cout))
    b2p = jnp.zeros((1, Coutp), jnp.float32).at[:, :Cout].set(b2.reshape(1, Cout))

    Nb = _pick_batch_block(N, H1, W1)             # images per grid step
    grid = (N // Nb,)

    kernel = _make_fused_kernel(pool, d, Nb, Hp, Wp, Cin, Coutp,
                                H1, W1, H2, W2)

    if pool:
        x_spec = pl.BlockSpec((Nb, 2 * Hp, Wp, 2 * Cin), lambda n: (n, 0, 0, 0))
    else:
        x_spec = pl.BlockSpec((Nb, Hp, Wp, Cin), lambda n: (n, 0, 0, 0))

    in_specs = [
        x_spec,
        pl.BlockSpec((3, 3, Cin, Coutp), lambda n: (0, 0, 0, 0)),
        pl.BlockSpec((1, Coutp), lambda n: (0, 0)),
        pl.BlockSpec((3, 3, Coutp, Coutp), lambda n: (0, 0, 0, 0)),
        pl.BlockSpec((1, Coutp), lambda n: (0, 0)),
    ]
    out_spec = pl.BlockSpec((Nb, H2, W2, Coutp), lambda n: (n, 0, 0, 0))

    flops = 2 * N * 9 * (H1 * W1 * Cin * Coutp + H2 * W2 * Coutp * Coutp)
    bytes_accessed = 4 * (int(x_in.size) + int(w1p.size) + int(w2p.size)
                          + int(b1p.size) + int(b2p.size)
                          + N * H2 * W2 * Coutp)

    out = pl.pallas_call(
        kernel,
        out_shape=jax.ShapeDtypeStruct((N, H2, W2, Coutp), x.dtype),
        grid_spec=pltpu.PrefetchScalarGridSpec(
            num_scalar_prefetch=0,
            grid=grid,
            in_specs=in_specs,
            out_specs=out_spec,
            scratch_shapes=[
                pltpu.VMEM((Nb, Hp + 2, Wp + 2, Cin), cdt),    # padded pool
                pltpu.VMEM((Nb, H1 + 2, W1 + 2, Coutp), cdt),  # padded act1
            ],
        ),
        # TODO(synk): on v7x, switch this axis to pltpu.CORE_PARALLEL once the
        # batch/grid blocking guarantees >=1 step per TensorCore.
        compiler_params=pltpu.CompilerParams(
            dimension_semantics=("parallel",),
        ),
        cost_estimate=pl.CostEstimate(
            flops=flops, transcendentals=0, bytes_accessed=bytes_accessed),
    )(x_in, w1p, b1p, w2p, b2p)

    out = out[..., :Cout]                         # drop channel lane-padding
    return jnp.transpose(out, (0, 3, 1, 2))       # NHWC -> NCHW


# --------------------------- parameter init ----------------------------------

def init_down_block_params(key, inchannels, outchannels):
    """Mirrors the PyTorch module init: kaiming_normal_ weights, default
    uniform(-1/sqrt(fan_in), 1/sqrt(fan_in)) biases."""
    k1, k2, k3, k4 = jax.random.split(key, 4)
    fan1 = inchannels * 9
    fan2 = outchannels * 9
    w1 = jax.random.normal(k1, (outchannels, inchannels, 3, 3),
                           jnp.float32) * (2.0 / fan1) ** 0.5
    b1 = jax.random.uniform(k2, (outchannels,), jnp.float32,
                            -(1.0 / fan1) ** 0.5, (1.0 / fan1) ** 0.5)
    w2 = jax.random.normal(k3, (outchannels, outchannels, 3, 3),
                           jnp.float32) * (2.0 / fan2) ** 0.5
    b2 = jax.random.uniform(k4, (outchannels,), jnp.float32,
                            -(1.0 / fan2) ** 0.5, (1.0 / fan2) ** 0.5)
    return dict(w1=w1, b1=b1, w2=w2, b2=b2)


# ------------------------------ reference ------------------------------------

def _ref_down_block(x, params, dilation=1, pool=True):
    if pool:
        x = jax.lax.reduce_window(x, -jnp.inf, jax.lax.max,
                                  (1, 1, 2, 2), (1, 1, 2, 2), "VALID")

    def conv(x, w, b):
        y = jax.lax.conv_general_dilated(
            x, w, window_strides=(1, 1), padding=[(1, 1), (1, 1)],
            rhs_dilation=(dilation, dilation),
            dimension_numbers=("NCHW", "OIHW", "NCHW"))
        return jax.nn.relu(y + b[None, :, None, None])

    x = conv(x, params["w1"], params["b1"])
    x = conv(x, params["w2"], params["b2"])
    return x


# -------------------------------- main ----------------------------------------

if __name__ == "__main__":
    key = jax.random.PRNGKey(0)
    kx, kp = jax.random.split(key)

    inchannels, outchannels, dilation = 4, 8, 1
    x = jax.random.normal(kx, (2, inchannels, 16, 16), jnp.float32)
    params = init_down_block_params(kp, inchannels, outchannels)

    fwd = jax.jit(functools.partial(down_block, dilation=dilation, pool=True))
    out = jax.block_until_ready(fwd(x, params))

    ref = jax.block_until_ready(
        _ref_down_block(x, params, dilation=dilation, pool=True))
    assert out.shape == ref.shape, (out.shape, ref.shape)
    assert jnp.allclose(out, ref, atol=1e-3, rtol=1e-3), \
        float(jnp.max(jnp.abs(out - ref)))

    print("KERNEL_OK")
</pallas_src>

<mosaic_0001>
module attributes {stable_mosaic.version = 11 : i64} {
  func.func @kernel(%arg0: i32, %arg1: memref<2x16x8x8xf32, #tpu.memory_space<vmem>>, %arg2: memref<3x3x4x128xf32, #tpu.memory_space<vmem>>, %arg3: memref<1x128xf32, #tpu.memory_space<vmem>>, %arg4: memref<3x3x128x128xf32, #tpu.memory_space<vmem>>, %arg5: memref<1x128xf32, #tpu.memory_space<vmem>>, %arg6: memref<2x8x8x128xf32, #tpu.memory_space<vmem>>, %arg7: memref<2x10x10x4xf32, #tpu.memory_space<vmem>>, %arg8: memref<2x10x10x128xf32, #tpu.memory_space<vmem>>) attributes {dimension_semantics = [#tpu.dimension_semantics<parallel>], iteration_bounds = array<i64: 1>, scalar_prefetch = 0 : i64, scratch_operands = 2 : i64, tpu.core_type = #tpu.core_type<tc>, window_params = [{transform_indices = @transform_0, window_bounds = array<i64: 2, 16, 8, 8>}, {pipeline_mode = #tpu.pipeline_mode<synchronous>, transform_indices = @transform_1, window_bounds = array<i64: 3, 3, 4, 128>}, {pipeline_mode = #tpu.pipeline_mode<synchronous>, transform_indices = @transform_2, window_bounds = array<i64: 1, 128>}, {pipeline_mode = #tpu.pipeline_mode<synchronous>, transform_indices = @transform_3, window_bounds = array<i64: 3, 3, 128, 128>}, {pipeline_mode = #tpu.pipeline_mode<synchronous>, transform_indices = @transform_4, window_bounds = array<i64: 1, 128>}, {transform_indices = @transform_5, window_bounds = array<i64: 2, 8, 8, 128>}]} {
    %c0 = arith.constant 0 : index
    %c0_0 = arith.constant 0 : index
    %c0_1 = arith.constant 0 : index
    %c0_2 = arith.constant 0 : index
    %0 = vector.load %arg1[%c0, %c0_0, %c0_1, %c0_2] : memref<2x16x8x8xf32, #tpu.memory_space<vmem>>, vector<2x16x8x8xf32>
    %1 = vector.extract_strided_slice %0 {offsets = [0, 0, 0, 0], sizes = [2, 16, 8, 4], strides = [1, 1, 1, 1]} : vector<2x16x8x8xf32> to vector<2x16x8x4xf32>
    %2 = vector.extract_strided_slice %0 {offsets = [0, 0, 0, 4], sizes = [2, 16, 8, 4], strides = [1, 1, 1, 1]} : vector<2x16x8x8xf32> to vector<2x16x8x4xf32>
    %3 = arith.maximumf %1, %2 : vector<2x16x8x4xf32>
    %4 = vector.shape_cast %3 : vector<2x16x8x4xf32> to vector<2x8x2x8x4xf32>
    %5 = vector.extract_strided_slice %4 {offsets = [0, 0, 0, 0, 0], sizes = [2, 8, 1, 8, 4], strides = [1, 1, 1, 1, 1]} : vector<2x8x2x8x4xf32> to vector<2x8x1x8x4xf32>
    %6 = vector.shape_cast %5 : vector<2x8x1x8x4xf32> to vector<2x8x8x4xf32>
    %7 = vector.extract_strided_slice %4 {offsets = [0, 0, 1, 0, 0], sizes = [2, 8, 1, 8, 4], strides = [1, 1, 1, 1, 1]} : vector<2x8x2x8x4xf32> to vector<2x8x1x8x4xf32>
    %8 = vector.shape_cast %7 : vector<2x8x1x8x4xf32> to vector<2x8x8x4xf32>
    %9 = arith.maximumf %6, %8 : vector<2x8x8x4xf32>
    %cst = arith.constant 0.000000e+00 : f32
    %10 = vector.broadcast %cst : f32 to vector<2x1x10x4xf32>
    %cst_3 = arith.constant 0.000000e+00 : f32
    %11 = vector.broadcast %cst_3 : f32 to vector<2x10x1x4xf32>
    %c0_4 = arith.constant 0 : index
    %c0_5 = arith.constant 0 : index
    %c0_6 = arith.constant 0 : index
    %c0_7 = arith.constant 0 : index
    %12 = vector.load %arg7[%c0_4, %c0_5, %c0_6, %c0_7] : memref<2x10x10x4xf32, #tpu.memory_space<vmem>>, vector<2x1x10x4xf32>
    tpu.vector_store %arg7[%c0_4, %c0_5, %c0_6, %c0_7], %10 {strides = array<i32>} : memref<2x10x10x4xf32, #tpu.memory_space<vmem>>, vector<2x1x10x4xf32>,
    %c0_8 = arith.constant 0 : index
    %c9 = arith.constant 9 : index
    %c0_9 = arith.constant 0 : index
    %c0_10 = arith.constant 0 : index
    %13 = vector.load %arg7[%c0_8, %c9, %c0_9, %c0_10] : memref<2x10x10x4xf32, #tpu.memory_space<vmem>>, vector<2x1x10x4xf32>
    tpu.vector_store %arg7[%c0_8, %c9, %c0_9, %c0_10], %10 {strides = array<i32>} : memref<2x10x10x4xf32, #tpu.memory_space<vmem>>, vector<2x1x10x4xf32>,
    %c0_11 = arith.constant 0 : index
    %c0_12 = arith.constant 0 : index
    %c0_13 = arith.constant 0 : index
    %c0_14 = arith.constant 0 : index
    %14 = vector.load %arg7[%c0_11, %c0_12, %c0_13, %c0_14] : memref<2x10x10x4xf32, #tpu.memory_space<vmem>>, vector<2x10x1x4xf32>
    tpu.vector_store %arg7[%c0_11, %c0_12, %c0_13, %c0_14], %11 {strides = array<i32>} : memref<2x10x10x4xf32, #tpu.memory_space<vmem>>, vector<2x10x1x4xf32>,
    %c0_15 = arith.constant 0 : index
    %c0_16 = arith.constant 0 : index
    %c9_17 = arith.constant 9 : index
    %c0_18 = arith.constant 0 : index
    %15 = vector.load %arg7[%c0_15, %c0_16, %c9_17, %c0_18] : memref<2x10x10x4xf32, #tpu.memory_space<vmem>>, vector<2x10x1x4xf32>
    tpu.vector_store %arg7[%c0_15, %c0_16, %c9_17, %c0_18], %11 {strides = array<i32>} : memref<2x10x10x4xf32, #tpu.memory_space<vmem>>, vector<2x10x1x4xf32>,
    %c0_19 = arith.constant 0 : index
    %c1 = arith.constant 1 : index
    %c1_20 = arith.constant 1 : index
    %c0_21 = arith.constant 0 : index
    %16 = vector.load %arg7[%c0_19, %c1, %c1_20, %c0_21] : memref<2x10x10x4xf32, #tpu.memory_space<vmem>>, vector<2x8x8x4xf32>
    tpu.vector_store %arg7[%c0_19, %c1, %c1_20, %c0_21], %9 {strides = array<i32>} : memref<2x10x10x4xf32, #tpu.memory_space<vmem>>, vector<2x8x8x4xf32>,
    %cst_22 = arith.constant 0.000000e+00 : f32
    %17 = vector.broadcast %cst_22 : f32 to vector<128x128xf32>
    %c0_23 = arith.constant 0 : index
    %c0_24 = arith.constant 0 : index
    %c0_25 = arith.constant 0 : index
    %c0_26 = arith.constant 0 : index
    %18 = vector.load %arg7[%c0_23, %c0_24, %c0_25, %c0_26] : memref<2x10x10x4xf32, #tpu.memory_space<vmem>>, vector<2x8x8x4xf32>
    %19 = vector.shape_cast %18 : vector<2x8x8x4xf32> to vector<128x4xf32>
    %c0_27 = arith.constant 0 : index
    %c0_28 = arith.constant 0 : index
    %c0_29 = arith.constant 0 : index
    %c0_30 = arith.constant 0 : index
    %20 = vector.load %arg2[%c0_27, %c0_28, %c0_29, %c0_30] : memref<3x3x4x128xf32, #tpu.memory_space<vmem>>, vector<1x1x4x128xf32>
    %21 = vector.shape_cast %20 : vector<1x1x4x128xf32> to vector<4x128xf32>
    %cst_31 = arith.constant dense<0.000000e+00> : vector<128x128xf32>
    %22 = tpu.matmul %19, %21, %cst_31 {dimension_numbers = #tpu.dot_dimension_numbers<[1], [0], [0], [1], [0, 0, 1, 1], [], []>} : vector<128x4xf32>, vector<4x128xf32>, vector<128x128xf32> -> vector<128x128xf32>
    %23 = arith.addf %17, %22 : vector<128x128xf32>
    %c0_32 = arith.constant 0 : index
    %c0_33 = arith.constant 0 : index
    %c1_34 = arith.constant 1 : index
    %c0_35 = arith.constant 0 : index
    %24 = vector.load %arg7[%c0_32, %c0_33, %c1_34, %c0_35] : memref<2x10x10x4xf32, #tpu.memory_space<vmem>>, vector<2x8x8x4xf32>
    %25 = vector.shape_cast %24 : vector<2x8x8x4xf32> to vector<128x4xf32>
    %c0_36 = arith.constant 0 : index
    %c1_37 = arith.constant 1 : index
    %c0_38 = arith.constant 0 : index
    %c0_39 = arith.constant 0 : index
    %26 = vector.load %arg2[%c0_36, %c1_37, %c0_38, %c0_39] : memref<3x3x4x128xf32, #tpu.memory_space<vmem>>, vector<1x1x4x128xf32>
    %27 = vector.shape_cast %26 : vector<1x1x4x128xf32> to vector<4x128xf32>
    %cst_40 = arith.constant dense<0.000000e+00> : vector<128x128xf32>
    %28 = tpu.matmul %25, %27, %cst_40 {dimension_numbers = #tpu.dot_dimension_numbers<[1], [0], [0], [1], [0, 0, 1, 1], [], []>} : vector<128x4xf32>, vector<4x128xf32>, vector<128x128xf32> -> vector<128x128xf32>
    %29 = arith.addf %23, %28 : vector<128x128xf32>
    %c0_41 = arith.constant 0 : index
    %c0_42 = arith.constant 0 : index
    %c2 = arith.constant 2 : index
    %c0_43 = arith.constant 0 : index
    %30 = vector.load %arg7[%c0_41, %c0_42, %c2, %c0_43] : memref<2x10x10x4xf32, #tpu.memory_space<vmem>>, vector<2x8x8x4xf32>
    %31 = vector.shape_cast %30 : vector<2x8x8x4xf32> to vector<128x4xf32>
    %c0_44 = arith.constant 0 : index
    %c2_45 = arith.constant 2 : index
    %c0_46 = arith.constant 0 : index
    %c0_47 = arith.constant 0 : index
    %32 = vector.load %arg2[%c0_44, %c2_45, %c0_46, %c0_47] : memref<3x3x4x128xf32, #tpu.memory_space<vmem>>, vector<1x1x4x128xf32>
    %33 = vector.shape_cast %32 : vector<1x1x4x128xf32> to vector<4x128xf32>
    %cst_48 = arith.constant dense<0.000000e+00> : vector<128x128xf32>
    %34 = tpu.matmul %31, %33, %cst_48 {dimension_numbers = #tpu.dot_dimension_numbers<[1], [0], [0], [1], [0, 0, 1, 1], [], []>} : vector<128x4xf32>, vector<4x128xf32>, vector<128x128xf32> -> vector<128x128xf32>
    %35 = arith.addf %29, %34 : vector<128x128xf32>
    %c0_49 = arith.constant 0 : index
    %c1_50 = arith.constant 1 : index
    %c0_51 = arith.constant 0 : index
    %c0_52 = arith.constant 0 : index
    %36 = vector.load %arg7[%c0_49, %c1_50, %c0_51, %c0_52] : memref<2x10x10x4xf32, #tpu.memory_space<vmem>>, vector<2x8x8x4xf32>
    %37 = vector.shape_cast %36 : vector<2x8x8x4xf32> to vector<128x4xf32>
    %c1_53 = arith.constant 1 : index
    %c0_54 = arith.constant 0 : index
    %c0_55 = arith.constant 0 : index
    %c0_56 = arith.constant 0 : index
    %38 = vector.load %arg2[%c1_53, %c0_54, %c0_55, %c0_56] : memref<3x3x4x128xf32, #tpu.memory_space<vmem>>, vector<1x1x4x128xf32>
    %39 = vector.shape_cast %38 : vector<1x1x4x128xf32> to vector<4x128xf32>
    %cst_57 = arith.constant dense<0.000000e+00> : vector<128x128xf32>
    %40 = tpu.matmul %37, %39, %cst_57 {dimension_numbers = #tpu.dot_dimension_numbers<[1], [0], [0], [1], [0, 0, 1, 1], [], []>} : vector<128x4xf32>, vector<4x128xf32>, vector<128x128xf32> -> vector<128x128xf32>
    %41 = arith.addf %35, %40 : vector<128x128xf32>
    %c0_58 = arith.constant 0 : index
    %c1_59 = arith.constant 1 : index
    %c1_60 = arith.constant 1 : index
    %c0_61 = arith.constant 0 : index
    %42 = vector.load %arg7[%c0_58, %c1_59, %c1_60, %c0_61] : memref<2x10x10x4xf32, #tpu.memory_space<vmem>>, vector<2x8x8x4xf32>
    %43 = vector.shape_cast %42 : vector<2x8x8x4xf32> to vector<128x4xf32>
    %c1_62 = arith.constant 1 : index
    %c1_63 = arith.constant 1 : index
    %c0_64 = arith.constant 0 : index
    %c0_65 = arith.constant 0 : index
    %44 = vector.load %arg2[%c1_62, %c1_63, %c0_64, %c0_65] : memref<3x3x4x128xf32, #tpu.memory_space<vmem>>, vector<1x1x4x128xf32>
    %45 = vector.shape_cast %44 : vector<1x1x4x128xf32> to vector<4x128xf32>
    %cst_66 = arith.constant dense<0.000000e+00> : vector<128x128xf32>
    %46 = tpu.matmul %43, %45, %cst_66 {dimension_numbers = #tpu.dot_dimension_numbers<[1], [0], [0], [1], [0, 0, 1, 1], [], []>} : vector<128x4xf32>, vector<4x128xf32>, vector<128x128xf32> -> vector<128x128xf32>
    %47 = arith.addf %41, %46 : vector<128x128xf32>
    %c0_67 = arith.constant 0 : index
    %c1_68 = arith.constant 1 : index
    %c2_69 = arith.constant 2 : index
    %c0_70 = arith.constant 0 : index
    %48 = vector.load %arg7[%c0_67, %c1_68, %c2_69, %c0_70] : memref<2x10x10x4xf32, #tpu.memory_space<vmem>>, vector<2x8x8x4xf32>
    %49 = vector.shape_cast %48 : vector<2x8x8x4xf32> to vector<128x4xf32>
    %c1_71 = arith.constant 1 : index
    %c2_72 = arith.constant 2 : index
    %c0_73 = arith.constant 0 : index
    %c0_74 = arith.constant 0 : index
    %50 = vector.load %arg2[%c1_71, %c2_72, %c0_73, %c0_74] : memref<3x3x4x128xf32, #tpu.memory_space<vmem>>, vector<1x1x4x128xf32>
    %51 = vector.shape_cast %50 : vector<1x1x4x128xf32> to vector<4x128xf32>
    %cst_75 = arith.constant dense<0.000000e+00> : vector<128x128xf32>
    %52 = tpu.matmul %49, %51, %cst_75 {dimension_numbers = #tpu.dot_dimension_numbers<[1], [0], [0], [1], [0, 0, 1, 1], [], []>} : vector<128x4xf32>, vector<4x128xf32>, vector<128x128xf32> -> vector<128x128xf32>
    %53 = arith.addf %47, %52 : vector<128x128xf32>
    %c0_76 = arith.constant 0 : index
    %c2_77 = arith.constant 2 : index
    %c0_78 = arith.constant 0 : index
    %c0_79 = arith.constant 0 : index
    %54 = vector.load %arg7[%c0_76, %c2_77, %c0_78, %c0_79] : memref<2x10x10x4xf32, #tpu.memory_space<vmem>>, vector<2x8x8x4xf32>
    %55 = vector.shape_cast %54 : vector<2x8x8x4xf32> to vector<128x4xf32>
    %c2_80 = arith.constant 2 : index
    %c0_81 = arith.constant 0 : index
    %c0_82 = arith.constant 0 : index
    %c0_83 = arith.constant 0 : index
    %56 = vector.load %arg2[%c2_80, %c0_81, %c0_82, %c0_83] : memref<3x3x4x128xf32, #tpu.memory_space<vmem>>, vector<1x1x4x128xf32>
    %57 = vector.shape_cast %56 : vector<1x1x4x128xf32> to vector<4x128xf32>
    %cst_84 = arith.constant dense<0.000000e+00> : vector<128x128xf32>
    %58 = tpu.matmul %55, %57, %cst_84 {dimension_numbers = #tpu.dot_dimension_numbers<[1], [0], [0], [1], [0, 0, 1, 1], [], []>} : vector<128x4xf32>, vector<4x128xf32>, vector<128x128xf32> -> vector<128x128xf32>
    %59 = arith.addf %53, %58 : vector<128x128xf32>
    %c0_85 = arith.constant 0 : index
    %c2_86 = arith.constant 2 : index
    %c1_87 = arith.constant 1 : index
    %c0_88 = arith.constant 0 : index
    %60 = vector.load %arg7[%c0_85, %c2_86, %c1_87, %c0_88] : memref<2x10x10x4xf32, #tpu.memory_space<vmem>>, vector<2x8x8x4xf32>
    %61 = vector.shape_cast %60 : vector<2x8x8x4xf32> to vector<128x4xf32>
    %c2_89 = arith.constant 2 : index
    %c1_90 = arith.constant 1 : index
    %c0_91 = arith.constant 0 : index
    %c0_92 = arith.constant 0 : index
    %62 = vector.load %arg2[%c2_89, %c1_90, %c0_91, %c0_92] : memref<3x3x4x128xf32, #tpu.memory_space<vmem>>, vector<1x1x4x128xf32>
    %63 = vector.shape_cast %62 : vector<1x1x4x128xf32> to vector<4x128xf32>
    %cst_93 = arith.constant dense<0.000000e+00> : vector<128x128xf32>
    %64 = tpu.matmul %61, %63, %cst_93 {dimension_numbers = #tpu.dot_dimension_numbers<[1], [0], [0], [1], [0, 0, 1, 1], [], []>} : vector<128x4xf32>, vector<4x128xf32>, vector<128x128xf32> -> vector<128x128xf32>
    %65 = arith.addf %59, %64 : vector<128x128xf32>
    %c0_94 = arith.constant 0 : index
    %c2_95 = arith.constant 2 : index
    %c2_96 = arith.constant 2 : index
    %c0_97 = arith.constant 0 : index
    %66 = vector.load %arg7[%c0_94, %c2_95, %c2_96, %c0_97] : memref<2x10x10x4xf32, #tpu.memory_space<vmem>>, vector<2x8x8x4xf32>
    %67 = vector.shape_cast %66 : vector<2x8x8x4xf32> to vector<128x4xf32>
    %c2_98 = arith.constant 2 : index
    %c2_99 = arith.constant 2 : index
    %c0_100 = arith.constant 0 : index
    %c0_101 = arith.constant 0 : index
    %68 = vector.load %arg2[%c2_98, %c2_99, %c0_100, %c0_101] : memref<3x3x4x128xf32, #tpu.memory_space<vmem>>, vector<1x1x4x128xf32>
    %69 = vector.shape_cast %68 : vector<1x1x4x128xf32> to vector<4x128xf32>
    %cst_102 = arith.constant dense<0.000000e+00> : vector<128x128xf32>
    %70 = tpu.matmul %67, %69, %cst_102 {dimension_numbers = #tpu.dot_dimension_numbers<[1], [0], [0], [1], [0, 0, 1, 1], [], []>} : vector<128x4xf32>, vector<4x128xf32>, vector<128x128xf32> -> vector<128x128xf32>
    %71 = arith.addf %65, %70 : vector<128x128xf32>
    %c0_103 = arith.constant 0 : index
    %c0_104 = arith.constant 0 : index
    %72 = vector.load %arg3[%c0_103, %c0_104] : memref<1x128xf32, #tpu.memory_space<vmem>>, vector<1x128xf32>
    %73 = vector.broadcast %72 : vector<1x128xf32> to vector<128x128xf32>
    %74 = arith.addf %71, %73 : vector<128x128xf32>
    %cst_105 = arith.constant 0.000000e+00 : f32
    %75 = vector.broadcast %cst_105 : f32 to vector<128x128xf32>
    %76 = arith.maximumf %74, %75 : vector<128x128xf32>
    %cst_106 = arith.constant 0.000000e+00 : f32
    %77 = vector.broadcast %cst_106 : f32 to vector<2x1x10x128xf32>
    %cst_107 = arith.constant 0.000000e+00 : f32
    %78 = vector.broadcast %cst_107 : f32 to vector<2x10x1x128xf32>
    %c0_108 = arith.constant 0 : index
    %c0_109 = arith.constant 0 : index
    %c0_110 = arith.constant 0 : index
    %c0_111 = arith.constant 0 : index
    %79 = vector.load %arg8[%c0_108, %c0_109, %c0_110, %c0_111] : memref<2x10x10x128xf32, #tpu.memory_space<vmem>>, vector<2x1x10x128xf32>
    tpu.vector_store %arg8[%c0_108, %c0_109, %c0_110, %c0_111], %77 {strides = array<i32>} : memref<2x10x10x128xf32, #tpu.memory_space<vmem>>, vector<2x1x10x128xf32>,
    %c0_112 = arith.constant 0 : index
    %c9_113 = arith.constant 9 : index
    %c0_114 = arith.constant 0 : index
    %c0_115 = arith.constant 0 : index
    %80 = vector.load %arg8[%c0_112, %c9_113, %c0_114, %c0_115] : memref<2x10x10x128xf32, #tpu.memory_space<vmem>>, vector<2x1x10x128xf32>
    tpu.vector_store %arg8[%c0_112, %c9_113, %c0_114, %c0_115], %77 {strides = array<i32>} : memref<2x10x10x128xf32, #tpu.memory_space<vmem>>, vector<2x1x10x128xf32>,
    %c0_116 = arith.constant 0 : index
    %c0_117 = arith.constant 0 : index
    %c0_118 = arith.constant 0 : index
    %c0_119 = arith.constant 0 : index
    %81 = vector.load %arg8[%c0_116, %c0_117, %c0_118, %c0_119] : memref<2x10x10x128xf32, #tpu.memory_space<vmem>>, vector<2x10x1x128xf32>
    tpu.vector_store %arg8[%c0_116, %c0_117, %c0_118, %c0_119], %78 {strides = array<i32>} : memref<2x10x10x128xf32, #tpu.memory_space<vmem>>, vector<2x10x1x128xf32>,
    %c0_120 = arith.constant 0 : index
    %c0_121 = arith.constant 0 : index
    %c9_122 = arith.constant 9 : index
    %c0_123 = arith.constant 0 : index
    %82 = vector.load %arg8[%c0_120, %c0_121, %c9_122, %c0_123] : memref<2x10x10x128xf32, #tpu.memory_space<vmem>>, vector<2x10x1x128xf32>
    tpu.vector_store %arg8[%c0_120, %c0_121, %c9_122, %c0_123], %78 {strides = array<i32>} : memref<2x10x10x128xf32, #tpu.memory_space<vmem>>, vector<2x10x1x128xf32>,
    %83 = vector.shape_cast %76 : vector<128x128xf32> to vector<2x8x8x128xf32>
    %c0_124 = arith.constant 0 : index
    %c1_125 = arith.constant 1 : index
    %c1_126 = arith.constant 1 : index
    %c0_127 = arith.constant 0 : index
    %84 = vector.load %arg8[%c0_124, %c1_125, %c1_126, %c0_127] : memref<2x10x10x128xf32, #tpu.memory_space<vmem>>, vector<2x8x8x128xf32>
    tpu.vector_store %arg8[%c0_124, %c1_125, %c1_126, %c0_127], %83 {strides = array<i32>} : memref<2x10x10x128xf32, #tpu.memory_space<vmem>>, vector<2x8x8x128xf32>,
    %cst_128 = arith.constant 0.000000e+00 : f32
    %85 = vector.broadcast %cst_128 : f32 to vector<128x128xf32>
    %c0_129 = arith.constant 0 : index
    %c0_130 = arith.constant 0 : index
    %c0_131 = arith.constant 0 : index
    %c0_132 = arith.constant 0 : index
    %86 = vector.load %arg8[%c0_129, %c0_130, %c0_131, %c0_132] : memref<2x10x10x128xf32, #tpu.memory_space<vmem>>, vector<2x8x8x128xf32>
    %87 = vector.shape_cast %86 : vector<2x8x8x128xf32> to vector<128x128xf32>
    %c0_133 = arith.constant 0 : index
    %c0_134 = arith.constant 0 : index
    %c0_135 = arith.constant 0 : index
    %c0_136 = arith.constant 0 : index
    %88 = vector.load %arg4[%c0_133, %c0_134, %c0_135, %c0_136] : memref<3x3x128x128xf32, #tpu.memory_space<vmem>>, vector<1x1x128x128xf32>
    %89 = vector.shape_cast %88 : vector<1x1x128x128xf32> to vector<128x128xf32>
    %cst_137 = arith.constant dense<0.000000e+00> : vector<128x128xf32>
    %90 = tpu.matmul %87, %89, %cst_137 {dimension_numbers = #tpu.dot_dimension_numbers<[1], [0], [0], [1], [0, 0, 1, 1], [], []>} : vector<128x128xf32>, vector<128x128xf32>, vector<128x128xf32> -> vector<128x128xf32>
    %91 = arith.addf %85, %90 : vector<128x128xf32>
    %c0_138 = arith.constant 0 : index
    %c0_139 = arith.constant 0 : index
    %c1_140 = arith.constant 1 : index
    %c0_141 = arith.constant 0 : index
    %92 = vector.load %arg8[%c0_138, %c0_139, %c1_140, %c0_141] : memref<2x10x10x128xf32, #tpu.memory_space<vmem>>, vector<2x8x8x128xf32>
    %93 = vector.shape_cast %92 : vector<2x8x8x128xf32> to vector<128x128xf32>
    %c0_142 = arith.constant 0 : index
    %c1_143 = arith.constant 1 : index
    %c0_144 = arith.constant 0 : index
    %c0_145 = arith.constant 0 : index
    %94 = vector.load %arg4[%c0_142, %c1_143, %c0_144, %c0_145] : memref<3x3x128x128xf32, #tpu.memory_space<vmem>>, vector<1x1x128x128xf32>
    %95 = vector.shape_cast %94 : vector<1x1x128x128xf32> to vector<128x128xf32>
    %cst_146 = arith.constant dense<0.000000e+00> : vector<128x128xf32>
    %96 = tpu.matmul %93, %95, %cst_146 {dimension_numbers = #tpu.dot_dimension_numbers<[1], [0], [0], [1], [0, 0, 1, 1], [], []>} : vector<128x128xf32>, vector<128x128xf32>, vector<128x128xf32> -> vector<128x128xf32>
    %97 = arith.addf %91, %96 : vector<128x128xf32>
    %c0_147 = arith.constant 0 : index
    %c0_148 = arith.constant 0 : index
    %c2_149 = arith.constant 2 : index
    %c0_150 = arith.constant 0 : index
    %98 = vector.load %arg8[%c0_147, %c0_148, %c2_149, %c0_150] : memref<2x10x10x128xf32, #tpu.memory_space<vmem>>, vector<2x8x8x128xf32>
    %99 = vector.shape_cast %98 : vector<2x8x8x128xf32> to vector<128x128xf32>
    %c0_151 = arith.constant 0 : index
    %c2_152 = arith.constant 2 : index
    %c0_153 = arith.constant 0 : index
    %c0_154 = arith.constant 0 : index
    %100 = vector.load %arg4[%c0_151, %c2_152, %c0_153, %c0_154] : memref<3x3x128x128xf32, #tpu.memory_space<vmem>>, vector<1x1x128x128xf32>
    %101 = vector.shape_cast %100 : vector<1x1x128x128xf32> to vector<128x128xf32>
    %cst_155 = arith.constant dense<0.000000e+00> : vector<128x128xf32>
    %102 = tpu.matmul %99, %101, %cst_155 {dimension_numbers = #tpu.dot_dimension_numbers<[1], [0], [0], [1], [0, 0, 1, 1], [], []>} : vector<128x128xf32>, vector<128x128xf32>, vector<128x128xf32> -> vector<128x128xf32>
    %103 = arith.addf %97, %102 : vector<128x128xf32>
    %c0_156 = arith.constant 0 : index
    %c1_157 = arith.constant 1 : index
    %c0_158 = arith.constant 0 : index
    %c0_159 = arith.constant 0 : index
    %104 = vector.load %arg8[%c0_156, %c1_157, %c0_158, %c0_159] : memref<2x10x10x128xf32, #tpu.memory_space<vmem>>, vector<2x8x8x128xf32>
    %105 = vector.shape_cast %104 : vector<2x8x8x128xf32> to vector<128x128xf32>
    %c1_160 = arith.constant 1 : index
    %c0_161 = arith.constant 0 : index
    %c0_162 = arith.constant 0 : index
    %c0_163 = arith.constant 0 : index
    %106 = vector.load %arg4[%c1_160, %c0_161, %c0_162, %c0_163] : memref<3x3x128x128xf32, #tpu.memory_space<vmem>>, vector<1x1x128x128xf32>
    %107 = vector.shape_cast %106 : vector<1x1x128x128xf32> to vector<128x128xf32>
    %cst_164 = arith.constant dense<0.000000e+00> : vector<128x128xf32>
    %108 = tpu.matmul %105, %107, %cst_164 {dimension_numbers = #tpu.dot_dimension_numbers<[1], [0], [0], [1], [0, 0, 1, 1], [], []>} : vector<128x128xf32>, vector<128x128xf32>, vector<128x128xf32> -> vector<128x128xf32>
    %109 = arith.addf %103, %108 : vector<128x128xf32>
    %c0_165 = arith.constant 0 : index
    %c1_166 = arith.constant 1 : index
    %c1_167 = arith.constant 1 : index
    %c0_168 = arith.constant 0 : index
    %110 = vector.load %arg8[%c0_165, %c1_166, %c1_167, %c0_168] : memref<2x10x10x128xf32, #tpu.memory_space<vmem>>, vector<2x8x8x128xf32>
    %111 = vector.shape_cast %110 : vector<2x8x8x128xf32> to vector<128x128xf32>
    %c1_169 = arith.constant 1 : index
    %c1_170 = arith.constant 1 : index
    %c0_171 = arith.constant 0 : index
    %c0_172 = arith.constant 0 : index
    %112 = vector.load %arg4[%c1_169, %c1_170, %c0_171, %c0_172] : memref<3x3x128x128xf32, #tpu.memory_space<vmem>>, vector<1x1x128x128xf32>
    %113 = vector.shape_cast %112 : vector<1x1x128x128xf32> to vector<128x128xf32>
    %cst_173 = arith.constant dense<0.000000e+00> : vector<128x128xf32>
    %114 = tpu.matmul %111, %113, %cst_173 {dimension_numbers = #tpu.dot_dimension_numbers<[1], [0], [0], [1], [0, 0, 1, 1], [], []>} : vector<128x128xf32>, vector<128x128xf32>, vector<128x128xf32> -> vector<128x128xf32>
    %115 = arith.addf %109, %114 : vector<128x128xf32>
    %c0_174 = arith.constant 0 : index
    %c1_175 = arith.constant 1 : index
    %c2_176 = arith.constant 2 : index
    %c0_177 = arith.constant 0 : index
    %116 = vector.load %arg8[%c0_174, %c1_175, %c2_176, %c0_177] : memref<2x10x10x128xf32, #tpu.memory_space<vmem>>, vector<2x8x8x128xf32>
    %117 = vector.shape_cast %116 : vector<2x8x8x128xf32> to vector<128x128xf32>
    %c1_178 = arith.constant 1 : index
    %c2_179 = arith.constant 2 : index
    %c0_180 = arith.constant 0 : index
    %c0_181 = arith.constant 0 : index
    %118 = vector.load %arg4[%c1_178, %c2_179, %c0_180, %c0_181] : memref<3x3x128x128xf32, #tpu.memory_space<vmem>>, vector<1x1x128x128xf32>
    %119 = vector.shape_cast %118 : vector<1x1x128x128xf32> to vector<128x128xf32>
    %cst_182 = arith.constant dense<0.000000e+00> : vector<128x128xf32>
    %120 = tpu.matmul %117, %119, %cst_182 {dimension_numbers = #tpu.dot_dimension_numbers<[1], [0], [0], [1], [0, 0, 1, 1], [], []>} : vector<128x128xf32>, vector<128x128xf32>, vector<128x128xf32> -> vector<128x128xf32>
    %121 = arith.addf %115, %120 : vector<128x128xf32>
    %c0_183 = arith.constant 0 : index
    %c2_184 = arith.constant 2 : index
    %c0_185 = arith.constant 0 : index
    %c0_186 = arith.constant 0 : index
    %122 = vector.load %arg8[%c0_183, %c2_184, %c0_185, %c0_186] : memref<2x10x10x128xf32, #tpu.memory_space<vmem>>, vector<2x8x8x128xf32>
    %123 = vector.shape_cast %122 : vector<2x8x8x128xf32> to vector<128x128xf32>
    %c2_187 = arith.constant 2 : index
    %c0_188 = arith.constant 0 : index
    %c0_189 = arith.constant 0 : index
    %c0_190 = arith.constant 0 : index
    %124 = vector.load %arg4[%c2_187, %c0_188, %c0_189, %c0_190] : memref<3x3x128x128xf32, #tpu.memory_space<vmem>>, vector<1x1x128x128xf32>
    %125 = vector.shape_cast %124 : vector<1x1x128x128xf32> to vector<128x128xf32>
    %cst_191 = arith.constant dense<0.000000e+00> : vector<128x128xf32>
    %126 = tpu.matmul %123, %125, %cst_191 {dimension_numbers = #tpu.dot_dimension_numbers<[1], [0], [0], [1], [0, 0, 1, 1], [], []>} : vector<128x128xf32>, vector<128x128xf32>, vector<128x128xf32> -> vector<128x128xf32>
    %127 = arith.addf %121, %126 : vector<128x128xf32>
    %c0_192 = arith.constant 0 : index
    %c2_193 = arith.constant 2 : index
    %c1_194 = arith.constant 1 : index
    %c0_195 = arith.constant 0 : index
    %128 = vector.load %arg8[%c0_192, %c2_193, %c1_194, %c0_195] : memref<2x10x10x128xf32, #tpu.memory_space<vmem>>, vector<2x8x8x128xf32>
    %129 = vector.shape_cast %128 : vector<2x8x8x128xf32> to vector<128x128xf32>
    %c2_196 = arith.constant 2 : index
    %c1_197 = arith.constant 1 : index
    %c0_198 = arith.constant 0 : index
    %c0_199 = arith.constant 0 : index
    %130 = vector.load %arg4[%c2_196, %c1_197, %c0_198, %c0_199] : memref<3x3x128x128xf32, #tpu.memory_space<vmem>>, vector<1x1x128x128xf32>
    %131 = vector.shape_cast %130 : vector<1x1x128x128xf32> to vector<128x128xf32>
    %cst_200 = arith.constant dense<0.000000e+00> : vector<128x128xf32>
    %132 = tpu.matmul %129, %131, %cst_200 {dimension_numbers = #tpu.dot_dimension_numbers<[1], [0], [0], [1], [0, 0, 1, 1], [], []>} : vector<128x128xf32>, vector<128x128xf32>, vector<128x128xf32> -> vector<128x128xf32>
    %133 = arith.addf %127, %132 : vector<128x128xf32>
    %c0_201 = arith.constant 0 : index
    %c2_202 = arith.constant 2 : index
    %c2_203 = arith.constant 2 : index
    %c0_204 = arith.constant 0 : index
    %134 = vector.load %arg8[%c0_201, %c2_202, %c2_203, %c0_204] : memref<2x10x10x128xf32, #tpu.memory_space<vmem>>, vector<2x8x8x128xf32>
    %135 = vector.shape_cast %134 : vector<2x8x8x128xf32> to vector<128x128xf32>
    %c2_205 = arith.constant 2 : index
    %c2_206 = arith.constant 2 : index
    %c0_207 = arith.constant 0 : index
    %c0_208 = arith.constant 0 : index
    %136 = vector.load %arg4[%c2_205, %c2_206, %c0_207, %c0_208] : memref<3x3x128x128xf32, #tpu.memory_space<vmem>>, vector<1x1x128x128xf32>
    %137 = vector.shape_cast %136 : vector<1x1x128x128xf32> to vector<128x128xf32>
    %cst_209 = arith.constant dense<0.000000e+00> : vector<128x128xf32>
    %138 = tpu.matmul %135, %137, %cst_209 {dimension_numbers = #tpu.dot_dimension_numbers<[1], [0], [0], [1], [0, 0, 1, 1], [], []>} : vector<128x128xf32>, vector<128x128xf32>, vector<128x128xf32> -> vector<128x128xf32>
    %139 = arith.addf %133, %138 : vector<128x128xf32>
    %c0_210 = arith.constant 0 : index
    %c0_211 = arith.constant 0 : index
    %140 = vector.load %arg5[%c0_210, %c0_211] : memref<1x128xf32, #tpu.memory_space<vmem>>, vector<1x128xf32>
    %141 = vector.broadcast %140 : vector<1x128xf32> to vector<128x128xf32>
    %142 = arith.addf %139, %141 : vector<128x128xf32>
    %cst_212 = arith.constant 0.000000e+00 : f32
    %143 = vector.broadcast %cst_212 : f32 to vector<128x128xf32>
    %144 = arith.maximumf %142, %143 : vector<128x128xf32>
    %145 = vector.shape_cast %144 : vector<128x128xf32> to vector<2x8x8x128xf32>
    %c0_213 = arith.constant 0 : index
    %c0_214 = arith.constant 0 : index
    %c0_215 = arith.constant 0 : index
    %c0_216 = arith.constant 0 : index
    %146 = vector.load %arg6[%c0_213, %c0_214, %c0_215, %c0_216] : memref<2x8x8x128xf32, #tpu.memory_space<vmem>>, vector<2x8x8x128xf32>
    tpu.vector_store %arg6[%c0_213, %c0_214, %c0_215, %c0_216], %145 {strides = array<i32>} : memref<2x8x8x128xf32, #tpu.memory_space<vmem>>, vector<2x8x8x128xf32>,
    return
  }
  func.func @transform_0(%arg0: i32) -> (i32, i32, i32, i32) {
    %c0_i32 = arith.constant 0 : i32
    %c0_i32_0 = arith.constant 0 : i32
    %c0_i32_1 = arith.constant 0 : i32
    %c0_i32_2 = arith.constant 0 : i32
    return %arg0, %c0_i32, %c0_i32_0, %c0_i32_1 : i32, i32, i32, i32
  }
  func.func @transform_1(%arg0: i32) -> (i32, i32, i32, i32) {
    %c0_i32 = arith.constant 0 : i32
    %c0_i32_0 = arith.constant 0 : i32
    %c0_i32_1 = arith.constant 0 : i32
    %c0_i32_2 = arith.constant 0 : i32
    %c0_i32_3 = arith.constant 0 : i32
    return %c0_i32, %c0_i32_0, %c0_i32_1, %c0_i32_2 : i32, i32, i32, i32
  }
  func.func @transform_2(%arg0: i32) -> (i32, i32) {
    %c0_i32 = arith.constant 0 : i32
    %c0_i32_0 = arith.constant 0 : i32
    %c0_i32_1 = arith.constant 0 : i32
    return %c0_i32, %c0_i32_0 : i32, i32
  }
  func.func @transform_3(%arg0: i32) -> (i32, i32, i32, i32) {
    %c0_i32 = arith.constant 0 : i32
    %c0_i32_0 = arith.constant 0 : i32
    %c0_i32_1 = arith.constant 0 : i32
    %c0_i32_2 = arith.constant 0 : i32
    %c0_i32_3 = arith.constant 0 : i32
    return %c0_i32, %c0_i32_0, %c0_i32_1, %c0_i32_2 : i32, i32, i32, i32
  }
  func.func @transform_4(%arg0: i32) -> (i32, i32) {
    %c0_i32 = arith.constant 0 : i32
    %c0_i32_0 = arith.constant 0 : i32
    %c0_i32_1 = arith.constant 0 : i32
    return %c0_i32, %c0_i32_0 : i32, i32
  }
  func.func @transform_5(%arg0: i32) -> (i32, i32, i32, i32) {
    %c0_i32 = arith.constant 0 : i32
    %c0_i32_0 = arith.constant 0 : i32
    %c0_i32_1 = arith.constant 0 : i32
    %c0_i32_2 = arith.constant 0 : i32
    return %arg0, %c0_i32, %c0_i32_0, %c0_i32_1 : i32, i32, i32, i32
  }
}

</mosaic_0001>

<llo_original>
// kernel: down_block.1
$region0: #{down_block.1}
  #allocation0 [shape = 'u32[]', space=smem, size = 0x4, offset = 0x4, fixed_abs, tag = 'smem constant byte address 0x4 - core index']
  #allocation1 [shape = 'u32[144,128]{1,0:T(1,128)}', space=vmem, size = 0x12000, scoped, tag = 'internal scratch']
  #allocation2 [shape = 'f32[2,10,10,4]{3,2,1,0:T(8,128)}', space=vmem, size = 0x28000, scoped, tag = 'scratch operand']
  #allocation3 [shape = 'f32[2,10,10,128]{3,2,1,0:T(8,128)}', space=vmem, size = 0x28000, scoped, tag = 'scratch operand']
  %s0 = inlined_call_operand.vmem [shape: f32[2,16,8,8], index: 0, kind: input, shape index: {}]
  %s1 = inlined_call_operand.vmem [shape: f32[3,3,4,128], index: 1, kind: input, shape index: {}]
  %s2 = inlined_call_operand.vmem [shape: f32[1,128], index: 2, kind: input, shape index: {}]
  %s3 = inlined_call_operand.vmem [shape: f32[3,3,128,128], index: 3, kind: input, shape index: {}]
  %s4 = inlined_call_operand.vmem [shape: f32[1,128], index: 4, kind: input, shape index: {}]
  %s5 = inlined_call_operand.vmem [shape: f32[2,8,8,128], index: 5, kind: output, shape index: {}]
  %s6 = sld [smem:[#allocation0]]
  $region30: #{down_block.1} parent=0
    _
  %s8 = ssub.s32 1, %s6
  %s9 = scalar_select 0, %s8, %s6
  // Predicated region
  $region2: #{down_block.1} parent=0 // pred_check
    _
  $region3: #{down_block.1} parent=0 // pred_check_branch
    %11 = sbr.rel (0) target = $region5
  $region4: #{down_block.1} parent=0 // pred_region
    _
  $region5: #{down_block.1} parent=0 // pred_fallthru
    _
  // Predicated region
  $region6: #{down_block.1} parent=0 // pred_check
    _
  $region7: #{down_block.1} parent=0 // pred_check_branch
    %13 = sbr.rel (0) target = $region9
  $region8: #{down_block.1} parent=0 // pred_region
    _
  $region9: #{down_block.1} parent=0 // pred_fallthru
    _
  // Predicated region
  $region10: #{down_block.1} parent=0 // pred_check
    _
  $region11: #{down_block.1} parent=0 // pred_check_branch
    %15 = sbr.rel (0) target = $region13
  $region12: #{down_block.1} parent=0 // pred_region
    _
  $region13: #{down_block.1} parent=0 // pred_fallthru
    _
  // Predicated region
  $region14: #{down_block.1} parent=0 // pred_check
    _
  $region15: #{down_block.1} parent=0 // pred_check_branch
    %17 = sbr.rel (0) target = $region17
  $region16: #{down_block.1} parent=0 // pred_region
    _
  $region17: #{down_block.1} parent=0 // pred_fallthru
    _
  // Predicated region
  $region18: #{down_block.1} parent=0 // pred_check
    _
  $region19: #{down_block.1} parent=0 // pred_check_branch
    %19 = sbr.rel (0) target = $region21
  $region20: #{down_block.1} parent=0 // pred_region
    _
  $region21: #{down_block.1} parent=0 // pred_fallthru
    _
  %v20 = vld [vmem:[%s0] sm:$0xff]
  %v21 = vld [vmem:[%s0 + $0x8] sm:$0xff]
  %v22 = vld [vmem:[%s0 + $0x10] sm:$0xff]
  %v23 = vld [vmem:[%s0 + $0x18] sm:$0xff]
  %v24 = vld [vmem:[%s0 + $0x20] sm:$0xff]
  %v25 = vld [vmem:[%s0 + $0x28] sm:$0xff]
  %v26 = vld [vmem:[%s0 + $0x30] sm:$0xff]
  %v27 = vld [vmem:[%s0 + $0x38] sm:$0xff]
  %v28 = vld [vmem:[%s0 + $0x40] sm:$0xff]
  %v29 = vld [vmem:[%s0 + $0x48] sm:$0xff]
  %v30 = vld [vmem:[%s0 + $0x50] sm:$0xff]
  %v31 = vld [vmem:[%s0 + $0x58] sm:$0xff]
  %v32 = vld [vmem:[%s0 + $0x60] sm:$0xff]
  %v33 = vld [vmem:[%s0 + $0x68] sm:$0xff]
  %v34 = vld [vmem:[%s0 + $0x70] sm:$0xff]
  %v35 = vld [vmem:[%s0 + $0x78] sm:$0xff]
  %v36 = vld [vmem:[%s0 + $0x80] sm:$0xff]
  %v37 = vld [vmem:[%s0 + $0x88] sm:$0xff]
  %v38 = vld [vmem:[%s0 + $0x90] sm:$0xff]
  %v39 = vld [vmem:[%s0 + $0x98] sm:$0xff]
  %v40 = vld [vmem:[%s0 + $0xa0] sm:$0xff]
  %v41 = vld [vmem:[%s0 + $0xa8] sm:$0xff]
  %v42 = vld [vmem:[%s0 + $0xb0] sm:$0xff]
  %v43 = vld [vmem:[%s0 + $0xb8] sm:$0xff]
  %v44 = vld [vmem:[%s0 + $0xc0] sm:$0xff]
  %v45 = vld [vmem:[%s0 + $0xc8] sm:$0xff]
  %v46 = vld [vmem:[%s0 + $0xd0] sm:$0xff]
  %v47 = vld [vmem:[%s0 + $0xd8] sm:$0xff]
  %v48 = vld [vmem:[%s0 + $0xe0] sm:$0xff]
  %v49 = vld [vmem:[%s0 + $0xe8] sm:$0xff]
  %v50 = vld [vmem:[%s0 + $0xf0] sm:$0xff]
  %v51 = vld [vmem:[%s0 + $0xf8] sm:$0xff]
  %84 = vrot.lane.b32.xlu0 %v20, 124
  %v85 = vpop.permute.xlu0 %84
  %86 = vrot.lane.b32.xlu0 %v21, 124
  %v87 = vpop.permute.xlu0 %86
  %88 = vrot.lane.b32.xlu0 %v22, 124
  %v89 = vpop.permute.xlu0 %88
  %90 = vrot.lane.b32.xlu0 %v23, 124
  %v91 = vpop.permute.xlu0 %90
  %92 = vrot.lane.b32.xlu0 %v24, 124
  %v93 = vpop.permute.xlu0 %92
  %94 = vrot.lane.b32.xlu0 %v25, 124
  %v95 = vpop.permute.xlu0 %94
  %96 = vrot.lane.b32.xlu0 %v26, 124
  %v97 = vpop.permute.xlu0 %96
  %98 = vrot.lane.b32.xlu0 %v27, 124
  %v99 = vpop.permute.xlu0 %98
  %100 = vrot.lane.b32.xlu0 %v28, 124
  %v101 = vpop.permute.xlu0 %100
  %102 = vrot.lane.b32.xlu0 %v29, 124
  %v103 = vpop.permute.xlu0 %102
  %104 = vrot.lane.b32.xlu0 %v30, 124
  %v105 = vpop.permute.xlu0 %104
  %106 = vrot.lane.b32.xlu0 %v31, 124
  %v107 = vpop.permute.xlu0 %106
  %108 = vrot.lane.b32.xlu0 %v32, 124
  %v109 = vpop.permute.xlu0 %108
  %110 = vrot.lane.b32.xlu0 %v33, 124
  %v111 = vpop.permute.xlu0 %110
  %112 = vrot.lane.b32.xlu0 %v34, 124
  %v113 = vpop.permute.xlu0 %112
  %114 = vrot.lane.b32.xlu0 %v35, 124
  %v115 = vpop.permute.xlu0 %114
  %116 = vrot.lane.b32.xlu0 %v36, 124
  %v117 = vpop.permute.xlu0 %116
  %118 = vrot.lane.b32.xlu0 %v37, 124
  %v119 = vpop.permute.xlu0 %118
  %120 = vrot.lane.b32.xlu0 %v38, 124
  %v121 = vpop.permute.xlu0 %120
  %122 = vrot.lane.b32.xlu0 %v39, 124
  %v123 = vpop.permute.xlu0 %122
  %124 = vrot.lane.b32.xlu0 %v40, 124
  %v125 = vpop.permute.xlu0 %124
  %126 = vrot.lane.b32.xlu0 %v41, 124
  %v127 = vpop.permute.xlu0 %126
  %128 = vrot.lane.b32.xlu0 %v42, 124
  %v129 = vpop.permute.xlu0 %128
  %130 = vrot.lane.b32.xlu0 %v43, 124
  %v131 = vpop.permute.xlu0 %130
  %132 = vrot.lane.b32.xlu0 %v44, 124
  %v133 = vpop.permute.xlu0 %132
  %134 = vrot.lane.b32.xlu0 %v45, 124
  %v135 = vpop.permute.xlu0 %134
  %136 = vrot.lane.b32.xlu0 %v46, 124
  %v137 = vpop.permute.xlu0 %136
  %138 = vrot.lane.b32.xlu0 %v47, 124
  %v139 = vpop.permute.xlu0 %138
  %140 = vrot.lane.b32.xlu0 %v48, 124
  %v141 = vpop.permute.xlu0 %140
  %142 = vrot.lane.b32.xlu0 %v49, 124
  %v143 = vpop.permute.xlu0 %142
  %144 = vrot.lane.b32.xlu0 %v50, 124
  %v145 = vpop.permute.xlu0 %144
  %146 = vrot.lane.b32.xlu0 %v51, 124
  %v147 = vpop.permute.xlu0 %146
  %v180 = vmax.f32 %v20, %v85
  %v181 = vmax.f32 %v21, %v87
  %v182 = vmax.f32 %v22, %v89
  %v183 = vmax.f32 %v23, %v91
  %v184 = vmax.f32 %v24, %v93
  %v185 = vmax.f32 %v25, %v95
  %v186 = vmax.f32 %v26, %v97
  %v187 = vmax.f32 %v27, %v99
  %v188 = vmax.f32 %v28, %v101
  %v189 = vmax.f32 %v29, %v103
  %v190 = vmax.f32 %v30, %v105
  %v191 = vmax.f32 %v31, %v107
  %v192 = vmax.f32 %v32, %v109
  %v193 = vmax.f32 %v33, %v111
  %v194 = vmax.f32 %v34, %v113
  %v195 = vmax.f32 %v35, %v115
  %v196 = vmax.f32 %v36, %v117
  %v197 = vmax.f32 %v37, %v119
  %v198 = vmax.f32 %v38, %v121
  %v199 = vmax.f32 %v39, %v123
  %v200 = vmax.f32 %v40, %v125
  %v201 = vmax.f32 %v41, %v127
  %v202 = vmax.f32 %v42, %v129
  %v203 = vmax.f32 %v43, %v131
  %v204 = vmax.f32 %v44, %v133
  %v205 = vmax.f32 %v45, %v135
  %v206 = vmax.f32 %v46, %v137
  %v207 = vmax.f32 %v47, %v139
  %v208 = vmax.f32 %v48, %v141
  %v209 = vmax.f32 %v49, %v143
  %v210 = vmax.f32 %v50, %v145
  %v211 = vmax.f32 %v51, %v147
  %v212 = vmax.f32 %v180, %v181
  %v213 = vmax.f32 %v182, %v183
  %v214 = vmax.f32 %v184, %v185
  %v215 = vmax.f32 %v186, %v187
  %v216 = vmax.f32 %v188, %v189
  %v217 = vmax.f32 %v190, %v191
  %v218 = vmax.f32 %v192, %v193
  %v219 = vmax.f32 %v194, %v195
  %v220 = vmax.f32 %v196, %v197
  %v221 = vmax.f32 %v198, %v199
  %v222 = vmax.f32 %v200, %v201
  %v223 = vmax.f32 %v202, %v203
  %v224 = vmax.f32 %v204, %v205
  %v225 = vmax.f32 %v206, %v207
  %v226 = vmax.f32 %v208, %v209
  %v227 = vmax.f32 %v210, %v211
  %vm228 = vcmask 31744
  %229 = vst.msk [vmem:[#allocation2] sm:$0xff] %vm228, 0.0
  %vm230 = vcmask 25600
  %231 = vst.msk [vmem:[#allocation2 + $0x8] sm:$0x3] %vm230, 0.0
  %232 = vst.msk [vmem:[#allocation2 + $0xa0] sm:$0xff] %vm228, 0.0
  %233 = vst.msk [vmem:[#allocation2 + $0xa8] sm:$0x3] %vm230, 0.0
  %s234 = scalar_lea.vmem [#allocation2], 144
  %235 = vst.msk [vmem:[%s234] sm:$0xff] %vm228, 0.0
  %236 = vst.msk [vmem:[%s234 + $0x8] sm:$0x3] %vm230, 0.0
  %237 = vst.msk [vmem:[%s234 + $0xa0] sm:$0xff] %vm228, 0.0
  %238 = vst.msk [vmem:[%s234 + $0xa8] sm:$0x3] %vm230, 0.0
  %vm239 = vcmask 24576
  %240 = vst.msk [vmem:[#allocation2] sm:$0x1] %vm239, 0.0
  %241 = vst.msk [vmem:[#allocation2 + $0x10] sm:$0x1] %vm239, 0.0
  %242 = vst.msk [vmem:[#allocation2 + $0x20] sm:$0x1] %vm239, 0.0
  %243 = vst.msk [vmem:[#allocation2 + $0x30] sm:$0x1] %vm239, 0.0
  %244 = vst.msk [vmem:[#allocation2 + $0x40] sm:$0x1] %vm239, 0.0
  %245 = vst.msk [vmem:[#allocation2 + $0x50] sm:$0x1] %vm239, 0.0
  %246 = vst.msk [vmem:[#allocation2 + $0x60] sm:$0x1] %vm239, 0.0
  %247 = vst.msk [vmem:[#allocation2 + $0x70] sm:$0x1] %vm239, 0.0
  %248 = vst.msk [vmem:[#allocation2 + $0x80] sm:$0x1] %vm239, 0.0
  %249 = vst.msk [vmem:[#allocation2 + $0x90] sm:$0x1] %vm239, 0.0
  %250 = vst.msk [vmem:[#allocation2 + $0xa0] sm:$0x1] %vm239, 0.0
  %251 = vst.msk [vmem:[#allocation2 + $0xb0] sm:$0x1] %vm239, 0.0
  %252 = vst.msk [vmem:[#allocation2 + $0xc0] sm:$0x1] %vm239, 0.0
  %253 = vst.msk [vmem:[#allocation2 + $0xd0] sm:$0x1] %vm239, 0.0
  %254 = vst.msk [vmem:[#allocation2 + $0xe0] sm:$0x1] %vm239, 0.0
  %255 = vst.msk [vmem:[#allocation2 + $0xf0] sm:$0x1] %vm239, 0.0
  %256 = vst.msk [vmem:[#allocation2 + $0x100] sm:$0x1] %vm239, 0.0
  %257 = vst.msk [vmem:[#allocation2 + $0x110] sm:$0x1] %vm239, 0.0
  %258 = vst.msk [vmem:[#allocation2 + $0x120] sm:$0x1] %vm239, 0.0
  %259 = vst.msk [vmem:[#allocation2 + $0x130] sm:$0x1] %vm239, 0.0
  %260 = vst.msk [vmem:[#allocation2 + $0x9] sm:$0x1] %vm239, 0.0
  %261 = vst.msk [vmem:[#allocation2 + $0x19] sm:$0x1] %vm239, 0.0
  %262 = vst.msk [vmem:[#allocation2 + $0x29] sm:$0x1] %vm239, 0.0
  %263 = vst.msk [vmem:[#allocation2 + $0x39] sm:$0x1] %vm239, 0.0
  %264 = vst.msk [vmem:[#allocation2 + $0x49] sm:$0x1] %vm239, 0.0
  %265 = vst.msk [vmem:[#allocation2 + $0x59] sm:$0x1] %vm239, 0.0
  %266 = vst.msk [vmem:[#allocation2 + $0x69] sm:$0x1] %vm239, 0.0
  %267 = vst.msk [vmem:[#allocation2 + $0x79] sm:$0x1] %vm239, 0.0
  %268 = vst.msk [vmem:[#allocation2 + $0x89] sm:$0x1] %vm239, 0.0
  %269 = vst.msk [vmem:[#allocation2 + $0x99] sm:$0x1] %vm239, 0.0
  %270 = vst.msk [vmem:[#allocation2 + $0xa9] sm:$0x1] %vm239, 0.0
  %271 = vst.msk [vmem:[#allocation2 + $0xb9] sm:$0x1] %vm239, 0.0
  %272 = vst.msk [vmem:[#allocation2 + $0xc9] sm:$0x1] %vm239, 0.0
  %273 = vst.msk [vmem:[#allocation2 + $0xd9] sm:$0x1] %vm239, 0.0
  %274 = vst.msk [vmem:[#allocation2 + $0xe9] sm:$0x1] %vm239, 0.0
  %275 = vst.msk [vmem:[#allocation2 + $0xf9] sm:$0x1] %vm239, 0.0
  %276 = vst.msk [vmem:[#allocation2 + $0x109] sm:$0x1] %vm239, 0.0
  %277 = vst.msk [vmem:[#allocation2 + $0x119] sm:$0x1] %vm239, 0.0
  %278 = vst.msk [vmem:[#allocation2 + $0x129] sm:$0x1] %vm239, 0.0
  %279 = vst.msk [vmem:[#allocation2 + $0x139] sm:$0x1] %vm239, 0.0
  %s280 = scalar_lea.vmem [#allocation2], 16
  %281 = vst.msk [vmem:[%s280 + $0x1] sm:$0xff] %vm228, %v212
  %282 = vst.msk [vmem:[%s280 + $0x11] sm:$0xff] %vm228, %v213
  %283 = vst.msk [vmem:[%s280 + $0x21] sm:$0xff] %vm228, %v214
  %284 = vst.msk [vmem:[%s280 + $0x31] sm:$0xff] %vm228, %v215
  %285 = vst.msk [vmem:[%s280 + $0x41] sm:$0xff] %vm228, %v216
  %286 = vst.msk [vmem:[%s280 + $0x51] sm:$0xff] %vm228, %v217
  %287 = vst.msk [vmem:[%s280 + $0x61] sm:$0xff] %vm228, %v218
  %288 = vst.msk [vmem:[%s280 + $0x71] sm:$0xff] %vm228, %v219
  %289 = vst.msk [vmem:[%s280 + $0xa1] sm:$0xff] %vm228, %v220
  %290 = vst.msk [vmem:[%s280 + $0xb1] sm:$0xff] %vm228, %v221
  %291 = vst.msk [vmem:[%s280 + $0xc1] sm:$0xff] %vm228, %v222
  %292 = vst.msk [vmem:[%s280 + $0xd1] sm:$0xff] %vm228, %v223
  %293 = vst.msk [vmem:[%s280 + $0xe1] sm:$0xff] %vm228, %v224
  %294 = vst.msk [vmem:[%s280 + $0xf1] sm:$0xff] %vm228, %v225
  %295 = vst.msk [vmem:[%s280 + $0x101] sm:$0xff] %vm228, %v226
  %296 = vst.msk [vmem:[%s280 + $0x111] sm:$0xff] %vm228, %v227
  %v297 = vld [vmem:[#allocation2] sm:$0xff]
  %v298 = vld [vmem:[#allocation2 + $0x10] sm:$0xff]
  %v299 = vld [vmem:[#allocation2 + $0x20] sm:$0xff]
  %v300 = vld [vmem:[#allocation2 + $0x30] sm:$0xff]
  %v301 = vld [vmem:[#allocation2 + $0x40] sm:$0xff]
  %v302 = vld [vmem:[#allocation2 + $0x50] sm:$0xff]
  %v303 = vld [vmem:[#allocation2 + $0x60] sm:$0xff]
  %v304 = vld [vmem:[#allocation2 + $0x70] sm:$0xff]
  %v305 = vld [vmem:[#allocation2 + $0xa0] sm:$0xff]
  %v306 = vld [vmem:[#allocation2 + $0xb0] sm:$0xff]
  %v307 = vld [vmem:[#allocation2 + $0xc0] sm:$0xff]
  %v308 = vld [vmem:[#allocation2 + $0xd0] sm:$0xff]
  %v309 = vld [vmem:[#allocation2 + $0xe0] sm:$0xff]
  %v310 = vld [vmem:[#allocation2 + $0xf0] sm:$0xff]
  %v311 = vld [vmem:[#allocation2 + $0x100] sm:$0xff]
  %v312 = vld [vmem:[#allocation2 + $0x110] sm:$0xff]
  %v313 = vld [vmem:[%s1] sm:$0xf]
  %v314 = vld [vmem:[#allocation2 + $0x1] sm:$0xff]
  %v315 = vld [vmem:[#allocation2 + $0x11] sm:$0xff]
  %v316 = vld [vmem:[#allocation2 + $0x21] sm:$0xff]
  %v317 = vld [vmem:[#allocation2 + $0x31] sm:$0xff]
  %v318 = vld [vmem:[#allocation2 + $0x41] sm:$0xff]
  %v319 = vld [vmem:[#allocation2 + $0x51] sm:$0xff]
  %v320 = vld [vmem:[#allocation2 + $0x61] sm:$0xff]
  %v321 = vld [vmem:[#allocation2 + $0x71] sm:$0xff]
  %v322 = vld [vmem:[#allocation2 + $0xa1] sm:$0xff]
  %v323 = vld [vmem:[#allocation2 + $0xb1] sm:$0xff]
  %v324 = vld [vmem:[#allocation2 + $0xc1] sm:$0xff]
  %v325 = vld [vmem:[#allocation2 + $0xd1] sm:$0xff]
  %v326 = vld [vmem:[#allocation2 + $0xe1] sm:$0xff]
  %v327 = vld [vmem:[#allocation2 + $0xf1] sm:$0xff]
  %v328 = vld [vmem:[#allocation2 + $0x101] sm:$0xff]
  %v329 = vld [vmem:[#allocation2 + $0x111] sm:$0xff]
  %s330 = scalar_lea.vmem %s1, 4
  %v331 = vld [vmem:[%s330] sm:$0xf]
  %v333 = vsel %vm228, %v314, 0
  %v336 = vsel %vm228, %v315, 0
  %v339 = vsel %vm228, %v316, 0
  %v342 = vsel %vm228, %v317, 0
  %v345 = vsel %vm228, %v318, 0
  %v348 = vsel %vm228, %v319, 0
  %v351 = vsel %vm228, %v320, 0
  %v354 = vsel %vm228, %v321, 0
  %v357 = vsel %vm228, %v322, 0
  %v360 = vsel %vm228, %v323, 0
  %v363 = vsel %vm228, %v324, 0
  %v366 = vsel %vm228, %v325, 0
  %v369 = vsel %vm228, %v326, 0
  %v372 = vsel %vm228, %v327, 0
  %v375 = vsel %vm228, %v328, 0
  %v378 = vsel %vm228, %v329, 0
  %vm380 = vcmask 1043456
  %v382 = vsel %vm380, %v331, 0
  %384 = vmatprep.subr.mxu0 0.0
  %385 = vmatpush1.msra.mxu0 0.0
  %386 = vmatprep.subr.mxu0 0.0
  %387 = vmatpush1.msra.mxu0 0.0
  %388 = vmatprep.subr.mxu0 0.0
  %389 = vmatpush1.msra.mxu0 0.0
  %390 = vmatprep.subr.mxu0 0.0
  %391 = vmatpush1.msra.mxu0 0.0
  %392 = vmatprep.subr.mxu0 0.0
  %393 = vmatpush1.msra.mxu0 0.0
  %394 = vmatprep.subr.mxu0 0.0
  %395 = vmatpush1.msra.mxu0 0.0
  %396 = vmatprep.subr.mxu0 0.0
  %397 = vmatpush1.msra.mxu0 0.0
  %398 = vmatprep.subr.mxu0 0.0
  %399 = vmatpush1.msra.mxu0 0.0
  %400 = vmatprep.subr.mxu0 0.0
  %401 = vmatpush1.msra.mxu0 0.0
  %402 = vmatprep.subr.mxu0 0.0
  %403 = vmatpush1.msra.mxu0 0.0
  %404 = vmatprep.subr.mxu0 0.0
  %405 = vmatpush1.msra.mxu0 0.0
  %406 = vmatprep.subr.mxu0 0.0
  %407 = vmatpush1.msra.mxu0 0.0
  %408 = vmatprep.subr.mxu0 0.0
  %409 = vmatpush1.msra.mxu0 0.0
  %410 = vmatprep.subr.mxu0 0.0
  %411 = vmatpush1.msra.mxu0 0.0
  %412 = vmatprep.subr.mxu0 0.0
  %413 = vmatpush1.msra.mxu0 0.0
  %414 = vmatprep.subr.mxu0 0.0
  %415 = vmatpush1.msra.mxu0 %v382
  %416 = vmatprep.subr.mxu0 0.0
  %417 = vmatpush2.msra.mxu0 0.0
  %418 = vmatprep.subr.mxu0 0.0
  %419 = vmatpush2.msra.mxu0 0.0
  %420 = vmatprep.subr.mxu0 0.0
  %421 = vmatpush2.msra.mxu0 0.0
  %422 = vmatprep.subr.mxu0 0.0
  %423 = vmatpush2.msra.mxu0 0.0
  %424 = vmatprep.subr.mxu0 0.0
  %425 = vmatpush2.msra.mxu0 0.0
  %426 = vmatprep.subr.mxu0 0.0
  %427 = vmatpush2.msra.mxu0 0.0
  %428 = vmatprep.subr.mxu0 0.0
  %429 = vmatpush2.msra.mxu0 0.0
  %430 = vmatprep.subr.mxu0 0.0
  %431 = vmatpush2.msra.mxu0 0.0
  %432 = vmatprep.subr.mxu0 0.0
  %433 = vmatpush2.msra.mxu0 0.0
  %434 = vmatprep.subr.mxu0 0.0
  %435 = vmatpush2.msra.mxu0 0.0
  %436 = vmatprep.subr.mxu0 0.0
  %437 = vmatpush2.msra.mxu0 0.0
  %438 = vmatprep.subr.mxu0 0.0
  %439 = vmatpush2.msra.mxu0 0.0
  %440 = vmatprep.subr.mxu0 0.0
  %441 = vmatpush2.msra.mxu0 0.0
  %442 = vmatprep.subr.mxu0 0.0
  %443 = vmatpush2.msra.mxu0 0.0
  %444 = vmatprep.subr.mxu0 0.0
  %445 = vmatpush2.msra.mxu0 0.0
  %446 = vmatprep.subr.mxu0 0.0
  %447 = vmatpush2.msra.mxu0 0.0
  %448 = vmatprep.mubr.f32.mxu0 0.0
  %449 = vmatmul.mubr.f32.gmra.mxu0 %v333
  %v450 = vpop.f32.mrf.mxu0
  %v451 = vadd.f32 0.0, %v450
  %v452 = vpop.f32.mrf.mxu0
  %453 = vmatprep.mubr.f32.mxu0 0.0
  %454 = vmatmul.mubr.f32.gmra.mxu0 %v336
  %v455 = vpop.f32.mrf.mxu0
  %v456 = vadd.f32 0.0, %v455
  %v457 = vpop.f32.mrf.mxu0
  %458 = vmatprep.mubr.f32.mxu0 0.0
  %459 = vmatmul.mubr.f32.gmra.mxu0 %v339
  %v460 = vpop.f32.mrf.mxu0
  %v461 = vadd.f32 0.0, %v460
  %v462 = vpop.f32.mrf.mxu0
  %463 = vmatprep.mubr.f32.mxu0 0.0
  %464 = vmatmul.mubr.f32.gmra.mxu0 %v342
  %v465 = vpop.f32.mrf.mxu0
  %v466 = vadd.f32 0.0, %v465
  %v467 = vpop.f32.mrf.mxu0
  %468 = vmatprep.mubr.f32.mxu0 0.0
  %469 = vmatmul.mubr.f32.gmra.mxu0 %v345
  %v470 = vpop.f32.mrf.mxu0
  %v471 = vadd.f32 0.0, %v470
  %v472 = vpop.f32.mrf.mxu0
  %473 = vmatprep.mubr.f32.mxu0 0.0
  %474 = vmatmul.mubr.f32.gmra.mxu0 %v348
  %v475 = vpop.f32.mrf.mxu0
  %v476 = vadd.f32 0.0, %v475
  %v477 = vpop.f32.mrf.mxu0
  %478 = vmatprep.mubr.f32.mxu0 0.0
  %479 = vmatmul.mubr.f32.gmra.mxu0 %v351
  %v480 = vpop.f32.mrf.mxu0
  %v481 = vadd.f32 0.0, %v480
  %v482 = vpop.f32.mrf.mxu0
  %483 = vmatprep.mubr.f32.mxu0 0.0
  %484 = vmatmul.mubr.f32.gmra.mxu0 %v354
  %v485 = vpop.f32.mrf.mxu0
  %v486 = vadd.f32 0.0, %v485
  %v487 = vpop.f32.mrf.mxu0
  %488 = vmatprep.mubr.f32.mxu0 0.0
  %489 = vmatmul.mubr.f32.gmra.mxu0 %v357
  %v490 = vpop.f32.mrf.mxu0
  %v491 = vadd.f32 0.0, %v490
  %v492 = vpop.f32.mrf.mxu0
  %493 = vmatprep.mubr.f32.mxu0 0.0
  %494 = vmatmul.mubr.f32.gmra.mxu0 %v360
  %v495 = vpop.f32.mrf.mxu0
  %v496 = vadd.f32 0.0, %v495
  %v497 = vpop.f32.mrf.mxu0
  %498 = vmatprep.mubr.f32.mxu0 0.0
  %499 = vmatmul.mubr.f32.gmra.mxu0 %v363
  %v500 = vpop.f32.mrf.mxu0
  %v501 = vadd.f32 0.0, %v500
  %v502 = vpop.f32.mrf.mxu0
  %503 = vmatprep.mubr.f32.mxu0 0.0
  %504 = vmatmul.mubr.f32.gmra.mxu0 %v366
  %v505 = vpop.f32.mrf.mxu0
  %v506 = vadd.f32 0.0, %v505
  %v507 = vpop.f32.mrf.mxu0
  %508 = vmatprep.mubr.f32.mxu0 0.0
  %509 = vmatmul.mubr.f32.gmra.mxu0 %v369
  %v510 = vpop.f32.mrf.mxu0
  %v511 = vadd.f32 0.0, %v510
  %v512 = vpop.f32.mrf.mxu0
  %513 = vmatprep.mubr.f32.mxu0 0.0
  %514 = vmatmul.mubr.f32.gmra.mxu0 %v372
  %v515 = vpop.f32.mrf.mxu0
  %v516 = vadd.f32 0.0, %v515
  %v517 = vpop.f32.mrf.mxu0
  %518 = vmatprep.mubr.f32.mxu0 0.0
  %519 = vmatmul.mubr.f32.gmra.mxu0 %v375
  %v520 = vpop.f32.mrf.mxu0
  %v521 = vadd.f32 0.0, %v520
  %v522 = vpop.f32.mrf.mxu0
  %523 = vmatprep.mubr.f32.mxu0 0.0
  %524 = vmatmul.mubr.f32.gmra.mxu0 %v378
  %v525 = vpop.f32.mrf.mxu0
  %v526 = vadd.f32 0.0, %v525
  %v527 = vpop.f32.mrf.mxu0
  %528 = vdwg.mxu0
  %v530 = vsel %vm228, %v297, 0
  %v533 = vsel %vm228, %v298, 0
  %v536 = vsel %vm228, %v299, 0
  %v539 = vsel %vm228, %v300, 0
  %v542 = vsel %vm228, %v301, 0
  %v545 = vsel %vm228, %v302, 0
  %v548 = vsel %vm228, %v303, 0
  %v551 = vsel %vm228, %v304, 0
  %v554 = vsel %vm228, %v305, 0
  %v557 = vsel %vm228, %v306, 0
  %v560 = vsel %vm228, %v307, 0
  %v563 = vsel %vm228, %v308, 0
  %v566 = vsel %vm228, %v309, 0
  %v569 = vsel %vm228, %v310, 0
  %v572 = vsel %vm228, %v311, 0
  %v575 = vsel %vm228, %v312, 0
  %v578 = vsel %vm380, %v313, 0
  %580 = vmatprep.subr.mxu0 0.0
  %581 = vmatpush1.msra.mxu0 0.0
  %582 = vmatprep.subr.mxu0 0.0
  %583 = vmatpush1.msra.mxu0 0.0
  %584 = vmatprep.subr.mxu0 0.0
  %585 = vmatpush1.msra.mxu0 0.0
  %586 = vmatprep.subr.mxu0 0.0
  %587 = vmatpush1.msra.mxu0 0.0
  %588 = vmatprep.subr.mxu0 0.0
  %589 = vmatpush1.msra.mxu0 0.0
  %590 = vmatprep.subr.mxu0 0.0
  %591 = vmatpush1.msra.mxu0 0.0
  %592 = vmatprep.subr.mxu0 0.0
  %593 = vmatpush1.msra.mxu0 0.0
  %594 = vmatprep.subr.mxu0 0.0
  %595 = vmatpush1.msra.mxu0 0.0
  %596 = vmatprep.subr.mxu0 0.0
  %597 = vmatpush1.msra.mxu0 0.0
  %598 = vmatprep.subr.mxu0 0.0
  %599 = vmatpush1.msra.mxu0 0.0
  %600 = vmatprep.subr.mxu0 0.0
  %601 = vmatpush1.msra.mxu0 0.0
  %602 = vmatprep.subr.mxu0 0.0
  %603 = vmatpush1.msra.mxu0 0.0
  %604 = vmatprep.subr.mxu0 0.0
  %605 = vmatpush1.msra.mxu0 0.0
  %606 = vmatprep.subr.mxu0 0.0
  %607 = vmatpush1.msra.mxu0 0.0
  %608 = vmatprep.subr.mxu0 0.0
  %609 = vmatpush1.msra.mxu0 0.0
  %610 = vmatprep.subr.mxu0 0.0
  %611 = vmatpush1.msra.mxu0 %v578
  %612 = vmatprep.subr.mxu0 0.0
  %613 = vmatpush2.msra.mxu0 0.0
  %614 = vmatprep.subr.mxu0 0.0
  %615 = vmatpush2.msra.mxu0 0.0
  %616 = vmatprep.subr.mxu0 0.0
  %617 = vmatpush2.msra.mxu0 0.0
  %618 = vmatprep.subr.mxu0 0.0
  %619 = vmatpush2.msra.mxu0 0.0
  %620 = vmatprep.subr.mxu0 0.0
  %621 = vmatpush2.msra.mxu0 0.0
  %622 = vmatprep.subr.mxu0 0.0
  %623 = vmatpush2.msra.mxu0 0.0
  %624 = vmatprep.subr.mxu0 0.0
  %625 = vmatpush2.msra.mxu0 0.0
  %626 = vmatprep.subr.mxu0 0.0
  %627 = vmatpush2.msra.mxu0 0.0
  %628 = vmatprep.subr.mxu0 0.0
  %629 = vmatpush2.msra.mxu0 0.0
  %630 = vmatprep.subr.mxu0 0.0
  %631 = vmatpush2.msra.mxu0 0.0
  %632 = vmatprep.subr.mxu0 0.0
  %633 = vmatpush2.msra.mxu0 0.0
  %634 = vmatprep.subr.mxu0 0.0
  %635 = vmatpush2.msra.mxu0 0.0
  %636 = vmatprep.subr.mxu0 0.0
  %637 = vmatpush2.msra.mxu0 0.0
  %638 = vmatprep.subr.mxu0 0.0
  %639 = vmatpush2.msra.mxu0 0.0
  %640 = vmatprep.subr.mxu0 0.0
  %641 = vmatpush2.msra.mxu0 0.0
  %642 = vmatprep.subr.mxu0 0.0
  %643 = vmatpush2.msra.mxu0 0.0
  %644 = vmatprep.mubr.f32.mxu0 0.0
  %645 = vmatmul.mubr.f32.gmra.mxu0 %v530
  %v646 = vpop.f32.mrf.mxu0
  %v647 = vadd.f32 %v451, %v646
  %v648 = vpop.f32.mrf.mxu0
  %649 = vmatprep.mubr.f32.mxu0 0.0
  %650 = vmatmul.mubr.f32.gmra.mxu0 %v533
  %v651 = vpop.f32.mrf.mxu0
  %v652 = vadd.f32 %v456, %v651
  %v653 = vpop.f32.mrf.mxu0
  %654 = vmatprep.mubr.f32.mxu0 0.0
  %655 = vmatmul.mubr.f32.gmra.mxu0 %v536
  %v656 = vpop.f32.mrf.mxu0
  %v657 = vadd.f32 %v461, %v656
  %v658 = vpop.f32.mrf.mxu0
  %659 = vmatprep.mubr.f32.mxu0 0.0
  %660 = vmatmul.mubr.f32.gmra.mxu0 %v539
  %v661 = vpop.f32.mrf.mxu0
  %v662 = vadd.f32 %v466, %v661
  %v663 = vpop.f32.mrf.mxu0
  %664 = vmatprep.mubr.f32.mxu0 0.0
  %665 = vmatmul.mubr.f32.gmra.mxu0 %v542
  %v666 = vpop.f32.mrf.mxu0
  %v667 = vadd.f32 %v471, %v666
  %v668 = vpop.f32.mrf.mxu0
  %669 = vmatprep.mubr.f32.mxu0 0.0
  %670 = vmatmul.mubr.f32.gmra.mxu0 %v545
  %v671 = vpop.f32.mrf.mxu0
  %v672 = vadd.f32 %v476, %v671
  %v673 = vpop.f32.mrf.mxu0
  %674 = vmatprep.mubr.f32.mxu0 0.0
  %675 = vmatmul.mubr.f32.gmra.mxu0 %v548
  %v676 = vpop.f32.mrf.mxu0
  %v677 = vadd.f32 %v481, %v676
  %v678 = vpop.f32.mrf.mxu0
  %679 = vmatprep.mubr.f32.mxu0 0.0
  %680 = vmatmul.mubr.f32.gmra.mxu0 %v551
  %v681 = vpop.f32.mrf.mxu0
  %v682 = vadd.f32 %v486, %v681
  %v683 = vpop.f32.mrf.mxu0
  %684 = vmatprep.mubr.f32.mxu0 0.0
  %685 = vmatmul.mubr.f32.gmra.mxu0 %v554
  %v686 = vpop.f32.mrf.mxu0
  %v687 = vadd.f32 %v491, %v686
  %v688 = vpop.f32.mrf.mxu0
  %689 = vmatprep.mubr.f32.mxu0 0.0
  %690 = vmatmul.mubr.f32.gmra.mxu0 %v557
  %v691 = vpop.f32.mrf.mxu0
  %v692 = vadd.f32 %v496, %v691
  %v693 = vpop.f32.mrf.mxu0
  %694 = vmatprep.mubr.f32.mxu0 0.0
  %695 = vmatmul.mubr.f32.gmra.mxu0 %v560
  %v696 = vpop.f32.mrf.mxu0
  %v697 = vadd.f32 %v501, %v696
  %v698 = vpop.f32.mrf.mxu0
  %699 = vmatprep.mubr.f32.mxu0 0.0
  %700 = vmatmul.mubr.f32.gmra.mxu0 %v563
  %v701 = vpop.f32.mrf.mxu0
  %v702 = vadd.f32 %v506, %v701
  %v703 = vpop.f32.mrf.mxu0
  %704 = vmatprep.mubr.f32.mxu0 0.0
  %705 = vmatmul.mubr.f32.gmra.mxu0 %v566
  %v706 = vpop.f32.mrf.mxu0
  %v707 = vadd.f32 %v511, %v706
  %v708 = vpop.f32.mrf.mxu0
  %709 = vmatprep.mubr.f32.mxu0 0.0
  %710 = vmatmul.mubr.f32.gmra.mxu0 %v569
  %v711 = vpop.f32.mrf.mxu0
  %v712 = vadd.f32 %v516, %v711
  %v713 = vpop.f32.mrf.mxu0
  %714 = vmatprep.mubr.f32.mxu0 0.0
  %715 = vmatmul.mubr.f32.gmra.mxu0 %v572
  %v716 = vpop.f32.mrf.mxu0
  %v717 = vadd.f32 %v521, %v716
  %v718 = vpop.f32.mrf.mxu0
  %719 = vmatprep.mubr.f32.mxu0 0.0
  %720 = vmatmul.mubr.f32.gmra.mxu0 %v575
  %v721 = vpop.f32.mrf.mxu0
  %v722 = vadd.f32 %v526, %v721
  %v723 = vpop.f32.mrf.mxu0
  %724 = vdwg.mxu0
  %v725 = vld [vmem:[#allocation2 + $0x2] sm:$0xff]
  %v726 = vld [vmem:[#allocation2 + $0x12] sm:$0xff]
  %v727 = vld [vmem:[#allocation2 + $0x22] sm:$0xff]
  %v728 = vld [vmem:[#allocation2 + $0x32] sm:$0xff]
  %v729 = vld [vmem:[#allocation2 + $0x42] sm:$0xff]
  %v730 = vld [vmem:[#allocation2 + $0x52] sm:$0xff]
  %v731 = vld [vmem:[#allocation2 + $0x62] sm:$0xff]
  %v732 = vld [vmem:[#allocation2 + $0x72] sm:$0xff]
  %v733 = vld [vmem:[#allocation2 + $0xa2] sm:$0xff]
  %v734 = vld [vmem:[#allocation2 + $0xb2] sm:$0xff]
  %v735 = vld [vmem:[#allocation2 + $0xc2] sm:$0xff]
  %v736 = vld [vmem:[#allocation2 + $0xd2] sm:$0xff]
  %v737 = vld [vmem:[#allocation2 + $0xe2] sm:$0xff]
  %v738 = vld [vmem:[#allocation2 + $0xf2] sm:$0xff]
  %v739 = vld [vmem:[#allocation2 + $0x102] sm:$0xff]
  %v740 = vld [vmem:[#allocation2 + $0x112] sm:$0xff]
  %s741 = scalar_lea.vmem %s1, 8
  %v742 = vld [vmem:[%s741] sm:$0xf]
  %v744 = vsel %vm228, %v725, 0
  %v747 = vsel %vm228, %v726, 0
  %v750 = vsel %vm228, %v727, 0
  %v753 = vsel %vm228, %v728, 0
  %v756 = vsel %vm228, %v729, 0
  %v759 = vsel %vm228, %v730, 0
  %v762 = vsel %vm228, %v731, 0
  %v765 = vsel %vm228, %v732, 0
  %v768 = vsel %vm228, %v733, 0
  %v771 = vsel %vm228, %v734, 0
  %v774 = vsel %vm228, %v735, 0
  %v777 = vsel %vm228, %v736, 0
  %v780 = vsel %vm228, %v737, 0
  %v783 = vsel %vm228, %v738, 0
  %v786 = vsel %vm228, %v739, 0
  %v789 = vsel %vm228, %v740, 0
  %v792 = vsel %vm380, %v742, 0
  %794 = vmatprep.subr.mxu0 0.0
  %795 = vmatpush1.msra.mxu0 0.0
  %796 = vmatprep.subr.mxu0 0.0
  %797 = vmatpush1.msra.mxu0 0.0
  %798 = vmatprep.subr.mxu0 0.0
  %799 = vmatpush1.msra.mxu0 0.0
  %800 = vmatprep.subr.mxu0 0.0
  %801 = vmatpush1.msra.mxu0 0.0
  %802 = vmatprep.subr.mxu0 0.0
  %803 = vmatpush1.msra.mxu0 0.0
  %804 = vmatprep.subr.mxu0 0.0
  %805 = vmatpush1.msra.mxu0 0.0
  %806 = vmatprep.subr.mxu0 0.0
  %807 = vmatpush1.msra.mxu0 0.0
  %808 = vmatprep.subr.mxu0 0.0
  %809 = vmatpush1.msra.mxu0 0.0
  %810 = vmatprep.subr.mxu0 0.0
  %811 = vmatpush1.msra.mxu0 0.0
  %812 = vmatprep.subr.mxu0 0.0
  %813 = vmatpush1.msra.mxu0 0.0
  %814 = vmatprep.subr.mxu0 0.0
  %815 = vmatpush1.msra.mxu0 0.0
  %816 = vmatprep.subr.mxu0 0.0
  %817 = vmatpush1.msra.mxu0 0.0
  %818 = vmatprep.subr.mxu0 0.0
  %819 = vmatpush1.msra.mxu0 0.0
  %820 = vmatprep.subr.mxu0 0.0
  %821 = vmatpush1.msra.mxu0 0.0
  %822 = vmatprep.subr.mxu0 0.0
  %823 = vmatpush1.msra.mxu0 0.0
  %824 = vmatprep.subr.mxu0 0.0
  %825 = vmatpush1.msra.mxu0 %v792
  %826 = vmatprep.subr.mxu0 0.0
  %827 = vmatpush2.msra.mxu0 0.0
  %828 = vmatprep.subr.mxu0 0.0
  %829 = vmatpush2.msra.mxu0 0.0
  %830 = vmatprep.subr.mxu0 0.0
  %831 = vmatpush2.msra.mxu0 0.0
  %832 = vmatprep.subr.mxu0 0.0
  %833 = vmatpush2.msra.mxu0 0.0
  %834 = vmatprep.subr.mxu0 0.0
  %835 = vmatpush2.msra.mxu0 0.0
  %836 = vmatprep.subr.mxu0 0.0
  %837 = vmatpush2.msra.mxu0 0.0
  %838 = vmatprep.subr.mxu0 0.0
  %839 = vmatpush2.msra.mxu0 0.0
  %840 = vmatprep.subr.mxu0 0.0
  %841 = vmatpush2.msra.mxu0 0.0
  %842 = vmatprep.subr.mxu0 0.0
  %843 = vmatpush2.msra.mxu0 0.0
  %844 = vmatprep.subr.mxu0 0.0
  %845 = vmatpush2.msra.mxu0 0.0
  %846 = vmatprep.subr.mxu0 0.0
  %847 = vmatpush2.msra.mxu0 0.0
  %848 = vmatprep.subr.mxu0 0.0
  %849 = vmatpush2.msra.mxu0 0.0
  %850 = vmatprep.subr.mxu0 0.0
  %851 = vmatpush2.msra.mxu0 0.0
  %852 = vmatprep.subr.mxu0 0.0
  %853 = vmatpush2.msra.mxu0 0.0
  %854 = vmatprep.subr.mxu0 0.0
  %855 = vmatpush2.msra.mxu0 0.0
  %856 = vmatprep.subr.mxu0 0.0
  %857 = vmatpush2.msra.mxu0 0.0
  %858 = vmatprep.mubr.f32.mxu0 0.0
  %859 = vmatmul.mubr.f32.gmra.mxu0 %v744
  %v860 = vpop.f32.mrf.mxu0
  %v861 = vadd.f32 0.0, %v860
  %v862 = vpop.f32.mrf.mxu0
  %863 = vmatprep.mubr.f32.mxu0 0.0
  %864 = vmatmul.mubr.f32.gmra.mxu0 %v747
  %v865 = vpop.f32.mrf.mxu0
  %v866 = vadd.f32 0.0, %v865
  %v867 = vpop.f32.mrf.mxu0
  %868 = vmatprep.mubr.f32.mxu0 0.0
  %869 = vmatmul.mubr.f32.gmra.mxu0 %v750
  %v870 = vpop.f32.mrf.mxu0
  %v871 = vadd.f32 0.0, %v870
  %v872 = vpop.f32.mrf.mxu0
  %873 = vmatprep.mubr.f32.mxu0 0.0
  %874 = vmatmul.mubr.f32.gmra.mxu0 %v753
  %v875 = vpop.f32.mrf.mxu0
  %v876 = vadd.f32 0.0, %v875
  %v877 = vpop.f32.mrf.mxu0
  %878 = vmatprep.mubr.f32.mxu0 0.0
  %879 = vmatmul.mubr.f32.gmra.mxu0 %v756
  %v880 = vpop.f32.mrf.mxu0
  %v881 = vadd.f32 0.0, %v880
  %v882 = vpop.f32.mrf.mxu0
  %883 = vmatprep.mubr.f32.mxu0 0.0
  %884 = vmatmul.mubr.f32.gmra.mxu0 %v759
  %v885 = vpop.f32.mrf.mxu0
  %v886 = vadd.f32 0.0, %v885
  %v887 = vpop.f32.mrf.mxu0
  %888 = vmatprep.mubr.f32.mxu0 0.0
  %889 = vmatmul.mubr.f32.gmra.mxu0 %v762
  %v890 = vpop.f32.mrf.mxu0
  %v891 = vadd.f32 0.0, %v890
  %v892 = vpop.f32.mrf.mxu0
  %893 = vmatprep.mubr.f32.mxu0 0.0
  %894 = vmatmul.mubr.f32.gmra.mxu0 %v765
  %v895 = vpop.f32.mrf.mxu0
  %v896 = vadd.f32 0.0, %v895
  %v897 = vpop.f32.mrf.mxu0
  %898 = vmatprep.mubr.f32.mxu0 0.0
  %899 = vmatmul.mubr.f32.gmra.mxu0 %v768
  %v900 = vpop.f32.mrf.mxu0
  %v901 = vadd.f32 0.0, %v900
  %v902 = vpop.f32.mrf.mxu0
  %903 = vmatprep.mubr.f32.mxu0 0.0
  %904 = vmatmul.mubr.f32.gmra.mxu0 %v771
  %v905 = vpop.f32.mrf.mxu0
  %v906 = vadd.f32 0.0, %v905
  %v907 = vpop.f32.mrf.mxu0
  %908 = vmatprep.mubr.f32.mxu0 0.0
  %909 = vmatmul.mubr.f32.gmra.mxu0 %v774
  %v910 = vpop.f32.mrf.mxu0
  %v911 = vadd.f32 0.0, %v910
  %v912 = vpop.f32.mrf.mxu0
  %913 = vmatprep.mubr.f32.mxu0 0.0
  %914 = vmatmul.mubr.f32.gmra.mxu0 %v777
  %v915 = vpop.f32.mrf.mxu0
  %v916 = vadd.f32 0.0, %v915
  %v917 = vpop.f32.mrf.mxu0
  %918 = vmatprep.mubr.f32.mxu0 0.0
  %919 = vmatmul.mubr.f32.gmra.mxu0 %v780
  %v920 = vpop.f32.mrf.mxu0
  %v921 = vadd.f32 0.0, %v920
  %v922 = vpop.f32.mrf.mxu0
  %923 = vmatprep.mubr.f32.mxu0 0.0
  %924 = vmatmul.mubr.f32.gmra.mxu0 %v783
  %v925 = vpop.f32.mrf.mxu0
  %v926 = vadd.f32 0.0, %v925
  %v927 = vpop.f32.mrf.mxu0
  %928 = vmatprep.mubr.f32.mxu0 0.0
  %929 = vmatmul.mubr.f32.gmra.mxu0 %v786
  %v930 = vpop.f32.mrf.mxu0
  %v931 = vadd.f32 0.0, %v930
  %v932 = vpop.f32.mrf.mxu0
  %933 = vmatprep.mubr.f32.mxu0 0.0
  %934 = vmatmul.mubr.f32.gmra.mxu0 %v789
  %v935 = vpop.f32.mrf.mxu0
  %v936 = vadd.f32 0.0, %v935
  %v937 = vpop.f32.mrf.mxu0
  %938 = vdwg.mxu0
  %v939 = vadd.f32 %v647, %v861
  %v940 = vadd.f32 %v652, %v866
  %v941 = vadd.f32 %v657, %v871
  %v942 = vadd.f32 %v662, %v876
  %v943 = vadd.f32 %v667, %v881
  %v944 = vadd.f32 %v672, %v886
  %v945 = vadd.f32 %v677, %v891
  %v946 = vadd.f32 %v682, %v896
  %v947 = vadd.f32 %v687, %v901
  %v948 = vadd.f32 %v692, %v906
  %v949 = vadd.f32 %v697, %v911
  %v950 = vadd.f32 %v702, %v916
  %v951 = vadd.f32 %v707, %v921
  %v952 = vadd.f32 %v712, %v926
  %v953 = vadd.f32 %v717, %v931
  %v954 = vadd.f32 %v722, %v936
  %v955 = vld [vmem:[%s280] sm:$0xff]
  %v956 = vld [vmem:[%s280 + $0x10] sm:$0xff]
  %v957 = vld [vmem:[%s280 + $0x20] sm:$0xff]
  %v958 = vld [vmem:[%s280 + $0x30] sm:$0xff]
  %v959 = vld [vmem:[%s280 + $0x40] sm:$0xff]
  %v960 = vld [vmem:[%s280 + $0x50] sm:$0xff]
  %v961 = vld [vmem:[%s280 + $0x60] sm:$0xff]
  %v962 = vld [vmem:[%s280 + $0x70] sm:$0xff]
  %v963 = vld [vmem:[%s280 + $0xa0] sm:$0xff]
  %v964 = vld [vmem:[%s280 + $0xb0] sm:$0xff]
  %v965 = vld [vmem:[%s280 + $0xc0] sm:$0xff]
  %v966 = vld [vmem:[%s280 + $0xd0] sm:$0xff]
  %v967 = vld [vmem:[%s280 + $0xe0] sm:$0xff]
  %v968 = vld [vmem:[%s280 + $0xf0] sm:$0xff]
  %v969 = vld [vmem:[%s280 + $0x100] sm:$0xff]
  %v970 = vld [vmem:[%s280 + $0x110] sm:$0xff]
  %s971 = scalar_lea.vmem %s1, 12
  %v972 = vld [vmem:[%s971] sm:$0xf]
  %v974 = vsel %vm228, %v955, 0
  %v977 = vsel %vm228, %v956, 0
  %v980 = vsel %vm228, %v957, 0
  %v983 = vsel %vm228, %v958, 0
  %v986 = vsel %vm228, %v959, 0
  %v989 = vsel %vm228, %v960, 0
  %v992 = vsel %vm228, %v961, 0
  %v995 = vsel %vm228, %v962, 0
  %v998 = vsel %vm228, %v963, 0
  %v1001 = vsel %vm228, %v964, 0
  %v1004 = vsel %vm228, %v965, 0
  %v1007 = vsel %vm228, %v966, 0
  %v1010 = vsel %vm228, %v967, 0
  %v1013 = vsel %vm228, %v968, 0
  %v1016 = vsel %vm228, %v969, 0
  %v1019 = vsel %vm228, %v970, 0
  %v1022 = vsel %vm380, %v972, 0
  %1024 = vmatprep.subr.mxu0 0.0
  %1025 = vmatpush1.msra.mxu0 0.0
  %1026 = vmatprep.subr.mxu0 0.0
  %1027 = vmatpush1.msra.mxu0 0.0
  %1028 = vmatprep.subr.mxu0 0.0
  %1029 = vmatpush1.msra.mxu0 0.0
  %1030 = vmatprep.subr.mxu0 0.0
  %1031 = vmatpush1.msra.mxu0 0.0
  %1032 = vmatprep.subr.mxu0 0.0
  %1033 = vmatpush1.msra.mxu0 0.0
  %1034 = vmatprep.subr.mxu0 0.0
  %1035 = vmatpush1.msra.mxu0 0.0
  %1036 = vmatprep.subr.mxu0 0.0
  %1037 = vmatpush1.msra.mxu0 0.0
  %1038 = vmatprep.subr.mxu0 0.0
  %1039 = vmatpush1.msra.mxu0 0.0
  %1040 = vmatprep.subr.mxu0 0.0
  %1041 = vmatpush1.msra.mxu0 0.0
  %1042 = vmatprep.subr.mxu0 0.0
  %1043 = vmatpush1.msra.mxu0 0.0
  %1044 = vmatprep.subr.mxu0 0.0
  %1045 = vmatpush1.msra.mxu0 0.0
  %1046 = vmatprep.subr.mxu0 0.0
  %1047 = vmatpush1.msra.mxu0 0.0
  %1048 = vmatprep.subr.mxu0 0.0
  %1049 = vmatpush1.msra.mxu0 0.0
  %1050 = vmatprep.subr.mxu0 0.0
  %1051 = vmatpush1.msra.mxu0 0.0
  %1052 = vmatprep.subr.mxu0 0.0
  %1053 = vmatpush1.msra.mxu0 0.0
  %1054 = vmatprep.subr.mxu0 0.0
  %1055 = vmatpush1.msra.mxu0 %v1022
  %1056 = vmatprep.subr.mxu0 0.0
  %1057 = vmatpush2.msra.mxu0 0.0
  %1058 = vmatprep.subr.mxu0 0.0
  %1059 = vmatpush2.msra.mxu0 0.0
  %1060 = vmatprep.subr.mxu0 0.0
  %1061 = vmatpush2.msra.mxu0 0.0
  %1062 = vmatprep.subr.mxu0 0.0
  %1063 = vmatpush2.msra.mxu0 0.0
  %1064 = vmatprep.subr.mxu0 0.0
  %1065 = vmatpush2.msra.mxu0 0.0
  %1066 = vmatprep.subr.mxu0 0.0
  %1067 = vmatpush2.msra.mxu0 0.0
  %1068 = vmatprep.subr.mxu0 0.0
  %1069 = vmatpush2.msra.mxu0 0.0
  %1070 = vmatprep.subr.mxu0 0.0
  %1071 = vmatpush2.msra.mxu0 0.0
  %1072 = vmatprep.subr.mxu0 0.0
  %1073 = vmatpush2.msra.mxu0 0.0
  %1074 = vmatprep.subr.mxu0 0.0
  %1075 = vmatpush2.msra.mxu0 0.0
  %1076 = vmatprep.subr.mxu0 0.0
  %1077 = vmatpush2.msra.mxu0 0.0
  %1078 = vmatprep.subr.mxu0 0.0
  %1079 = vmatpush2.msra.mxu0 0.0
  %1080 = vmatprep.subr.mxu0 0.0
  %1081 = vmatpush2.msra.mxu0 0.0
  %1082 = vmatprep.subr.mxu0 0.0
  %1083 = vmatpush2.msra.mxu0 0.0
  %1084 = vmatprep.subr.mxu0 0.0
  %1085 = vmatpush2.msra.mxu0 0.0
  %1086 = vmatprep.subr.mxu0 0.0
  %1087 = vmatpush2.msra.mxu0 0.0
  %1088 = vmatprep.mubr.f32.mxu0 0.0
  %1089 = vmatmul.mubr.f32.gmra.mxu0 %v974
  %v1090 = vpop.f32.mrf.mxu0
  %v1091 = vadd.f32 0.0, %v1090
  %v1092 = vpop.f32.mrf.mxu0
  %1093 = vmatprep.mubr.f32.mxu0 0.0
  %1094 = vmatmul.mubr.f32.gmra.mxu0 %v977
  %v1095 = vpop.f32.mrf.mxu0
  %v1096 = vadd.f32 0.0, %v1095
  %v1097 = vpop.f32.mrf.mxu0
  %1098 = vmatprep.mubr.f32.mxu0 0.0
  %1099 = vmatmul.mubr.f32.gmra.mxu0 %v980
  %v1100 = vpop.f32.mrf.mxu0
  %v1101 = vadd.f32 0.0, %v1100
  %v1102 = vpop.f32.mrf.mxu0
  %1103 = vmatprep.mubr.f32.mxu0 0.0
  %1104 = vmatmul.mubr.f32.gmra.mxu0 %v983
  %v1105 = vpop.f32.mrf.mxu0
  %v1106 = vadd.f32 0.0, %v1105
  %v1107 = vpop.f32.mrf.mxu0
  %1108 = vmatprep.mubr.f32.mxu0 0.0
  %1109 = vmatmul.mubr.f32.gmra.mxu0 %v986
  %v1110 = vpop.f32.mrf.mxu0
  %v1111 = vadd.f32 0.0, %v1110
  %v1112 = vpop.f32.mrf.mxu0
  %1113 = vmatprep.mubr.f32.mxu0 0.0
  %1114 = vmatmul.mubr.f32.gmra.mxu0 %v989
  %v1115 = vpop.f32.mrf.mxu0
  %v1116 = vadd.f32 0.0, %v1115
  %v1117 = vpop.f32.mrf.mxu0
  %1118 = vmatprep.mubr.f32.mxu0 0.0
  %1119 = vmatmul.mubr.f32.gmra.mxu0 %v992
  %v1120 = vpop.f32.mrf.mxu0
  %v1121 = vadd.f32 0.0, %v1120
  %v1122 = vpop.f32.mrf.mxu0
  %1123 = vmatprep.mubr.f32.mxu0 0.0
  %1124 = vmatmul.mubr.f32.gmra.mxu0 %v995
  %v1125 = vpop.f32.mrf.mxu0
  %v1126 = vadd.f32 0.0, %v1125
  %v1127 = vpop.f32.mrf.mxu0
  %1128 = vmatprep.mubr.f32.mxu0 0.0
  %1129 = vmatmul.mubr.f32.gmra.mxu0 %v998
  %v1130 = vpop.f32.mrf.mxu0
  %v1131 = vadd.f32 0.0, %v1130
  %v1132 = vpop.f32.mrf.mxu0
  %1133 = vmatprep.mubr.f32.mxu0 0.0
  %1134 = vmatmul.mubr.f32.gmra.mxu0 %v1001
  %v1135 = vpop.f32.mrf.mxu0
  %v1136 = vadd.f32 0.0, %v1135
  %v1137 = vpop.f32.mrf.mxu0
  %1138 = vmatprep.mubr.f32.mxu0 0.0
  %1139 = vmatmul.mubr.f32.gmra.mxu0 %v1004
  %v1140 = vpop.f32.mrf.mxu0
  %v1141 = vadd.f32 0.0, %v1140
  %v1142 = vpop.f32.mrf.mxu0
  %1143 = vmatprep.mubr.f32.mxu0 0.0
  %1144 = vmatmul.mubr.f32.gmra.mxu0 %v1007
  %v1145 = vpop.f32.mrf.mxu0
  %v1146 = vadd.f32 0.0, %v1145
  %v1147 = vpop.f32.mrf.mxu0
  %1148 = vmatprep.mubr.f32.mxu0 0.0
  %1149 = vmatmul.mubr.f32.gmra.mxu0 %v1010
  %v1150 = vpop.f32.mrf.mxu0
  %v1151 = vadd.f32 0.0, %v1150
  %v1152 = vpop.f32.mrf.mxu0
  %1153 = vmatprep.mubr.f32.mxu0 0.0
  %1154 = vmatmul.mubr.f32.gmra.mxu0 %v1013
  %v1155 = vpop.f32.mrf.mxu0
  %v1156 = vadd.f32 0.0, %v1155
  %v1157 = vpop.f32.mrf.mxu0
  %1158 = vmatprep.mubr.f32.mxu0 0.0
  %1159 = vmatmul.mubr.f32.gmra.mxu0 %v1016
  %v1160 = vpop.f32.mrf.mxu0
  %v1161 = vadd.f32 0.0, %v1160
  %v1162 = vpop.f32.mrf.mxu0
  %1163 = vmatprep.mubr.f32.mxu0 0.0
  %1164 = vmatmul.mubr.f32.gmra.mxu0 %v1019
  %v1165 = vpop.f32.mrf.mxu0
  %v1166 = vadd.f32 0.0, %v1165
  %v1167 = vpop.f32.mrf.mxu0
  %1168 = vdwg.mxu0
  %v1169 = vadd.f32 %v939, %v1091
  %v1170 = vadd.f32 %v940, %v1096
  %v1171 = vadd.f32 %v941, %v1101
  %v1172 = vadd.f32 %v942, %v1106
  %v1173 = vadd.f32 %v943, %v1111
  %v1174 = vadd.f32 %v944, %v1116
  %v1175 = vadd.f32 %v945, %v1121
  %v1176 = vadd.f32 %v946, %v1126
  %v1177 = vadd.f32 %v947, %v1131
  %v1178 = vadd.f32 %v948, %v1136
  %v1179 = vadd.f32 %v949, %v1141
  %v1180 = vadd.f32 %v950, %v1146
  %v1181 = vadd.f32 %v951, %v1151
  %v1182 = vadd.f32 %v952, %v1156
  %v1183 = vadd.f32 %v953, %v1161
  %v1184 = vadd.f32 %v954, %v1166
  %v1185 = vld [vmem:[%s280 + $0x1] sm:$0xff]
  %v1186 = vld [vmem:[%s280 + $0x11] sm:$0xff]
  %v1187 = vld [vmem:[%s280 + $0x21] sm:$0xff]
  %v1188 = vld [vmem:[%s280 + $0x31] sm:$0xff]
  %v1189 = vld [vmem:[%s280 + $0x41] sm:$0xff]
  %v1190 = vld [vmem:[%s280 + $0x51] sm:$0xff]
  %v1191 = vld [vmem:[%s280 + $0x61] sm:$0xff]
  %v1192 = vld [vmem:[%s280 + $0x71] sm:$0xff]
  %v1193 = vld [vmem:[%s280 + $0xa1] sm:$0xff]
  %v1194 = vld [vmem:[%s280 + $0xb1] sm:$0xff]
  %v1195 = vld [vmem:[%s280 + $0xc1] sm:$0xff]
  %v1196 = vld [vmem:[%s280 + $0xd1] sm:$0xff]
  %v1197 = vld [vmem:[%s280 + $0xe1] sm:$0xff]
  %v1198 = vld [vmem:[%s280 + $0xf1] sm:$0xff]
  %v1199 = vld [vmem:[%s280 + $0x101] sm:$0xff]
  %v1200 = vld [vmem:[%s280 + $0x111] sm:$0xff]
  %s1201 = scalar_lea.vmem %s1, 16
  %v1202 = vld [vmem:[%s1201] sm:$0xf]
  %v1204 = vsel %vm228, %v1185, 0
  %v1207 = vsel %vm228, %v1186, 0
  %v1210 = vsel %vm228, %v1187, 0
  %v1213 = vsel %vm228, %v1188, 0
  %v1216 = vsel %vm228, %v1189, 0
  %v1219 = vsel %vm228, %v1190, 0
  %v1222 = vsel %vm228, %v1191, 0
  %v1225 = vsel %vm228, %v1192, 0
  %v1228 = vsel %vm228, %v1193, 0
  %v1231 = vsel %vm228, %v1194, 0
  %v1234 = vsel %vm228, %v1195, 0
  %v1237 = vsel %vm228, %v1196, 0
  %v1240 = vsel %vm228, %v1197, 0
  %v1243 = vsel %vm228, %v1198, 0
  %v1246 = vsel %vm228, %v1199, 0
  %v1249 = vsel %vm228, %v1200, 0
  %v1252 = vsel %vm380, %v1202, 0
  %1254 = vmatprep.subr.mxu0 0.0
  %1255 = vmatpush1.msra.mxu0 0.0
  %1256 = vmatprep.subr.mxu0 0.0
  %1257 = vmatpush1.msra.mxu0 0.0
  %1258 = vmatprep.subr.mxu0 0.0
  %1259 = vmatpush1.msra.mxu0 0.0
  %1260 = vmatprep.subr.mxu0 0.0
  %1261 = vmatpush1.msra.mxu0 0.0
  %1262 = vmatprep.subr.mxu0 0.0
  %1263 = vmatpush1.msra.mxu0 0.0
  %1264 = vmatprep.subr.mxu0 0.0
  %1265 = vmatpush1.msra.mxu0 0.0
  %1266 = vmatprep.subr.mxu0 0.0
  %1267 = vmatpush1.msra.mxu0 0.0
  %1268 = vmatprep.subr.mxu0 0.0
  %1269 = vmatpush1.msra.mxu0 0.0
  %1270 = vmatprep.subr.mxu0 0.0
  %1271 = vmatpush1.msra.mxu0 0.0
  %1272 = vmatprep.subr.mxu0 0.0
  %1273 = vmatpush1.msra.mxu0 0.0
  %1274 = vmatprep.subr.mxu0 0.0
  %1275 = vmatpush1.msra.mxu0 0.0
  %1276 = vmatprep.subr.mxu0 0.0
  %1277 = vmatpush1.msra.mxu0 0.0
  %1278 = vmatprep.subr.mxu0 0.0
  %1279 = vmatpush1.msra.mxu0 0.0
  %1280 = vmatprep.subr.mxu0 0.0
  %1281 = vmatpush1.msra.mxu0 0.0
  %1282 = vmatprep.subr.mxu0 0.0
  %1283 = vmatpush1.msra.mxu0 0.0
  %1284 = vmatprep.subr.mxu0 0.0
  %1285 = vmatpush1.msra.mxu0 %v1252
  %1286 = vmatprep.subr.mxu0 0.0
  %1287 = vmatpush2.msra.mxu0 0.0
  %1288 = vmatprep.subr.mxu0 0.0
  %1289 = vmatpush2.msra.mxu0 0.0
  %1290 = vmatprep.subr.mxu0 0.0
  %1291 = vmatpush2.msra.mxu0 0.0
  %1292 = vmatprep.subr.mxu0 0.0
  %1293 = vmatpush2.msra.mxu0 0.0
  %1294 = vmatprep.subr.mxu0 0.0
  %1295 = vmatpush2.msra.mxu0 0.0
  %1296 = vmatprep.subr.mxu0 0.0
  %1297 = vmatpush2.msra.mxu0 0.0
  %1298 = vmatprep.subr.mxu0 0.0
  %1299 = vmatpush2.msra.mxu0 0.0
  %1300 = vmatprep.subr.mxu0 0.0
  %1301 = vmatpush2.msra.mxu0 0.0
  %1302 = vmatprep.subr.mxu0 0.0
  %1303 = vmatpush2.msra.mxu0 0.0
  %1304 = vmatprep.subr.mxu0 0.0
  %1305 = vmatpush2.msra.mxu0 0.0
  %1306 = vmatprep.subr.mxu0 0.0
  %1307 = vmatpush2.msra.mxu0 0.0
  %1308 = vmatprep.subr.mxu0 0.0
  %1309 = vmatpush2.msra.mxu0 0.0
  %1310 = vmatprep.subr.mxu0 0.0
  %1311 = vmatpush2.msra.mxu0 0.0
  %1312 = vmatprep.subr.mxu0 0.0
  %1313 = vmatpush2.msra.mxu0 0.0
  %1314 = vmatprep.subr.mxu0 0.0
  %1315 = vmatpush2.msra.mxu0 0.0
  %1316 = vmatprep.subr.mxu0 0.0
  %1317 = vmatpush2.msra.mxu0 0.0
  %1318 = vmatprep.mubr.f32.mxu0 0.0
  %1319 = vmatmul.mubr.f32.gmra.mxu0 %v1204
  %v1320 = vpop.f32.mrf.mxu0
  %v1321 = vadd.f32 0.0, %v1320
  %v1322 = vpop.f32.mrf.mxu0
  %1323 = vmatprep.mubr.f32.mxu0 0.0
  %1324 = vmatmul.mubr.f32.gmra.mxu0 %v1207
  %v1325 = vpop.f32.mrf.mxu0
  %v1326 = vadd.f32 0.0, %v1325
  %v1327 = vpop.f32.mrf.mxu0
  %1328 = vmatprep.mubr.f32.mxu0 0.0
  %1329 = vmatmul.mubr.f32.gmra.mxu0 %v1210
  %v1330 = vpop.f32.mrf.mxu0
  %v1331 = vadd.f32 0.0, %v1330
  %v1332 = vpop.f32.mrf.mxu0
  %1333 = vmatprep.mubr.f32.mxu0 0.0
  %1334 = vmatmul.mubr.f32.gmra.mxu0 %v1213
  %v1335 = vpop.f32.mrf.mxu0
  %v1336 = vadd.f32 0.0, %v1335
  %v1337 = vpop.f32.mrf.mxu0
  %1338 = vmatprep.mubr.f32.mxu0 0.0
  %1339 = vmatmul.mubr.f32.gmra.mxu0 %v1216
  %v1340 = vpop.f32.mrf.mxu0
  %v1341 = vadd.f32 0.0, %v1340
  %v1342 = vpop.f32.mrf.mxu0
  %1343 = vmatprep.mubr.f32.mxu0 0.0
  %1344 = vmatmul.mubr.f32.gmra.mxu0 %v1219
  %v1345 = vpop.f32.mrf.mxu0
  %v1346 = vadd.f32 0.0, %v1345
  %v1347 = vpop.f32.mrf.mxu0
  %1348 = vmatprep.mubr.f32.mxu0 0.0
  %1349 = vmatmul.mubr.f32.gmra.mxu0 %v1222
  %v1350 = vpop.f32.mrf.mxu0
  %v1351 = vadd.f32 0.0, %v1350
  %v1352 = vpop.f32.mrf.mxu0
  %1353 = vmatprep.mubr.f32.mxu0 0.0
  %1354 = vmatmul.mubr.f32.gmra.mxu0 %v1225
  %v1355 = vpop.f32.mrf.mxu0
  %v1356 = vadd.f32 0.0, %v1355
  %v1357 = vpop.f32.mrf.mxu0
  %1358 = vmatprep.mubr.f32.mxu0 0.0
  %1359 = vmatmul.mubr.f32.gmra.mxu0 %v1228
  %v1360 = vpop.f32.mrf.mxu0
  %v1361 = vadd.f32 0.0, %v1360
  %v1362 = vpop.f32.mrf.mxu0
  %1363 = vmatprep.mubr.f32.mxu0 0.0
  %1364 = vmatmul.mubr.f32.gmra.mxu0 %v1231
  %v1365 = vpop.f32.mrf.mxu0
  %v1366 = vadd.f32 0.0, %v1365
  %v1367 = vpop.f32.mrf.mxu0
  %1368 = vmatprep.mubr.f32.mxu0 0.0
  %1369 = vmatmul.mubr.f32.gmra.mxu0 %v1234
  %v1370 = vpop.f32.mrf.mxu0
  %v1371 = vadd.f32 0.0, %v1370
  %v1372 = vpop.f32.mrf.mxu0
  %1373 = vmatprep.mubr.f32.mxu0 0.0
  %1374 = vmatmul.mubr.f32.gmra.mxu0 %v1237
  %v1375 = vpop.f32.mrf.mxu0
  %v1376 = vadd.f32 0.0, %v1375
  %v1377 = vpop.f32.mrf.mxu0
  %1378 = vmatprep.mubr.f32.mxu0 0.0
  %1379 = vmatmul.mubr.f32.gmra.mxu0 %v1240
  %v1380 = vpop.f32.mrf.mxu0
  %v1381 = vadd.f32 0.0, %v1380
  %v1382 = vpop.f32.mrf.mxu0
  %1383 = vmatprep.mubr.f32.mxu0 0.0
  %1384 = vmatmul.mubr.f32.gmra.mxu0 %v1243
  %v1385 = vpop.f32.mrf.mxu0
  %v1386 = vadd.f32 0.0, %v1385
  %v1387 = vpop.f32.mrf.mxu0
  %1388 = vmatprep.mubr.f32.mxu0 0.0
  %1389 = vmatmul.mubr.f32.gmra.mxu0 %v1246
  %v1390 = vpop.f32.mrf.mxu0
  %v1391 = vadd.f32 0.0, %v1390
  %v1392 = vpop.f32.mrf.mxu0
  %1393 = vmatprep.mubr.f32.mxu0 0.0
  %1394 = vmatmul.mubr.f32.gmra.mxu0 %v1249
  %v1395 = vpop.f32.mrf.mxu0
  %v1396 = vadd.f32 0.0, %v1395
  %v1397 = vpop.f32.mrf.mxu0
  %1398 = vdwg.mxu0
  %v1399 = vadd.f32 %v1169, %v1321
  %v1400 = vadd.f32 %v1170, %v1326
  %v1401 = vadd.f32 %v1171, %v1331
  %v1402 = vadd.f32 %v1172, %v1336
  %v1403 = vadd.f32 %v1173, %v1341
  %v1404 = vadd.f32 %v1174, %v1346
  %v1405 = vadd.f32 %v1175, %v1351
  %v1406 = vadd.f32 %v1176, %v1356
  %v1407 = vadd.f32 %v1177, %v1361
  %v1408 = vadd.f32 %v1178, %v1366
  %v1409 = vadd.f32 %v1179, %v1371
  %v1410 = vadd.f32 %v1180, %v1376
  %v1411 = vadd.f32 %v1181, %v1381
  %v1412 = vadd.f32 %v1182, %v1386
  %v1413 = vadd.f32 %v1183, %v1391
  %v1414 = vadd.f32 %v1184, %v1396
  %v1415 = vld [vmem:[%s280 + $0x2] sm:$0xff]
  %v1416 = vld [vmem:[%s280 + $0x12] sm:$0xff]
  %v1417 = vld [vmem:[%s280 + $0x22] sm:$0xff]
  %v1418 = vld [vmem:[%s280 + $0x32] sm:$0xff]
  %v1419 = vld [vmem:[%s280 + $0x42] sm:$0xff]
  %v1420 = vld [vmem:[%s280 + $0x52] sm:$0xff]
  %v1421 = vld [vmem:[%s280 + $0x62] sm:$0xff]
  %v1422 = vld [vmem:[%s280 + $0x72] sm:$0xff]
  %v1423 = vld [vmem:[%s280 + $0xa2] sm:$0xff]
  %v1424 = vld [vmem:[%s280 + $0xb2] sm:$0xff]
  %v1425 = vld [vmem:[%s280 + $0xc2] sm:$0xff]
  %v1426 = vld [vmem:[%s280 + $0xd2] sm:$0xff]
  %v1427 = vld [vmem:[%s280 + $0xe2] sm:$0xff]
  %v1428 = vld [vmem:[%s280 + $0xf2] sm:$0xff]
  %v1429 = vld [vmem:[%s280 + $0x102] sm:$0xff]
  %v1430 = vld [vmem:[%s280 + $0x112] sm:$0xff]
  %s1431 = scalar_lea.vmem %s1, 20
  %v1432 = vld [vmem:[%s1431] sm:$0xf]
  %v1434 = vsel %vm228, %v1415, 0
  %v1437 = vsel %vm228, %v1416, 0
  %v1440 = vsel %vm228, %v1417, 0
  %v1443 = vsel %vm228, %v1418, 0
  %v1446 = vsel %vm228, %v1419, 0
  %v1449 = vsel %vm228, %v1420, 0
  %v1452 = vsel %vm228, %v1421, 0
  %v1455 = vsel %vm228, %v1422, 0
  %v1458 = vsel %vm228, %v1423, 0
  %v1461 = vsel %vm228, %v1424, 0
  %v1464 = vsel %vm228, %v1425, 0
  %v1467 = vsel %vm228, %v1426, 0
  %v1470 = vsel %vm228, %v1427, 0
  %v1473 = vsel %vm228, %v1428, 0
  %v1476 = vsel %vm228, %v1429, 0
  %v1479 = vsel %vm228, %v1430, 0
  %v1482 = vsel %vm380, %v1432, 0
  %1484 = vmatprep.subr.mxu0 0.0
  %1485 = vmatpush1.msra.mxu0 0.0
  %1486 = vmatprep.subr.mxu0 0.0
  %1487 = vmatpush1.msra.mxu0 0.0
  %1488 = vmatprep.subr.mxu0 0.0
  %1489 = vmatpush1.msra.mxu0 0.0
  %1490 = vmatprep.subr.mxu0 0.0
  %1491 = vmatpush1.msra.mxu0 0.0
  %1492 = vmatprep.subr.mxu0 0.0
  %1493 = vmatpush1.msra.mxu0 0.0
  %1494 = vmatprep.subr.mxu0 0.0
  %1495 = vmatpush1.msra.mxu0 0.0
  %1496 = vmatprep.subr.mxu0 0.0
  %1497 = vmatpush1.msra.mxu0 0.0
  %1498 = vmatprep.subr.mxu0 0.0
  %1499 = vmatpush1.msra.mxu0 0.0
  %1500 = vmatprep.subr.mxu0 0.0
  %1501 = vmatpush1.msra.mxu0 0.0
  %1502 = vmatprep.subr.mxu0 0.0
  %1503 = vmatpush1.msra.mxu0 0.0
  %1504 = vmatprep.subr.mxu0 0.0
  %1505 = vmatpush1.msra.mxu0 0.0
  %1506 = vmatprep.subr.mxu0 0.0
  %1507 = vmatpush1.msra.mxu0 0.0
  %1508 = vmatprep.subr.mxu0 0.0
  %1509 = vmatpush1.msra.mxu0 0.0
  %1510 = vmatprep.subr.mxu0 0.0
  %1511 = vmatpush1.msra.mxu0 0.0
  %1512 = vmatprep.subr.mxu0 0.0
  %1513 = vmatpush1.msra.mxu0 0.0
  %1514 = vmatprep.subr.mxu0 0.0
  %1515 = vmatpush1.msra.mxu0 %v1482
  %1516 = vmatprep.subr.mxu0 0.0
  %1517 = vmatpush2.msra.mxu0 0.0
  %1518 = vmatprep.subr.mxu0 0.0
  %1519 = vmatpush2.msra.mxu0 0.0
  %1520 = vmatprep.subr.mxu0 0.0
  %1521 = vmatpush2.msra.mxu0 0.0
  %1522 = vmatprep.subr.mxu0 0.0
  %1523 = vmatpush2.msra.mxu0 0.0
  %1524 = vmatprep.subr.mxu0 0.0
  %1525 = vmatpush2.msra.mxu0 0.0
  %1526 = vmatprep.subr.mxu0 0.0
  %1527 = vmatpush2.msra.mxu0 0.0
  %1528 = vmatprep.subr.mxu0 0.0
  %1529 = vmatpush2.msra.mxu0 0.0
  %1530 = vmatprep.subr.mxu0 0.0
  %1531 = vmatpush2.msra.mxu0 0.0
  %1532 = vmatprep.subr.mxu0 0.0
  %1533 = vmatpush2.msra.mxu0 0.0
  %1534 = vmatprep.subr.mxu0 0.0
  %1535 = vmatpush2.msra.mxu0 0.0
  %1536 = vmatprep.subr.mxu0 0.0
  %1537 = vmatpush2.msra.mxu0 0.0
  %1538 = vmatprep.subr.mxu0 0.0
  %1539 = vmatpush2.msra.mxu0 0.0
  %1540 = vmatprep.subr.mxu0 0.0
  %1541 = vmatpush2.msra.mxu0 0.0
  %1542 = vmatprep.subr.mxu0 0.0
  %1543 = vmatpush2.msra.mxu0 0.0
  %1544 = vmatprep.subr.mxu0 0.0
  %1545 = vmatpush2.msra.mxu0 0.0
  %1546 = vmatprep.subr.mxu0 0.0
  %1547 = vmatpush2.msra.mxu0 0.0
  %1548 = vmatprep.mubr.f32.mxu0 0.0
  %1549 = vmatmul.mubr.f32.gmra.mxu0 %v1434
  %v1550 = vpop.f32.mrf.mxu0
  %v1551 = vadd.f32 0.0, %v1550
  %v1552 = vpop.f32.mrf.mxu0
  %1553 = vmatprep.mubr.f32.mxu0 0.0
  %1554 = vmatmul.mubr.f32.gmra.mxu0 %v1437
  %v1555 = vpop.f32.mrf.mxu0
  %v1556 = vadd.f32 0.0, %v1555
  %v1557 = vpop.f32.mrf.mxu0
  %1558 = vmatprep.mubr.f32.mxu0 0.0
  %1559 = vmatmul.mubr.f32.gmra.mxu0 %v1440
  %v1560 = vpop.f32.mrf.mxu0
  %v1561 = vadd.f32 0.0, %v1560
  %v1562 = vpop.f32.mrf.mxu0
  %1563 = vmatprep.mubr.f32.mxu0 0.0
  %1564 = vmatmul.mubr.f32.gmra.mxu0 %v1443
  %v1565 = vpop.f32.mrf.mxu0
  %v1566 = vadd.f32 0.0, %v1565
  %v1567 = vpop.f32.mrf.mxu0
  %1568 = vmatprep.mubr.f32.mxu0 0.0
  %1569 = vmatmul.mubr.f32.gmra.mxu0 %v1446
  %v1570 = vpop.f32.mrf.mxu0
  %v1571 = vadd.f32 0.0, %v1570
  %v1572 = vpop.f32.mrf.mxu0
  %1573 = vmatprep.mubr.f32.mxu0 0.0
  %1574 = vmatmul.mubr.f32.gmra.mxu0 %v1449
  %v1575 = vpop.f32.mrf.mxu0
  %v1576 = vadd.f32 0.0, %v1575
  %v1577 = vpop.f32.mrf.mxu0
  %1578 = vmatprep.mubr.f32.mxu0 0.0
  %1579 = vmatmul.mubr.f32.gmra.mxu0 %v1452
  %v1580 = vpop.f32.mrf.mxu0
  %v1581 = vadd.f32 0.0, %v1580
  %v1582 = vpop.f32.mrf.mxu0
  %1583 = vmatprep.mubr.f32.mxu0 0.0
  %1584 = vmatmul.mubr.f32.gmra.mxu0 %v1455
  %v1585 = vpop.f32.mrf.mxu0
  %v1586 = vadd.f32 0.0, %v1585
  %v1587 = vpop.f32.mrf.mxu0
  %1588 = vmatprep.mubr.f32.mxu0 0.0
  %1589 = vmatmul.mubr.f32.gmra.mxu0 %v1458
  %v1590 = vpop.f32.mrf.mxu0
  %v1591 = vadd.f32 0.0, %v1590
  %v1592 = vpop.f32.mrf.mxu0
  %1593 = vmatprep.mubr.f32.mxu0 0.0
  %1594 = vmatmul.mubr.f32.gmra.mxu0 %v1461
  %v1595 = vpop.f32.mrf.mxu0
  %v1596 = vadd.f32 0.0, %v1595
  %v1597 = vpop.f32.mrf.mxu0
  %1598 = vmatprep.mubr.f32.mxu0 0.0
  %1599 = vmatmul.mubr.f32.gmra.mxu0 %v1464
  %v1600 = vpop.f32.mrf.mxu0
  %v1601 = vadd.f32 0.0, %v1600
  %v1602 = vpop.f32.mrf.mxu0
  %1603 = vmatprep.mubr.f32.mxu0 0.0
  %1604 = vmatmul.mubr.f32.gmra.mxu0 %v1467
  %v1605 = vpop.f32.mrf.mxu0
  %v1606 = vadd.f32 0.0, %v1605
  %v1607 = vpop.f32.mrf.mxu0
  %1608 = vmatprep.mubr.f32.mxu0 0.0
  %1609 = vmatmul.mubr.f32.gmra.mxu0 %v1470
  %v1610 = vpop.f32.mrf.mxu0
  %v1611 = vadd.f32 0.0, %v1610
  %v1612 = vpop.f32.mrf.mxu0
  %1613 = vmatprep.mubr.f32.mxu0 0.0
  %1614 = vmatmul.mubr.f32.gmra.mxu0 %v1473
  %v1615 = vpop.f32.mrf.mxu0
  %v1616 = vadd.f32 0.0, %v1615
  %v1617 = vpop.f32.mrf.mxu0
  %1618 = vmatprep.mubr.f32.mxu0 0.0
  %1619 = vmatmul.mubr.f32.gmra.mxu0 %v1476
  %v1620 = vpop.f32.mrf.mxu0
  %v1621 = vadd.f32 0.0, %v1620
  %v1622 = vpop.f32.mrf.mxu0
  %1623 = vmatprep.mubr.f32.mxu0 0.0
  %1624 = vmatmul.mubr.f32.gmra.mxu0 %v1479
  %v1625 = vpop.f32.mrf.mxu0
  %v1626 = vadd.f32 0.0, %v1625
  %v1627 = vpop.f32.mrf.mxu0
  %1628 = vdwg.mxu0
  %v1629 = vadd.f32 %v1399, %v1551
  %v1630 = vadd.f32 %v1400, %v1556
  %v1631 = vadd.f32 %v1401, %v1561
  %v1632 = vadd.f32 %v1402, %v1566
  %v1633 = vadd.f32 %v1403, %v1571
  %v1634 = vadd.f32 %v1404, %v1576
  %v1635 = vadd.f32 %v1405, %v1581
  %v1636 = vadd.f32 %v1406, %v1586
  %v1637 = vadd.f32 %v1407, %v1591
  %v1638 = vadd.f32 %v1408, %v1596
  %v1639 = vadd.f32 %v1409, %v1601
  %v1640 = vadd.f32 %v1410, %v1606
  %v1641 = vadd.f32 %v1411, %v1611
  %v1642 = vadd.f32 %v1412, %v1616
  %v1643 = vadd.f32 %v1413, %v1621
  %v1644 = vadd.f32 %v1414, %v1626
  %s1645 = scalar_lea.vmem [#allocation2], 32
  %v1646 = vld [vmem:[%s1645] sm:$0xff]
  %v1647 = vld [vmem:[%s1645 + $0x10] sm:$0xff]
  %v1648 = vld [vmem:[%s1645 + $0x20] sm:$0xff]
  %v1649 = vld [vmem:[%s1645 + $0x30] sm:$0xff]
  %v1650 = vld [vmem:[%s1645 + $0x40] sm:$0xff]
  %v1651 = vld [vmem:[%s1645 + $0x50] sm:$0xff]
  %v1652 = vld [vmem:[%s1645 + $0x60] sm:$0xff]
  %v1653 = vld [vmem:[%s1645 + $0x70] sm:$0xff]
  %v1654 = vld [vmem:[%s1645 + $0xa0] sm:$0xff]
  %v1655 = vld [vmem:[%s1645 + $0xb0] sm:$0xff]
  %v1656 = vld [vmem:[%s1645 + $0xc0] sm:$0xff]
  %v1657 = vld [vmem:[%s1645 + $0xd0] sm:$0xff]
  %v1658 = vld [vmem:[%s1645 + $0xe0] sm:$0xff]
  %v1659 = vld [vmem:[%s1645 + $0xf0] sm:$0xff]
  %v1660 = vld [vmem:[%s1645 + $0x100] sm:$0xff]
  %v1661 = vld [vmem:[%s1645 + $0x110] sm:$0xff]
  %s1662 = scalar_lea.vmem %s1, 24
  %v1663 = vld [vmem:[%s1662] sm:$0xf]
  %v1665 = vsel %vm228, %v1646, 0
  %v1668 = vsel %vm228, %v1647, 0
  %v1671 = vsel %vm228, %v1648, 0
  %v1674 = vsel %vm228, %v1649, 0
  %v1677 = vsel %vm228, %v1650, 0
  %v1680 = vsel %vm228, %v1651, 0
  %v1683 = vsel %vm228, %v1652, 0
  %v1686 = vsel %vm228, %v1653, 0
  %v1689 = vsel %vm228, %v1654, 0
  %v1692 = vsel %vm228, %v1655, 0
  %v1695 = vsel %vm228, %v1656, 0
  %v1698 = vsel %vm228, %v1657, 0
  %v1701 = vsel %vm228, %v1658, 0
  %v1704 = vsel %vm228, %v1659, 0
  %v1707 = vsel %vm228, %v1660, 0
  %v1710 = vsel %vm228, %v1661, 0
  %v1713 = vsel %vm380, %v1663, 0
  %1715 = vmatprep.subr.mxu0 0.0
  %1716 = vmatpush1.msra.mxu0 0.0
  %1717 = vmatprep.subr.mxu0 0.0
  %1718 = vmatpush1.msra.mxu0 0.0
  %1719 = vmatprep.subr.mxu0 0.0
  %1720 = vmatpush1.msra.mxu0 0.0
  %1721 = vmatprep.subr.mxu0 0.0
  %1722 = vmatpush1.msra.mxu0 0.0
  %1723 = vmatprep.subr.mxu0 0.0
  %1724 = vmatpush1.msra.mxu0 0.0
  %1725 = vmatprep.subr.mxu0 0.0
  %1726 = vmatpush1.msra.mxu0 0.0
  %1727 = vmatprep.subr.mxu0 0.0
  %1728 = vmatpush1.msra.mxu0 0.0
  %1729 = vmatprep.subr.mxu0 0.0
  %1730 = vmatpush1.msra.mxu0 0.0
  %1731 = vmatprep.subr.mxu0 0.0
  %1732 = vmatpush1.msra.mxu0 0.0
  %1733 = vmatprep.subr.mxu0 0.0
  %1734 = vmatpush1.msra.mxu0 0.0
  %1735 = vmatprep.subr.mxu0 0.0
  %1736 = vmatpush1.msra.mxu0 0.0
  %1737 = vmatprep.subr.mxu0 0.0
  %1738 = vmatpush1.msra.mxu0 0.0
  %1739 = vmatprep.subr.mxu0 0.0
  %1740 = vmatpush1.msra.mxu0 0.0
  %1741 = vmatprep.subr.mxu0 0.0
  %1742 = vmatpush1.msra.mxu0 0.0
  %1743 = vmatprep.subr.mxu0 0.0
  %1744 = vmatpush1.msra.mxu0 0.0
  %1745 = vmatprep.subr.mxu0 0.0
  %1746 = vmatpush1.msra.mxu0 %v1713
  %1747 = vmatprep.subr.mxu0 0.0
  %1748 = vmatpush2.msra.mxu0 0.0
  %1749 = vmatprep.subr.mxu0 0.0
  %1750 = vmatpush2.msra.mxu0 0.0
  %1751 = vmatprep.subr.mxu0 0.0
  %1752 = vmatpush2.msra.mxu0 0.0
  %1753 = vmatprep.subr.mxu0 0.0
  %1754 = vmatpush2.msra.mxu0 0.0
  %1755 = vmatprep.subr.mxu0 0.0
  %1756 = vmatpush2.msra.mxu0 0.0
  %1757 = vmatprep.subr.mxu0 0.0
  %1758 = vmatpush2.msra.mxu0 0.0
  %1759 = vmatprep.subr.mxu0 0.0
  %1760 = vmatpush2.msra.mxu0 0.0
  %1761 = vmatprep.subr.mxu0 0.0
  %1762 = vmatpush2.msra.mxu0 0.0
  %1763 = vmatprep.subr.mxu0 0.0
  %1764 = vmatpush2.msra.mxu0 0.0
  %1765 = vmatprep.subr.mxu0 0.0
  %1766 = vmatpush2.msra.mxu0 0.0
  %1767 = vmatprep.subr.mxu0 0.0
  %1768 = vmatpush2.msra.mxu0 0.0
  %1769 = vmatprep.subr.mxu0 0.0
  %1770 = vmatpush2.msra.mxu0 0.0
  %1771 = vmatprep.subr.mxu0 0.0
  %1772 = vmatpush2.msra.mxu0 0.0
  %1773 = vmatprep.subr.mxu0 0.0
  %1774 = vmatpush2.msra.mxu0 0.0
  %1775 = vmatprep.subr.mxu0 0.0
  %1776 = vmatpush2.msra.mxu0 0.0
  %1777 = vmatprep.subr.mxu0 0.0
  %1778 = vmatpush2.msra.mxu0 0.0
  %1779 = vmatprep.mubr.f32.mxu0 0.0
  %1780 = vmatmul.mubr.f32.gmra.mxu0 %v1665
  %v1781 = vpop.f32.mrf.mxu0
  %v1782 = vadd.f32 0.0, %v1781
  %v1783 = vpop.f32.mrf.mxu0
  %1784 = vmatprep.mubr.f32.mxu0 0.0
  %1785 = vmatmul.mubr.f32.gmra.mxu0 %v1668
  %v1786 = vpop.f32.mrf.mxu0
  %v1787 = vadd.f32 0.0, %v1786
  %v1788 = vpop.f32.mrf.mxu0
  %1789 = vmatprep.mubr.f32.mxu0 0.0
  %1790 = vmatmul.mubr.f32.gmra.mxu0 %v1671
  %v1791 = vpop.f32.mrf.mxu0
  %v1792 = vadd.f32 0.0, %v1791
  %v1793 = vpop.f32.mrf.mxu0
  %1794 = vmatprep.mubr.f32.mxu0 0.0
  %1795 = vmatmul.mubr.f32.gmra.mxu0 %v1674
  %v1796 = vpop.f32.mrf.mxu0
  %v1797 = vadd.f32 0.0, %v1796
  %v1798 = vpop.f32.mrf.mxu0
  %1799 = vmatprep.mubr.f32.mxu0 0.0
  %1800 = vmatmul.mubr.f32.gmra.mxu0 %v1677
  %v1801 = vpop.f32.mrf.mxu0
  %v1802 = vadd.f32 0.0, %v1801
  %v1803 = vpop.f32.mrf.mxu0
  %1804 = vmatprep.mubr.f32.mxu0 0.0
  %1805 = vmatmul.mubr.f32.gmra.mxu0 %v1680
  %v1806 = vpop.f32.mrf.mxu0
  %v1807 = vadd.f32 0.0, %v1806
  %v1808 = vpop.f32.mrf.mxu0
  %1809 = vmatprep.mubr.f32.mxu0 0.0
  %1810 = vmatmul.mubr.f32.gmra.mxu0 %v1683
  %v1811 = vpop.f32.mrf.mxu0
  %v1812 = vadd.f32 0.0, %v1811
  %v1813 = vpop.f32.mrf.mxu0
  %1814 = vmatprep.mubr.f32.mxu0 0.0
  %1815 = vmatmul.mubr.f32.gmra.mxu0 %v1686
  %v1816 = vpop.f32.mrf.mxu0
  %v1817 = vadd.f32 0.0, %v1816
  %v1818 = vpop.f32.mrf.mxu0
  %1819 = vmatprep.mubr.f32.mxu0 0.0
  %1820 = vmatmul.mubr.f32.gmra.mxu0 %v1689
  %v1821 = vpop.f32.mrf.mxu0
  %v1822 = vadd.f32 0.0, %v1821
  %v1823 = vpop.f32.mrf.mxu0
  %1824 = vmatprep.mubr.f32.mxu0 0.0
  %1825 = vmatmul.mubr.f32.gmra.mxu0 %v1692
  %v1826 = vpop.f32.mrf.mxu0
  %v1827 = vadd.f32 0.0, %v1826
  %v1828 = vpop.f32.mrf.mxu0
  %1829 = vmatprep.mubr.f32.mxu0 0.0
  %1830 = vmatmul.mubr.f32.gmra.mxu0 %v1695
  %v1831 = vpop.f32.mrf.mxu0
  %v1832 = vadd.f32 0.0, %v1831
  %v1833 = vpop.f32.mrf.mxu0
  %1834 = vmatprep.mubr.f32.mxu0 0.0
  %1835 = vmatmul.mubr.f32.gmra.mxu0 %v1698
  %v1836 = vpop.f32.mrf.mxu0
  %v1837 = vadd.f32 0.0, %v1836
  %v1838 = vpop.f32.mrf.mxu0
  %1839 = vmatprep.mubr.f32.mxu0 0.0
  %1840 = vmatmul.mubr.f32.gmra.mxu0 %v1701
  %v1841 = vpop.f32.mrf.mxu0
  %v1842 = vadd.f32 0.0, %v1841
  %v1843 = vpop.f32.mrf.mxu0
  %1844 = vmatprep.mubr.f32.mxu0 0.0
  %1845 = vmatmul.mubr.f32.gmra.mxu0 %v1704
  %v1846 = vpop.f32.mrf.mxu0
  %v1847 = vadd.f32 0.0, %v1846
  %v1848 = vpop.f32.mrf.mxu0
  %1849 = vmatprep.mubr.f32.mxu0 0.0
  %1850 = vmatmul.mubr.f32.gmra.mxu0 %v1707
  %v1851 = vpop.f32.mrf.mxu0
  %v1852 = vadd.f32 0.0, %v1851
  %v1853 = vpop.f32.mrf.mxu0
  %1854 = vmatprep.mubr.f32.mxu0 0.0
  %1855 = vmatmul.mubr.f32.gmra.mxu0 %v1710
  %v1856 = vpop.f32.mrf.mxu0
  %v1857 = vadd.f32 0.0, %v1856
  %v1858 = vpop.f32.mrf.mxu0
  %1859 = vdwg.mxu0
  %v1860 = vadd.f32 %v1629, %v1782
  %v1861 = vadd.f32 %v1630, %v1787
  %v1862 = vadd.f32 %v1631, %v1792
  %v1863 = vadd.f32 %v1632, %v1797
  %v1864 = vadd.f32 %v1633, %v1802
  %v1865 = vadd.f32 %v1634, %v1807
  %v1866 = vadd.f32 %v1635, %v1812
  %v1867 = vadd.f32 %v1636, %v1817
  %v1868 = vadd.f32 %v1637, %v1822
  %v1869 = vadd.f32 %v1638, %v1827
  %v1870 = vadd.f32 %v1639, %v1832
  %v1871 = vadd.f32 %v1640, %v1837
  %v1872 = vadd.f32 %v1641, %v1842
  %v1873 = vadd.f32 %v1642, %v1847
  %v1874 = vadd.f32 %v1643, %v1852
  %v1875 = vadd.f32 %v1644, %v1857
  %v1876 = vld [vmem:[%s1645 + $0x1] sm:$0xff]
  %v1877 = vld [vmem:[%s1645 + $0x11] sm:$0xff]
  %v1878 = vld [vmem:[%s1645 + $0x21] sm:$0xff]
  %v1879 = vld [vmem:[%s1645 + $0x31] sm:$0xff]
  %v1880 = vld [vmem:[%s1645 + $0x41] sm:$0xff]
  %v1881 = vld [vmem:[%s1645 + $0x51] sm:$0xff]
  %v1882 = vld [vmem:[%s1645 + $0x61] sm:$0xff]
  %v1883 = vld [vmem:[%s1645 + $0x71] sm:$0xff]
  %v1884 = vld [vmem:[%s1645 + $0xa1] sm:$0xff]
  %v1885 = vld [vmem:[%s1645 + $0xb1] sm:$0xff]
  %v1886 = vld [vmem:[%s1645 + $0xc1] sm:$0xff]
  %v1887 = vld [vmem:[%s1645 + $0xd1] sm:$0xff]
  %v1888 = vld [vmem:[%s1645 + $0xe1] sm:$0xff]
  %v1889 = vld [vmem:[%s1645 + $0xf1] sm:$0xff]
  %v1890 = vld [vmem:[%s1645 + $0x101] sm:$0xff]
  %v1891 = vld [vmem:[%s1645 + $0x111] sm:$0xff]
  %s1892 = scalar_lea.vmem %s1, 28
  %v1893 = vld [vmem:[%s1892] sm:$0xf]
  %v1895 = vsel %vm228, %v1876, 0
  %v1898 = vsel %vm228, %v1877, 0
  %v1901 = vsel %vm228, %v1878, 0
  %v1904 = vsel %vm228, %v1879, 0
  %v1907 = vsel %vm228, %v1880, 0
  %v1910 = vsel %vm228, %v1881, 0
  %v1913 = vsel %vm228, %v1882, 0
  %v1916 = vsel %vm228, %v1883, 0
  %v1919 = vsel %vm228, %v1884, 0
  %v1922 = vsel %vm228, %v1885, 0
  %v1925 = vsel %vm228, %v1886, 0
  %v1928 = vsel %vm228, %v1887, 0
  %v1931 = vsel %vm228, %v1888, 0
  %v1934 = vsel %vm228, %v1889, 0
  %v1937 = vsel %vm228, %v1890, 0
  %v1940 = vsel %vm228, %v1891, 0
  %v1943 = vsel %vm380, %v1893, 0
  %1945 = vmatprep.subr.mxu0 0.0
  %1946 = vmatpush1.msra.mxu0 0.0
  %1947 = vmatprep.subr.mxu0 0.0
  %1948 = vmatpush1.msra.mxu0 0.0
  %1949 = vmatprep.subr.mxu0 0.0
  %1950 = vmatpush1.msra.mxu0 0.0
  %1951 = vmatprep.subr.mxu0 0.0
  %1952 = vmatpush1.msra.mxu0 0.0
  %1953 = vmatprep.subr.mxu0 0.0
  %1954 = vmatpush1.msra.mxu0 0.0
  %1955 = vmatprep.subr.mxu0 0.0
  %1956 = vmatpush1.msra.mxu0 0.0
  %1957 = vmatprep.subr.mxu0 0.0
  %1958 = vmatpush1.msra.mxu0 0.0
  %1959 = vmatprep.subr.mxu0 0.0
  %1960 = vmatpush1.msra.mxu0 0.0
  %1961 = vmatprep.subr.mxu0 0.0
  %1962 = vmatpush1.msra.mxu0 0.0
  %1963 = vmatprep.subr.mxu0 0.0
  %1964 = vmatpush1.msra.mxu0 0.0
  %1965 = vmatprep.subr.mxu0 0.0
  %1966 = vmatpush1.msra.mxu0 0.0
  %1967 = vmatprep.subr.mxu0 0.0
  %1968 = vmatpush1.msra.mxu0 0.0
  %1969 = vmatprep.subr.mxu0 0.0
  %1970 = vmatpush1.msra.mxu0 0.0
  %1971 = vmatprep.subr.mxu0 0.0
  %1972 = vmatpush1.msra.mxu0 0.0
  %1973 = vmatprep.subr.mxu0 0.0
  %1974 = vmatpush1.msra.mxu0 0.0
  %1975 = vmatprep.subr.mxu0 0.0
  %1976 = vmatpush1.msra.mxu0 %v1943
  %1977 = vmatprep.subr.mxu0 0.0
  %1978 = vmatpush2.msra.mxu0 0.0
  %1979 = vmatprep.subr.mxu0 0.0
  %1980 = vmatpush2.msra.mxu0 0.0
  %1981 = vmatprep.subr.mxu0 0.0
  %1982 = vmatpush2.msra.mxu0 0.0
  %1983 = vmatprep.subr.mxu0 0.0
  %1984 = vmatpush2.msra.mxu0 0.0
  %1985 = vmatprep.subr.mxu0 0.0
  %1986 = vmatpush2.msra.mxu0 0.0
  %1987 = vmatprep.subr.mxu0 0.0
  %1988 = vmatpush2.msra.mxu0 0.0
  %1989 = vmatprep.subr.mxu0 0.0
  %1990 = vmatpush2.msra.mxu0 0.0
  %1991 = vmatprep.subr.mxu0 0.0
  %1992 = vmatpush2.msra.mxu0 0.0
  %1993 = vmatprep.subr.mxu0 0.0
  %1994 = vmatpush2.msra.mxu0 0.0
  %1995 = vmatprep.subr.mxu0 0.0
  %1996 = vmatpush2.msra.mxu0 0.0
  %1997 = vmatprep.subr.mxu0 0.0
  %1998 = vmatpush2.msra.mxu0 0.0
  %1999 = vmatprep.subr.mxu0 0.0
  %2000 = vmatpush2.msra.mxu0 0.0
  %2001 = vmatprep.subr.mxu0 0.0
  %2002 = vmatpush2.msra.mxu0 0.0
  %2003 = vmatprep.subr.mxu0 0.0
  %2004 = vmatpush2.msra.mxu0 0.0
  %2005 = vmatprep.subr.mxu0 0.0
  %2006 = vmatpush2.msra.mxu0 0.0
  %2007 = vmatprep.subr.mxu0 0.0
  %2008 = vmatpush2.msra.mxu0 0.0
  %2009 = vmatprep.mubr.f32.mxu0 0.0
  %2010 = vmatmul.mubr.f32.gmra.mxu0 %v1895
  %v2011 = vpop.f32.mrf.mxu0
  %v2012 = vadd.f32 0.0, %v2011
  %v2013 = vpop.f32.mrf.mxu0
  %2014 = vmatprep.mubr.f32.mxu0 0.0
  %2015 = vmatmul.mubr.f32.gmra.mxu0 %v1898
  %v2016 = vpop.f32.mrf.mxu0
  %v2017 = vadd.f32 0.0, %v2016
  %v2018 = vpop.f32.mrf.mxu0
  %2019 = vmatprep.mubr.f32.mxu0 0.0
  %2020 = vmatmul.mubr.f32.gmra.mxu0 %v1901
  %v2021 = vpop.f32.mrf.mxu0
  %v2022 = vadd.f32 0.0, %v2021
  %v2023 = vpop.f32.mrf.mxu0
  %2024 = vmatprep.mubr.f32.mxu0 0.0
  %2025 = vmatmul.mubr.f32.gmra.mxu0 %v1904
  %v2026 = vpop.f32.mrf.mxu0
  %v2027 = vadd.f32 0.0, %v2026
  %v2028 = vpop.f32.mrf.mxu0
  %2029 = vmatprep.mubr.f32.mxu0 0.0
  %2030 = vmatmul.mubr.f32.gmra.mxu0 %v1907
  %v2031 = vpop.f32.mrf.mxu0
  %v2032 = vadd.f32 0.0, %v2031
  %v2033 = vpop.f32.mrf.mxu0
  %2034 = vmatprep.mubr.f32.mxu0 0.0
  %2035 = vmatmul.mubr.f32.gmra.mxu0 %v1910
  %v2036 = vpop.f32.mrf.mxu0
  %v2037 = vadd.f32 0.0, %v2036
  %v2038 = vpop.f32.mrf.mxu0
  %2039 = vmatprep.mubr.f32.mxu0 0.0
  %2040 = vmatmul.mubr.f32.gmra.mxu0 %v1913
  %v2041 = vpop.f32.mrf.mxu0
  %v2042 = vadd.f32 0.0, %v2041
  %v2043 = vpop.f32.mrf.mxu0
  %2044 = vmatprep.mubr.f32.mxu0 0.0
  %2045 = vmatmul.mubr.f32.gmra.mxu0 %v1916
  %v2046 = vpop.f32.mrf.mxu0
  %v2047 = vadd.f32 0.0, %v2046
  %v2048 = vpop.f32.mrf.mxu0
  %2049 = vmatprep.mubr.f32.mxu0 0.0
  %2050 = vmatmul.mubr.f32.gmra.mxu0 %v1919
  %v2051 = vpop.f32.mrf.mxu0
  %v2052 = vadd.f32 0.0, %v2051
  %v2053 = vpop.f32.mrf.mxu0
  %2054 = vmatprep.mubr.f32.mxu0 0.0
  %2055 = vmatmul.mubr.f32.gmra.mxu0 %v1922
  %v2056 = vpop.f32.mrf.mxu0
  %v2057 = vadd.f32 0.0, %v2056
  %v2058 = vpop.f32.mrf.mxu0
  %2059 = vmatprep.mubr.f32.mxu0 0.0
  %2060 = vmatmul.mubr.f32.gmra.mxu0 %v1925
  %v2061 = vpop.f32.mrf.mxu0
  %v2062 = vadd.f32 0.0, %v2061
  %v2063 = vpop.f32.mrf.mxu0
  %2064 = vmatprep.mubr.f32.mxu0 0.0
  %2065 = vmatmul.mubr.f32.gmra.mxu0 %v1928
  %v2066 = vpop.f32.mrf.mxu0
  %v2067 = vadd.f32 0.0, %v2066
  %v2068 = vpop.f32.mrf.mxu0
  %2069 = vmatprep.mubr.f32.mxu0 0.0
  %2070 = vmatmul.mubr.f32.gmra.mxu0 %v1931
  %v2071 = vpop.f32.mrf.mxu0
  %v2072 = vadd.f32 0.0, %v2071
  %v2073 = vpop.f32.mrf.mxu0
  %2074 = vmatprep.mubr.f32.mxu0 0.0
  %2075 = vmatmul.mubr.f32.gmra.mxu0 %v1934
  %v2076 = vpop.f32.mrf.mxu0
  %v2077 = vadd.f32 0.0, %v2076
  %v2078 = vpop.f32.mrf.mxu0
  %2079 = vmatprep.mubr.f32.mxu0 0.0
  %2080 = vmatmul.mubr.f32.gmra.mxu0 %v1937
  %v2081 = vpop.f32.mrf.mxu0
  %v2082 = vadd.f32 0.0, %v2081
  %v2083 = vpop.f32.mrf.mxu0
  %2084 = vmatprep.mubr.f32.mxu0 0.0
  %2085 = vmatmul.mubr.f32.gmra.mxu0 %v1940
  %v2086 = vpop.f32.mrf.mxu0
  %v2087 = vadd.f32 0.0, %v2086
  %v2088 = vpop.f32.mrf.mxu0
  %2089 = vdwg.mxu0
  %v2090 = vadd.f32 %v1860, %v2012
  %v2091 = vadd.f32 %v1861, %v2017
  %v2092 = vadd.f32 %v1862, %v2022
  %v2093 = vadd.f32 %v1863, %v2027
  %v2094 = vadd.f32 %v1864, %v2032
  %v2095 = vadd.f32 %v1865, %v2037
  %v2096 = vadd.f32 %v1866, %v2042
  %v2097 = vadd.f32 %v1867, %v2047
  %v2098 = vadd.f32 %v1868, %v2052
  %v2099 = vadd.f32 %v1869, %v2057
  %v2100 = vadd.f32 %v1870, %v2062
  %v2101 = vadd.f32 %v1871, %v2067
  %v2102 = vadd.f32 %v1872, %v2072
  %v2103 = vadd.f32 %v1873, %v2077
  %v2104 = vadd.f32 %v1874, %v2082
  %v2105 = vadd.f32 %v1875, %v2087
  %v2106 = vld [vmem:[%s1645 + $0x2] sm:$0xff]
  %v2107 = vld [vmem:[%s1645 + $0x12] sm:$0xff]
  %v2108 = vld [vmem:[%s1645 + $0x22] sm:$0xff]
  %v2109 = vld [vmem:[%s1645 + $0x32] sm:$0xff]
  %v2110 = vld [vmem:[%s1645 + $0x42] sm:$0xff]
  %v2111 = vld [vmem:[%s1645 + $0x52] sm:$0xff]
  %v2112 = vld [vmem:[%s1645 + $0x62] sm:$0xff]
  %v2113 = vld [vmem:[%s1645 + $0x72] sm:$0xff]
  %v2114 = vld [vmem:[%s1645 + $0xa2] sm:$0xff]
  %v2115 = vld [vmem:[%s1645 + $0xb2] sm:$0xff]
  %v2116 = vld [vmem:[%s1645 + $0xc2] sm:$0xff]
  %v2117 = vld [vmem:[%s1645 + $0xd2] sm:$0xff]
  %v2118 = vld [vmem:[%s1645 + $0xe2] sm:$0xff]
  %v2119 = vld [vmem:[%s1645 + $0xf2] sm:$0xff]
  %v2120 = vld [vmem:[%s1645 + $0x102] sm:$0xff]
  %v2121 = vld [vmem:[%s1645 + $0x112] sm:$0xff]
  %s2122 = scalar_lea.vmem %s1, 32
  %v2123 = vld [vmem:[%s2122] sm:$0xf]
  %v2125 = vsel %vm228, %v2106, 0
  %v2128 = vsel %vm228, %v2107, 0
  %v2131 = vsel %vm228, %v2108, 0
  %v2134 = vsel %vm228, %v2109, 0
  %v2137 = vsel %vm228, %v2110, 0
  %v2140 = vsel %vm228, %v2111, 0
  %v2143 = vsel %vm228, %v2112, 0
  %v2146 = vsel %vm228, %v2113, 0
  %v2149 = vsel %vm228, %v2114, 0
  %v2152 = vsel %vm228, %v2115, 0
  %v2155 = vsel %vm228, %v2116, 0
  %v2158 = vsel %vm228, %v2117, 0
  %v2161 = vsel %vm228, %v2118, 0
  %v2164 = vsel %vm228, %v2119, 0
  %v2167 = vsel %vm228, %v2120, 0
  %v2170 = vsel %vm228, %v2121, 0
  %v2173 = vsel %vm380, %v2123, 0
  %2175 = vmatprep.subr.mxu0 0.0
  %2176 = vmatpush1.msra.mxu0 0.0
  %2177 = vmatprep.subr.mxu0 0.0
  %2178 = vmatpush1.msra.mxu0 0.0
  %2179 = vmatprep.subr.mxu0 0.0
  %2180 = vmatpush1.msra.mxu0 0.0
  %2181 = vmatprep.subr.mxu0 0.0
  %2182 = vmatpush1.msra.mxu0 0.0
  %2183 = vmatprep.subr.mxu0 0.0
  %2184 = vmatpush1.msra.mxu0 0.0
  %2185 = vmatprep.subr.mxu0 0.0
  %2186 = vmatpush1.msra.mxu0 0.0
  %2187 = vmatprep.subr.mxu0 0.0
  %2188 = vmatpush1.msra.mxu0 0.0
  %2189 = vmatprep.subr.mxu0 0.0
  %2190 = vmatpush1.msra.mxu0 0.0
  %2191 = vmatprep.subr.mxu0 0.0
  %2192 = vmatpush1.msra.mxu0 0.0
  %2193 = vmatprep.subr.mxu0 0.0
  %2194 = vmatpush1.msra.mxu0 0.0
  %2195 = vmatprep.subr.mxu0 0.0
  %2196 = vmatpush1.msra.mxu0 0.0
  %2197 = vmatprep.subr.mxu0 0.0
  %2198 = vmatpush1.msra.mxu0 0.0
  %2199 = vmatprep.subr.mxu0 0.0
  %2200 = vmatpush1.msra.mxu0 0.0
  %2201 = vmatprep.subr.mxu0 0.0
  %2202 = vmatpush1.msra.mxu0 0.0
  %2203 = vmatprep.subr.mxu0 0.0
  %2204 = vmatpush1.msra.mxu0 0.0
  %2205 = vmatprep.subr.mxu0 0.0
  %2206 = vmatpush1.msra.mxu0 %v2173
  %2207 = vmatprep.subr.mxu0 0.0
  %2208 = vmatpush2.msra.mxu0 0.0
  %2209 = vmatprep.subr.mxu0 0.0
  %2210 = vmatpush2.msra.mxu0 0.0
  %2211 = vmatprep.subr.mxu0 0.0
  %2212 = vmatpush2.msra.mxu0 0.0
  %2213 = vmatprep.subr.mxu0 0.0
  %2214 = vmatpush2.msra.mxu0 0.0
  %2215 = vmatprep.subr.mxu0 0.0
  %2216 = vmatpush2.msra.mxu0 0.0
  %2217 = vmatprep.subr.mxu0 0.0
  %2218 = vmatpush2.msra.mxu0 0.0
  %2219 = vmatprep.subr.mxu0 0.0
  %2220 = vmatpush2.msra.mxu0 0.0
  %2221 = vmatprep.subr.mxu0 0.0
  %2222 = vmatpush2.msra.mxu0 0.0
  %2223 = vmatprep.subr.mxu0 0.0
  %2224 = vmatpush2.msra.mxu0 0.0
  %2225 = vmatprep.subr.mxu0 0.0
  %2226 = vmatpush2.msra.mxu0 0.0
  %2227 = vmatprep.subr.mxu0 0.0
  %2228 = vmatpush2.msra.mxu0 0.0
  %2229 = vmatprep.subr.mxu0 0.0
  %2230 = vmatpush2.msra.mxu0 0.0
  %2231 = vmatprep.subr.mxu0 0.0
  %2232 = vmatpush2.msra.mxu0 0.0
  %2233 = vmatprep.subr.mxu0 0.0
  %2234 = vmatpush2.msra.mxu0 0.0
  %2235 = vmatprep.subr.mxu0 0.0
  %2236 = vmatpush2.msra.mxu0 0.0
  %2237 = vmatprep.subr.mxu0 0.0
  %2238 = vmatpush2.msra.mxu0 0.0
  %2239 = vmatprep.mubr.f32.mxu0 0.0
  %2240 = vmatmul.mubr.f32.gmra.mxu0 %v2125
  %v2241 = vpop.f32.mrf.mxu0
  %v2242 = vadd.f32 0.0, %v2241
  %v2243 = vpop.f32.mrf.mxu0
  %2244 = vmatprep.mubr.f32.mxu0 0.0
  %2245 = vmatmul.mubr.f32.gmra.mxu0 %v2128
  %v2246 = vpop.f32.mrf.mxu0
  %v2247 = vadd.f32 0.0, %v2246
  %v2248 = vpop.f32.mrf.mxu0
  %2249 = vmatprep.mubr.f32.mxu0 0.0
  %2250 = vmatmul.mubr.f32.gmra.mxu0 %v2131
  %v2251 = vpop.f32.mrf.mxu0
  %v2252 = vadd.f32 0.0, %v2251
  %v2253 = vpop.f32.mrf.mxu0
  %2254 = vmatprep.mubr.f32.mxu0 0.0
  %2255 = vmatmul.mubr.f32.gmra.mxu0 %v2134
  %v2256 = vpop.f32.mrf.mxu0
  %v2257 = vadd.f32 0.0, %v2256
  %v2258 = vpop.f32.mrf.mxu0
  %2259 = vmatprep.mubr.f32.mxu0 0.0
  %2260 = vmatmul.mubr.f32.gmra.mxu0 %v2137
  %v2261 = vpop.f32.mrf.mxu0
  %v2262 = vadd.f32 0.0, %v2261
  %v2263 = vpop.f32.mrf.mxu0
  %2264 = vmatprep.mubr.f32.mxu0 0.0
  %2265 = vmatmul.mubr.f32.gmra.mxu0 %v2140
  %v2266 = vpop.f32.mrf.mxu0
  %v2267 = vadd.f32 0.0, %v2266
  %v2268 = vpop.f32.mrf.mxu0
  %2269 = vmatprep.mubr.f32.mxu0 0.0
  %2270 = vmatmul.mubr.f32.gmra.mxu0 %v2143
  %v2271 = vpop.f32.mrf.mxu0
  %v2272 = vadd.f32 0.0, %v2271
  %v2273 = vpop.f32.mrf.mxu0
  %2274 = vmatprep.mubr.f32.mxu0 0.0
  %2275 = vmatmul.mubr.f32.gmra.mxu0 %v2146
  %v2276 = vpop.f32.mrf.mxu0
  %v2277 = vadd.f32 0.0, %v2276
  %v2278 = vpop.f32.mrf.mxu0
  %2279 = vmatprep.mubr.f32.mxu0 0.0
  %2280 = vmatmul.mubr.f32.gmra.mxu0 %v2149
  %v2281 = vpop.f32.mrf.mxu0
  %v2282 = vadd.f32 0.0, %v2281
  %v2283 = vpop.f32.mrf.mxu0
  %2284 = vmatprep.mubr.f32.mxu0 0.0
  %2285 = vmatmul.mubr.f32.gmra.mxu0 %v2152
  %v2286 = vpop.f32.mrf.mxu0
  %v2287 = vadd.f32 0.0, %v2286
  %v2288 = vpop.f32.mrf.mxu0
  %2289 = vmatprep.mubr.f32.mxu0 0.0
  %2290 = vmatmul.mubr.f32.gmra.mxu0 %v2155
  %v2291 = vpop.f32.mrf.mxu0
  %v2292 = vadd.f32 0.0, %v2291
  %v2293 = vpop.f32.mrf.mxu0
  %2294 = vmatprep.mubr.f32.mxu0 0.0
  %2295 = vmatmul.mubr.f32.gmra.mxu0 %v2158
  %v2296 = vpop.f32.mrf.mxu0
  %v2297 = vadd.f32 0.0, %v2296
  %v2298 = vpop.f32.mrf.mxu0
  %2299 = vmatprep.mubr.f32.mxu0 0.0
  %2300 = vmatmul.mubr.f32.gmra.mxu0 %v2161
  %v2301 = vpop.f32.mrf.mxu0
  %v2302 = vadd.f32 0.0, %v2301
  %v2303 = vpop.f32.mrf.mxu0
  %2304 = vmatprep.mubr.f32.mxu0 0.0
  %2305 = vmatmul.mubr.f32.gmra.mxu0 %v2164
  %v2306 = vpop.f32.mrf.mxu0
  %v2307 = vadd.f32 0.0, %v2306
  %v2308 = vpop.f32.mrf.mxu0
  %2309 = vmatprep.mubr.f32.mxu0 0.0
  %2310 = vmatmul.mubr.f32.gmra.mxu0 %v2167
  %v2311 = vpop.f32.mrf.mxu0
  %v2312 = vadd.f32 0.0, %v2311
  %v2313 = vpop.f32.mrf.mxu0
  %2314 = vmatprep.mubr.f32.mxu0 0.0
  %2315 = vmatmul.mubr.f32.gmra.mxu0 %v2170
  %v2316 = vpop.f32.mrf.mxu0
  %v2317 = vadd.f32 0.0, %v2316
  %v2318 = vpop.f32.mrf.mxu0
  %2319 = vdwg.mxu0
  %v2320 = vadd.f32 %v2090, %v2242
  %v2321 = vadd.f32 %v2091, %v2247
  %v2322 = vadd.f32 %v2092, %v2252
  %v2323 = vadd.f32 %v2093, %v2257
  %v2324 = vadd.f32 %v2094, %v2262
  %v2325 = vadd.f32 %v2095, %v2267
  %v2326 = vadd.f32 %v2096, %v2272
  %v2327 = vadd.f32 %v2097, %v2277
  %v2328 = vadd.f32 %v2098, %v2282
  %v2329 = vadd.f32 %v2099, %v2287
  %v2330 = vadd.f32 %v2100, %v2292
  %v2331 = vadd.f32 %v2101, %v2297
  %v2332 = vadd.f32 %v2102, %v2302
  %v2333 = vadd.f32 %v2103, %v2307
  %v2334 = vadd.f32 %v2104, %v2312
  %v2335 = vadd.f32 %v2105, %v2317
  %v2336 = vld [vmem:[%s2] sm:$0x1]
  %v2338 = vlaneseq
  %v2339 = vshrl.u32 %v2338, 7
  %v2340 = vsub.s32 0, %v2339
  %v2341 = vrot.slane %v2336, %v2340
  %v2343 = vadd.f32 %v2320, %v2341
  %v2344 = vadd.f32 %v2321, %v2341
  %v2345 = vadd.f32 %v2322, %v2341
  %v2346 = vadd.f32 %v2323, %v2341
  %v2347 = vadd.f32 %v2324, %v2341
  %v2348 = vadd.f32 %v2325, %v2341
  %v2349 = vadd.f32 %v2326, %v2341
  %v2350 = vadd.f32 %v2327, %v2341
  %v2351 = vadd.f32 %v2328, %v2341
  %v2352 = vadd.f32 %v2329, %v2341
  %v2353 = vadd.f32 %v2330, %v2341
  %v2354 = vadd.f32 %v2331, %v2341
  %v2355 = vadd.f32 %v2332, %v2341
  %v2356 = vadd.f32 %v2333, %v2341
  %v2357 = vadd.f32 %v2334, %v2341
  %v2358 = vadd.f32 %v2335, %v2341
  %v2359 = vmax.f32 %v2343, 0.0
  %v2360 = vmax.f32 %v2344, 0.0
  %v2361 = vmax.f32 %v2345, 0.0
  %v2362 = vmax.f32 %v2346, 0.0
  %v2363 = vmax.f32 %v2347, 0.0
  %v2364 = vmax.f32 %v2348, 0.0
  %v2365 = vmax.f32 %v2349, 0.0
  %v2366 = vmax.f32 %v2350, 0.0
  %v2367 = vmax.f32 %v2351, 0.0
  %v2368 = vmax.f32 %v2352, 0.0
  %v2369 = vmax.f32 %v2353, 0.0
  %v2370 = vmax.f32 %v2354, 0.0
  %v2371 = vmax.f32 %v2355, 0.0
  %v2372 = vmax.f32 %v2356, 0.0
  %v2373 = vmax.f32 %v2357, 0.0
  %v2374 = vmax.f32 %v2358, 0.0
  %2375 = vst [vmem:[#allocation3] sm:$0xff] 0.0
  %2376 = vst [vmem:[#allocation3 + $0x8] sm:$0x3] 0.0
  %2377 = vst [vmem:[#allocation3 + $0xa0] sm:$0xff] 0.0
  %2378 = vst [vmem:[#allocation3 + $0xa8] sm:$0x3] 0.0
  %s2379 = scalar_lea.vmem [#allocation3], 144
  %2380 = vst [vmem:[%s2379] sm:$0xff] 0.0
  %2381 = vst [vmem:[%s2379 + $0x8] sm:$0x3] 0.0
  %2382 = vst [vmem:[%s2379 + $0xa0] sm:$0xff] 0.0
  %2383 = vst [vmem:[%s2379 + $0xa8] sm:$0x3] 0.0
  %2384 = vst [vmem:[#allocation3] sm:$0x1] 0.0
  %2385 = vst [vmem:[#allocation3 + $0x10] sm:$0x1] 0.0
  %2386 = vst [vmem:[#allocation3 + $0x20] sm:$0x1] 0.0
  %2387 = vst [vmem:[#allocation3 + $0x30] sm:$0x1] 0.0
  %2388 = vst [vmem:[#allocation3 + $0x40] sm:$0x1] 0.0
  %2389 = vst [vmem:[#allocation3 + $0x50] sm:$0x1] 0.0
  %2390 = vst [vmem:[#allocation3 + $0x60] sm:$0x1] 0.0
  %2391 = vst [vmem:[#allocation3 + $0x70] sm:$0x1] 0.0
  %2392 = vst [vmem:[#allocation3 + $0x80] sm:$0x1] 0.0
  %2393 = vst [vmem:[#allocation3 + $0x90] sm:$0x1] 0.0
  %2394 = vst [vmem:[#allocation3 + $0xa0] sm:$0x1] 0.0
  %2395 = vst [vmem:[#allocation3 + $0xb0] sm:$0x1] 0.0
  %2396 = vst [vmem:[#allocation3 + $0xc0] sm:$0x1] 0.0
  %2397 = vst [vmem:[#allocation3 + $0xd0] sm:$0x1] 0.0
  %2398 = vst [vmem:[#allocation3 + $0xe0] sm:$0x1] 0.0
  %2399 = vst [vmem:[#allocation3 + $0xf0] sm:$0x1] 0.0
  %2400 = vst [vmem:[#allocation3 + $0x100] sm:$0x1] 0.0
  %2401 = vst [vmem:[#allocation3 + $0x110] sm:$0x1] 0.0
  %2402 = vst [vmem:[#allocation3 + $0x120] sm:$0x1] 0.0
  %2403 = vst [vmem:[#allocation3 + $0x130] sm:$0x1] 0.0
  %2404 = vst [vmem:[#allocation3 + $0x9] sm:$0x1] 0.0
  %2405 = vst [vmem:[#allocation3 + $0x19] sm:$0x1] 0.0
  %2406 = vst [vmem:[#allocation3 + $0x29] sm:$0x1] 0.0
  %2407 = vst [vmem:[#allocation3 + $0x39] sm:$0x1] 0.0
  %2408 = vst [vmem:[#allocation3 + $0x49] sm:$0x1] 0.0
  %2409 = vst [vmem:[#allocation3 + $0x59] sm:$0x1] 0.0
  %2410 = vst [vmem:[#allocation3 + $0x69] sm:$0x1] 0.0
  %2411 = vst [vmem:[#allocation3 + $0x79] sm:$0x1] 0.0
  %2412 = vst [vmem:[#allocation3 + $0x89] sm:$0x1] 0.0
  %2413 = vst [vmem:[#allocation3 + $0x99] sm:$0x1] 0.0
  %2414 = vst [vmem:[#allocation3 + $0xa9] sm:$0x1] 0.0
  %2415 = vst [vmem:[#allocation3 + $0xb9] sm:$0x1] 0.0
  %2416 = vst [vmem:[#allocation3 + $0xc9] sm:$0x1] 0.0
  %2417 = vst [vmem:[#allocation3 + $0xd9] sm:$0x1] 0.0
  %2418 = vst [vmem:[#allocation3 + $0xe9] sm:$0x1] 0.0
  %2419 = vst [vmem:[#allocation3 + $0xf9] sm:$0x1] 0.0
  %2420 = vst [vmem:[#allocation3 + $0x109] sm:$0x1] 0.0
  %2421 = vst [vmem:[#allocation3 + $0x119] sm:$0x1] 0.0
  %2422 = vst [vmem:[#allocation3 + $0x129] sm:$0x1] 0.0
  %2423 = vst [vmem:[#allocation3 + $0x139] sm:$0x1] 0.0
  %s2424 = scalar_lea.vmem [#allocation3], 16
  %2425 = vst [vmem:[%s2424 + $0x1] sm:$0xff] %v2359
  %2426 = vst [vmem:[%s2424 + $0x11] sm:$0xff] %v2360
  %2427 = vst [vmem:[%s2424 + $0x21] sm:$0xff] %v2361
  %2428 = vst [vmem:[%s2424 + $0x31] sm:$0xff] %v2362
  %2429 = vst [vmem:[%s2424 + $0x41] sm:$0xff] %v2363
  %2430 = vst [vmem:[%s2424 + $0x51] sm:$0xff] %v2364
  %2431 = vst [vmem:[%s2424 + $0x61] sm:$0xff] %v2365
  %2432 = vst [vmem:[%s2424 + $0x71] sm:$0xff] %v2366
  %2433 = vst [vmem:[%s2424 + $0xa1] sm:$0xff] %v2367
  %2434 = vst [vmem:[%s2424 + $0xb1] sm:$0xff] %v2368
  %2435 = vst [vmem:[%s2424 + $0xc1] sm:$0xff] %v2369
  %2436 = vst [vmem:[%s2424 + $0xd1] sm:$0xff] %v2370
  %2437 = vst [vmem:[%s2424 + $0xe1] sm:$0xff] %v2371
  %2438 = vst [vmem:[%s2424 + $0xf1] sm:$0xff] %v2372
  %2439 = vst [vmem:[%s2424 + $0x101] sm:$0xff] %v2373
  %2440 = vst [vmem:[%s2424 + $0x111] sm:$0xff] %v2374
  %v2441 = vld [vmem:[#allocation3] sm:$0xff]
  %v2442 = vld [vmem:[#allocation3 + $0x10] sm:$0xff]
  %v2443 = vld [vmem:[#allocation3 + $0x20] sm:$0xff]
  %v2444 = vld [vmem:[#allocation3 + $0x30] sm:$0xff]
  %v2445 = vld [vmem:[#allocation3 + $0x40] sm:$0xff]
  %v2446 = vld [vmem:[#allocation3 + $0x50] sm:$0xff]
  %v2447 = vld [vmem:[#allocation3 + $0x60] sm:$0xff]
  %v2448 = vld [vmem:[#allocation3 + $0x70] sm:$0xff]
  %v2449 = vld [vmem:[#allocation3 + $0xa0] sm:$0xff]
  %v2450 = vld [vmem:[#allocation3 + $0xb0] sm:$0xff]
  %v2451 = vld [vmem:[#allocation3 + $0xc0] sm:$0xff]
  %v2452 = vld [vmem:[#allocation3 + $0xd0] sm:$0xff]
  %v2453 = vld [vmem:[#allocation3 + $0xe0] sm:$0xff]
  %v2454 = vld [vmem:[#allocation3 + $0xf0] sm:$0xff]
  %v2455 = vld [vmem:[#allocation3 + $0x100] sm:$0xff]
  %v2456 = vld [vmem:[#allocation3 + $0x110] sm:$0xff]
  %v2457 = vld [vmem:[%s3] sm:$0xff]
  %v2458 = vld [vmem:[%s3 + $0x8] sm:$0xff]
  %v2459 = vld [vmem:[%s3 + $0x10] sm:$0xff]
  %v2460 = vld [vmem:[%s3 + $0x18] sm:$0xff]
  %v2461 = vld [vmem:[%s3 + $0x20] sm:$0xff]
  %v2462 = vld [vmem:[%s3 + $0x28] sm:$0xff]
  %v2463 = vld [vmem:[%s3 + $0x30] sm:$0xff]
  %v2464 = vld [vmem:[%s3 + $0x38] sm:$0xff]
  %v2465 = vld [vmem:[%s3 + $0x40] sm:$0xff]
  %v2466 = vld [vmem:[%s3 + $0x48] sm:$0xff]
  %v2467 = vld [vmem:[%s3 + $0x50] sm:$0xff]
  %v2468 = vld [vmem:[%s3 + $0x58] sm:$0xff]
  %v2469 = vld [vmem:[%s3 + $0x60] sm:$0xff]
  %v2470 = vld [vmem:[%s3 + $0x68] sm:$0xff]
  %v2471 = vld [vmem:[%s3 + $0x70] sm:$0xff]
  %v2472 = vld [vmem:[%s3 + $0x78] sm:$0xff]
  %v2473 = vld [vmem:[#allocation3 + $0x1] sm:$0xff]
  %v2474 = vld [vmem:[#allocation3 + $0x11] sm:$0xff]
  %v2475 = vld [vmem:[#allocation3 + $0x21] sm:$0xff]
  %v2476 = vld [vmem:[#allocation3 + $0x31] sm:$0xff]
  %v2477 = vld [vmem:[#allocation3 + $0x41] sm:$0xff]
  %v2478 = vld [vmem:[#allocation3 + $0x51] sm:$0xff]
  %v2479 = vld [vmem:[#allocation3 + $0x61] sm:$0xff]
  %v2480 = vld [vmem:[#allocation3 + $0x71] sm:$0xff]
  %v2481 = vld [vmem:[#allocation3 + $0xa1] sm:$0xff]
  %v2482 = vld [vmem:[#allocation3 + $0xb1] sm:$0xff]
  %v2483 = vld [vmem:[#allocation3 + $0xc1] sm:$0xff]
  %v2484 = vld [vmem:[#allocation3 + $0xd1] sm:$0xff]
  %v2485 = vld [vmem:[#allocation3 + $0xe1] sm:$0xff]
  %v2486 = vld [vmem:[#allocation3 + $0xf1] sm:$0xff]
  %v2487 = vld [vmem:[#allocation3 + $0x101] sm:$0xff]
  %v2488 = vld [vmem:[#allocation3 + $0x111] sm:$0xff]
  %s2489 = scalar_lea.vmem %s3, 128
  %v2490 = vld [vmem:[%s2489] sm:$0xff]
  %v2491 = vld [vmem:[%s2489 + $0x8] sm:$0xff]
  %v2492 = vld [vmem:[%s2489 + $0x10] sm:$0xff]
  %v2493 = vld [vmem:[%s2489 + $0x18] sm:$0xff]
  %v2494 = vld [vmem:[%s2489 + $0x20] sm:$0xff]
  %v2495 = vld [vmem:[%s2489 + $0x28] sm:$0xff]
  %v2496 = vld [vmem:[%s2489 + $0x30] sm:$0xff]
  %v2497 = vld [vmem:[%s2489 + $0x38] sm:$0xff]
  %v2498 = vld [vmem:[%s2489 + $0x40] sm:$0xff]
  %v2499 = vld [vmem:[%s2489 + $0x48] sm:$0xff]
  %v2500 = vld [vmem:[%s2489 + $0x50] sm:$0xff]
  %v2501 = vld [vmem:[%s2489 + $0x58] sm:$0xff]
  %v2502 = vld [vmem:[%s2489 + $0x60] sm:$0xff]
  %v2503 = vld [vmem:[%s2489 + $0x68] sm:$0xff]
  %v2504 = vld [vmem:[%s2489 + $0x70] sm:$0xff]
  %v2505 = vld [vmem:[%s2489 + $0x78] sm:$0xff]
  %2506 = vmatprep.subr.mxu0 0.0
  %2507 = vmatpush1.msra.mxu0 %v2505
  %2508 = vmatprep.subr.mxu0 0.0
  %2509 = vmatpush1.msra.mxu0 %v2504
  %2510 = vmatprep.subr.mxu0 0.0
  %2511 = vmatpush1.msra.mxu0 %v2503
  %2512 = vmatprep.subr.mxu0 0.0
  %2513 = vmatpush1.msra.mxu0 %v2502
  %2514 = vmatprep.subr.mxu0 0.0
  %2515 = vmatpush1.msra.mxu0 %v2501
  %2516 = vmatprep.subr.mxu0 0.0
  %2517 = vmatpush1.msra.mxu0 %v2500
  %2518 = vmatprep.subr.mxu0 0.0
  %2519 = vmatpush1.msra.mxu0 %v2499
  %2520 = vmatprep.subr.mxu0 0.0
  %2521 = vmatpush1.msra.mxu0 %v2498
  %2522 = vmatprep.subr.mxu0 0.0
  %2523 = vmatpush1.msra.mxu0 %v2497
  %2524 = vmatprep.subr.mxu0 0.0
  %2525 = vmatpush1.msra.mxu0 %v2496
  %2526 = vmatprep.subr.mxu0 0.0
  %2527 = vmatpush1.msra.mxu0 %v2495
  %2528 = vmatprep.subr.mxu0 0.0
  %2529 = vmatpush1.msra.mxu0 %v2494
  %2530 = vmatprep.subr.mxu0 0.0
  %2531 = vmatpush1.msra.mxu0 %v2493
  %2532 = vmatprep.subr.mxu0 0.0
  %2533 = vmatpush1.msra.mxu0 %v2492
  %2534 = vmatprep.subr.mxu0 0.0
  %2535 = vmatpush1.msra.mxu0 %v2491
  %2536 = vmatprep.subr.mxu0 0.0
  %2537 = vmatpush1.msra.mxu0 %v2490
  %2538 = vmatprep.subr.mxu0 0.0
  %2539 = vmatpush2.msra.mxu0 0.0
  %2540 = vmatprep.subr.mxu0 0.0
  %2541 = vmatpush2.msra.mxu0 0.0
  %2542 = vmatprep.subr.mxu0 0.0
  %2543 = vmatpush2.msra.mxu0 0.0
  %2544 = vmatprep.subr.mxu0 0.0
  %2545 = vmatpush2.msra.mxu0 0.0
  %2546 = vmatprep.subr.mxu0 0.0
  %2547 = vmatpush2.msra.mxu0 0.0
  %2548 = vmatprep.subr.mxu0 0.0
  %2549 = vmatpush2.msra.mxu0 0.0
  %2550 = vmatprep.subr.mxu0 0.0
  %2551 = vmatpush2.msra.mxu0 0.0
  %2552 = vmatprep.subr.mxu0 0.0
  %2553 = vmatpush2.msra.mxu0 0.0
  %2554 = vmatprep.subr.mxu0 0.0
  %2555 = vmatpush2.msra.mxu0 0.0
  %2556 = vmatprep.subr.mxu0 0.0
  %2557 = vmatpush2.msra.mxu0 0.0
  %2558 = vmatprep.subr.mxu0 0.0
  %2559 = vmatpush2.msra.mxu0 0.0
  %2560 = vmatprep.subr.mxu0 0.0
  %2561 = vmatpush2.msra.mxu0 0.0
  %2562 = vmatprep.subr.mxu0 0.0
  %2563 = vmatpush2.msra.mxu0 0.0
  %2564 = vmatprep.subr.mxu0 0.0
  %2565 = vmatpush2.msra.mxu0 0.0
  %2566 = vmatprep.subr.mxu0 0.0
  %2567 = vmatpush2.msra.mxu0 0.0
  %2568 = vmatprep.subr.mxu0 0.0
  %2569 = vmatpush2.msra.mxu0 0.0
  %2570 = vmatprep.mubr.f32.mxu0 0.0
  %2571 = vmatmul.mubr.f32.gmra.mxu0 %v2473
  %v2572 = vpop.f32.mrf.mxu0
  %v2573 = vadd.f32 0.0, %v2572
  %v2574 = vpop.f32.mrf.mxu0
  %2575 = vmatprep.mubr.f32.mxu0 0.0
  %2576 = vmatmul.mubr.f32.gmra.mxu0 %v2474
  %v2577 = vpop.f32.mrf.mxu0
  %v2578 = vadd.f32 0.0, %v2577
  %v2579 = vpop.f32.mrf.mxu0
  %2580 = vmatprep.mubr.f32.mxu0 0.0
  %2581 = vmatmul.mubr.f32.gmra.mxu0 %v2475
  %v2582 = vpop.f32.mrf.mxu0
  %v2583 = vadd.f32 0.0, %v2582
  %v2584 = vpop.f32.mrf.mxu0
  %2585 = vmatprep.mubr.f32.mxu0 0.0
  %2586 = vmatmul.mubr.f32.gmra.mxu0 %v2476
  %v2587 = vpop.f32.mrf.mxu0
  %v2588 = vadd.f32 0.0, %v2587
  %v2589 = vpop.f32.mrf.mxu0
  %2590 = vmatprep.mubr.f32.mxu0 0.0
  %2591 = vmatmul.mubr.f32.gmra.mxu0 %v2477
  %v2592 = vpop.f32.mrf.mxu0
  %v2593 = vadd.f32 0.0, %v2592
  %v2594 = vpop.f32.mrf.mxu0
  %2595 = vmatprep.mubr.f32.mxu0 0.0
  %2596 = vmatmul.mubr.f32.gmra.mxu0 %v2478
  %v2597 = vpop.f32.mrf.mxu0
  %v2598 = vadd.f32 0.0, %v2597
  %v2599 = vpop.f32.mrf.mxu0
  %2600 = vmatprep.mubr.f32.mxu0 0.0
  %2601 = vmatmul.mubr.f32.gmra.mxu0 %v2479
  %v2602 = vpop.f32.mrf.mxu0
  %v2603 = vadd.f32 0.0, %v2602
  %v2604 = vpop.f32.mrf.mxu0
  %2605 = vmatprep.mubr.f32.mxu0 0.0
  %2606 = vmatmul.mubr.f32.gmra.mxu0 %v2480
  %v2607 = vpop.f32.mrf.mxu0
  %v2608 = vadd.f32 0.0, %v2607
  %v2609 = vpop.f32.mrf.mxu0
  %2610 = vmatprep.mubr.f32.mxu0 0.0
  %2611 = vmatmul.mubr.f32.gmra.mxu0 %v2481
  %v2612 = vpop.f32.mrf.mxu0
  %v2613 = vadd.f32 0.0, %v2612
  %v2614 = vpop.f32.mrf.mxu0
  %2615 = vmatprep.mubr.f32.mxu0 0.0
  %2616 = vmatmul.mubr.f32.gmra.mxu0 %v2482
  %v2617 = vpop.f32.mrf.mxu0
  %v2618 = vadd.f32 0.0, %v2617
  %v2619 = vpop.f32.mrf.mxu0
  %2620 = vmatprep.mubr.f32.mxu0 0.0
  %2621 = vmatmul.mubr.f32.gmra.mxu0 %v2483
  %v2622 = vpop.f32.mrf.mxu0
  %v2623 = vadd.f32 0.0, %v2622
  %v2624 = vpop.f32.mrf.mxu0
  %2625 = vmatprep.mubr.f32.mxu0 0.0
  %2626 = vmatmul.mubr.f32.gmra.mxu0 %v2484
  %v2627 = vpop.f32.mrf.mxu0
  %v2628 = vadd.f32 0.0, %v2627
  %v2629 = vpop.f32.mrf.mxu0
  %2630 = vmatprep.mubr.f32.mxu0 0.0
  %2631 = vmatmul.mubr.f32.gmra.mxu0 %v2485
  %v2632 = vpop.f32.mrf.mxu0
  %v2633 = vadd.f32 0.0, %v2632
  %v2634 = vpop.f32.mrf.mxu0
  %2635 = vmatprep.mubr.f32.mxu0 0.0
  %2636 = vmatmul.mubr.f32.gmra.mxu0 %v2486
  %v2637 = vpop.f32.mrf.mxu0
  %v2638 = vadd.f32 0.0, %v2637
  %v2639 = vpop.f32.mrf.mxu0
  %2640 = vmatprep.mubr.f32.mxu0 0.0
  %2641 = vmatmul.mubr.f32.gmra.mxu0 %v2487
  %v2642 = vpop.f32.mrf.mxu0
  %v2643 = vadd.f32 0.0, %v2642
  %v2644 = vpop.f32.mrf.mxu0
  %2645 = vmatprep.mubr.f32.mxu0 0.0
  %2646 = vmatmul.mubr.f32.gmra.mxu0 %v2488
  %v2647 = vpop.f32.mrf.mxu0
  %v2648 = vadd.f32 0.0, %v2647
  %v2649 = vpop.f32.mrf.mxu0
  %2650 = vdwg.mxu0
  %2651 = vmatprep.subr.mxu0 0.0
  %2652 = vmatpush1.msra.mxu0 %v2472
  %2653 = vmatprep.subr.mxu0 0.0
  %2654 = vmatpush1.msra.mxu0 %v2471
  %2655 = vmatprep.subr.mxu0 0.0
  %2656 = vmatpush1.msra.mxu0 %v2470
  %2657 = vmatprep.subr.mxu0 0.0
  %2658 = vmatpush1.msra.mxu0 %v2469
  %2659 = vmatprep.subr.mxu0 0.0
  %2660 = vmatpush1.msra.mxu0 %v2468
  %2661 = vmatprep.subr.mxu0 0.0
  %2662 = vmatpush1.msra.mxu0 %v2467
  %2663 = vmatprep.subr.mxu0 0.0
  %2664 = vmatpush1.msra.mxu0 %v2466
  %2665 = vmatprep.subr.mxu0 0.0
  %2666 = vmatpush1.msra.mxu0 %v2465
  %2667 = vmatprep.subr.mxu0 0.0
  %2668 = vmatpush1.msra.mxu0 %v2464
  %2669 = vmatprep.subr.mxu0 0.0
  %2670 = vmatpush1.msra.mxu0 %v2463
  %2671 = vmatprep.subr.mxu0 0.0
  %2672 = vmatpush1.msra.mxu0 %v2462
  %2673 = vmatprep.subr.mxu0 0.0
  %2674 = vmatpush1.msra.mxu0 %v2461
  %2675 = vmatprep.subr.mxu0 0.0
  %2676 = vmatpush1.msra.mxu0 %v2460
  %2677 = vmatprep.subr.mxu0 0.0
  %2678 = vmatpush1.msra.mxu0 %v2459
  %2679 = vmatprep.subr.mxu0 0.0
  %2680 = vmatpush1.msra.mxu0 %v2458
  %2681 = vmatprep.subr.mxu0 0.0
  %2682 = vmatpush1.msra.mxu0 %v2457
  %2683 = vmatprep.subr.mxu0 0.0
  %2684 = vmatpush2.msra.mxu0 0.0
  %2685 = vmatprep.subr.mxu0 0.0
  %2686 = vmatpush2.msra.mxu0 0.0
  %2687 = vmatprep.subr.mxu0 0.0
  %2688 = vmatpush2.msra.mxu0 0.0
  %2689 = vmatprep.subr.mxu0 0.0
  %2690 = vmatpush2.msra.mxu0 0.0
  %2691 = vmatprep.subr.mxu0 0.0
  %2692 = vmatpush2.msra.mxu0 0.0
  %2693 = vmatprep.subr.mxu0 0.0
  %2694 = vmatpush2.msra.mxu0 0.0
  %2695 = vmatprep.subr.mxu0 0.0
  %2696 = vmatpush2.msra.mxu0 0.0
  %2697 = vmatprep.subr.mxu0 0.0
  %2698 = vmatpush2.msra.mxu0 0.0
  %2699 = vmatprep.subr.mxu0 0.0
  %2700 = vmatpush2.msra.mxu0 0.0
  %2701 = vmatprep.subr.mxu0 0.0
  %2702 = vmatpush2.msra.mxu0 0.0
  %2703 = vmatprep.subr.mxu0 0.0
  %2704 = vmatpush2.msra.mxu0 0.0
  %2705 = vmatprep.subr.mxu0 0.0
  %2706 = vmatpush2.msra.mxu0 0.0
  %2707 = vmatprep.subr.mxu0 0.0
  %2708 = vmatpush2.msra.mxu0 0.0
  %2709 = vmatprep.subr.mxu0 0.0
  %2710 = vmatpush2.msra.mxu0 0.0
  %2711 = vmatprep.subr.mxu0 0.0
  %2712 = vmatpush2.msra.mxu0 0.0
  %2713 = vmatprep.subr.mxu0 0.0
  %2714 = vmatpush2.msra.mxu0 0.0
  %2715 = vmatprep.mubr.f32.mxu0 0.0
  %2716 = vmatmul.mubr.f32.gmra.mxu0 %v2441
  %v2717 = vpop.f32.mrf.mxu0
  %v2718 = vadd.f32 %v2573, %v2717
  %v2719 = vpop.f32.mrf.mxu0
  %2720 = vmatprep.mubr.f32.mxu0 0.0
  %2721 = vmatmul.mubr.f32.gmra.mxu0 %v2442
  %v2722 = vpop.f32.mrf.mxu0
  %v2723 = vadd.f32 %v2578, %v2722
  %v2724 = vpop.f32.mrf.mxu0
  %2725 = vmatprep.mubr.f32.mxu0 0.0
  %2726 = vmatmul.mubr.f32.gmra.mxu0 %v2443
  %v2727 = vpop.f32.mrf.mxu0
  %v2728 = vadd.f32 %v2583, %v2727
  %v2729 = vpop.f32.mrf.mxu0
  %2730 = vmatprep.mubr.f32.mxu0 0.0
  %2731 = vmatmul.mubr.f32.gmra.mxu0 %v2444
  %v2732 = vpop.f32.mrf.mxu0
  %v2733 = vadd.f32 %v2588, %v2732
  %v2734 = vpop.f32.mrf.mxu0
  %2735 = vmatprep.mubr.f32.mxu0 0.0
  %2736 = vmatmul.mubr.f32.gmra.mxu0 %v2445
  %v2737 = vpop.f32.mrf.mxu0
  %v2738 = vadd.f32 %v2593, %v2737
  %v2739 = vpop.f32.mrf.mxu0
  %2740 = vmatprep.mubr.f32.mxu0 0.0
  %2741 = vmatmul.mubr.f32.gmra.mxu0 %v2446
  %v2742 = vpop.f32.mrf.mxu0
  %v2743 = vadd.f32 %v2598, %v2742
  %v2744 = vpop.f32.mrf.mxu0
  %2745 = vmatprep.mubr.f32.mxu0 0.0
  %2746 = vmatmul.mubr.f32.gmra.mxu0 %v2447
  %v2747 = vpop.f32.mrf.mxu0
  %v2748 = vadd.f32 %v2603, %v2747
  %v2749 = vpop.f32.mrf.mxu0
  %2750 = vmatprep.mubr.f32.mxu0 0.0
  %2751 = vmatmul.mubr.f32.gmra.mxu0 %v2448
  %v2752 = vpop.f32.mrf.mxu0
  %v2753 = vadd.f32 %v2608, %v2752
  %v2754 = vpop.f32.mrf.mxu0
  %2755 = vmatprep.mubr.f32.mxu0 0.0
  %2756 = vmatmul.mubr.f32.gmra.mxu0 %v2449
  %v2757 = vpop.f32.mrf.mxu0
  %v2758 = vadd.f32 %v2613, %v2757
  %v2759 = vpop.f32.mrf.mxu0
  %2760 = vmatprep.mubr.f32.mxu0 0.0
  %2761 = vmatmul.mubr.f32.gmra.mxu0 %v2450
  %v2762 = vpop.f32.mrf.mxu0
  %v2763 = vadd.f32 %v2618, %v2762
  %v2764 = vpop.f32.mrf.mxu0
  %2765 = vmatprep.mubr.f32.mxu0 0.0
  %2766 = vmatmul.mubr.f32.gmra.mxu0 %v2451
  %v2767 = vpop.f32.mrf.mxu0
  %v2768 = vadd.f32 %v2623, %v2767
  %v2769 = vpop.f32.mrf.mxu0
  %2770 = vmatprep.mubr.f32.mxu0 0.0
  %2771 = vmatmul.mubr.f32.gmra.mxu0 %v2452
  %v2772 = vpop.f32.mrf.mxu0
  %v2773 = vadd.f32 %v2628, %v2772
  %v2774 = vpop.f32.mrf.mxu0
  %2775 = vmatprep.mubr.f32.mxu0 0.0
  %2776 = vmatmul.mubr.f32.gmra.mxu0 %v2453
  %v2777 = vpop.f32.mrf.mxu0
  %v2778 = vadd.f32 %v2633, %v2777
  %v2779 = vpop.f32.mrf.mxu0
  %2780 = vmatprep.mubr.f32.mxu0 0.0
  %2781 = vmatmul.mubr.f32.gmra.mxu0 %v2454
  %v2782 = vpop.f32.mrf.mxu0
  %v2783 = vadd.f32 %v2638, %v2782
  %v2784 = vpop.f32.mrf.mxu0
  %2785 = vmatprep.mubr.f32.mxu0 0.0
  %2786 = vmatmul.mubr.f32.gmra.mxu0 %v2455
  %v2787 = vpop.f32.mrf.mxu0
  %v2788 = vadd.f32 %v2643, %v2787
  %v2789 = vpop.f32.mrf.mxu0
  %2790 = vmatprep.mubr.f32.mxu0 0.0
  %2791 = vmatmul.mubr.f32.gmra.mxu0 %v2456
  %v2792 = vpop.f32.mrf.mxu0
  %v2793 = vadd.f32 %v2648, %v2792
  %v2794 = vpop.f32.mrf.mxu0
  %2795 = vdwg.mxu0
  %v2796 = vld [vmem:[#allocation3 + $0x2] sm:$0xff]
  %v2797 = vld [vmem:[#allocation3 + $0x12] sm:$0xff]
  %v2798 = vld [vmem:[#allocation3 + $0x22] sm:$0xff]
  %v2799 = vld [vmem:[#allocation3 + $0x32] sm:$0xff]
  %v2800 = vld [vmem:[#allocation3 + $0x42] sm:$0xff]
  %v2801 = vld [vmem:[#allocation3 + $0x52] sm:$0xff]
  %v2802 = vld [vmem:[#allocation3 + $0x62] sm:$0xff]
  %v2803 = vld [vmem:[#allocation3 + $0x72] sm:$0xff]
  %v2804 = vld [vmem:[#allocation3 + $0xa2] sm:$0xff]
  %v2805 = vld [vmem:[#allocation3 + $0xb2] sm:$0xff]
  %v2806 = vld [vmem:[#allocation3 + $0xc2] sm:$0xff]
  %v2807 = vld [vmem:[#allocation3 + $0xd2] sm:$0xff]
  %v2808 = vld [vmem:[#allocation3 + $0xe2] sm:$0xff]
  %v2809 = vld [vmem:[#allocation3 + $0xf2] sm:$0xff]
  %v2810 = vld [vmem:[#allocation3 + $0x102] sm:$0xff]
  %v2811 = vld [vmem:[#allocation3 + $0x112] sm:$0xff]
  %s2812 = scalar_lea.vmem %s3, 256
  %v2813 = vld [vmem:[%s2812] sm:$0xff]
  %v2814 = vld [vmem:[%s2812 + $0x8] sm:$0xff]
  %v2815 = vld [vmem:[%s2812 + $0x10] sm:$0xff]
  %v2816 = vld [vmem:[%s2812 + $0x18] sm:$0xff]
  %v2817 = vld [vmem:[%s2812 + $0x20] sm:$0xff]
  %v2818 = vld [vmem:[%s2812 + $0x28] sm:$0xff]
  %v2819 = vld [vmem:[%s2812 + $0x30] sm:$0xff]
  %v2820 = vld [vmem:[%s2812 + $0x38] sm:$0xff]
  %v2821 = vld [vmem:[%s2812 + $0x40] sm:$0xff]
  %v2822 = vld [vmem:[%s2812 + $0x48] sm:$0xff]
  %v2823 = vld [vmem:[%s2812 + $0x50] sm:$0xff]
  %v2824 = vld [vmem:[%s2812 + $0x58] sm:$0xff]
  %v2825 = vld [vmem:[%s2812 + $0x60] sm:$0xff]
  %v2826 = vld [vmem:[%s2812 + $0x68] sm:$0xff]
  %v2827 = vld [vmem:[%s2812 + $0x70] sm:$0xff]
  %v2828 = vld [vmem:[%s2812 + $0x78] sm:$0xff]
  %2829 = vmatprep.subr.mxu0 0.0
  %2830 = vmatpush1.msra.mxu0 %v2828
  %2831 = vmatprep.subr.mxu0 0.0
  %2832 = vmatpush1.msra.mxu0 %v2827
  %2833 = vmatprep.subr.mxu0 0.0
  %2834 = vmatpush1.msra.mxu0 %v2826
  %2835 = vmatprep.subr.mxu0 0.0
  %2836 = vmatpush1.msra.mxu0 %v2825
  %2837 = vmatprep.subr.mxu0 0.0
  %2838 = vmatpush1.msra.mxu0 %v2824
  %2839 = vmatprep.subr.mxu0 0.0
  %2840 = vmatpush1.msra.mxu0 %v2823
  %2841 = vmatprep.subr.mxu0 0.0
  %2842 = vmatpush1.msra.mxu0 %v2822
  %2843 = vmatprep.subr.mxu0 0.0
  %2844 = vmatpush1.msra.mxu0 %v2821
  %2845 = vmatprep.subr.mxu0 0.0
  %2846 = vmatpush1.msra.mxu0 %v2820
  %2847 = vmatprep.subr.mxu0 0.0
  %2848 = vmatpush1.msra.mxu0 %v2819
  %2849 = vmatprep.subr.mxu0 0.0
  %2850 = vmatpush1.msra.mxu0 %v2818
  %2851 = vmatprep.subr.mxu0 0.0
  %2852 = vmatpush1.msra.mxu0 %v2817
  %2853 = vmatprep.subr.mxu0 0.0
  %2854 = vmatpush1.msra.mxu0 %v2816
  %2855 = vmatprep.subr.mxu0 0.0
  %2856 = vmatpush1.msra.mxu0 %v2815
  %2857 = vmatprep.subr.mxu0 0.0
  %2858 = vmatpush1.msra.mxu0 %v2814
  %2859 = vmatprep.subr.mxu0 0.0
  %2860 = vmatpush1.msra.mxu0 %v2813
  %2861 = vmatprep.subr.mxu0 0.0
  %2862 = vmatpush2.msra.mxu0 0.0
  %2863 = vmatprep.subr.mxu0 0.0
  %2864 = vmatpush2.msra.mxu0 0.0
  %2865 = vmatprep.subr.mxu0 0.0
  %2866 = vmatpush2.msra.mxu0 0.0
  %2867 = vmatprep.subr.mxu0 0.0
  %2868 = vmatpush2.msra.mxu0 0.0
  %2869 = vmatprep.subr.mxu0 0.0
  %2870 = vmatpush2.msra.mxu0 0.0
  %2871 = vmatprep.subr.mxu0 0.0
  %2872 = vmatpush2.msra.mxu0 0.0
  %2873 = vmatprep.subr.mxu0 0.0
  %2874 = vmatpush2.msra.mxu0 0.0
  %2875 = vmatprep.subr.mxu0 0.0
  %2876 = vmatpush2.msra.mxu0 0.0
  %2877 = vmatprep.subr.mxu0 0.0
  %2878 = vmatpush2.msra.mxu0 0.0
  %2879 = vmatprep.subr.mxu0 0.0
  %2880 = vmatpush2.msra.mxu0 0.0
  %2881 = vmatprep.subr.mxu0 0.0
  %2882 = vmatpush2.msra.mxu0 0.0
  %2883 = vmatprep.subr.mxu0 0.0
  %2884 = vmatpush2.msra.mxu0 0.0
  %2885 = vmatprep.subr.mxu0 0.0
  %2886 = vmatpush2.msra.mxu0 0.0
  %2887 = vmatprep.subr.mxu0 0.0
  %2888 = vmatpush2.msra.mxu0 0.0
  %2889 = vmatprep.subr.mxu0 0.0
  %2890 = vmatpush2.msra.mxu0 0.0
  %2891 = vmatprep.subr.mxu0 0.0
  %2892 = vmatpush2.msra.mxu0 0.0
  %2893 = vmatprep.mubr.f32.mxu0 0.0
  %2894 = vmatmul.mubr.f32.gmra.mxu0 %v2796
  %v2895 = vpop.f32.mrf.mxu0
  %v2896 = vadd.f32 0.0, %v2895
  %v2897 = vpop.f32.mrf.mxu0
  %2898 = vmatprep.mubr.f32.mxu0 0.0
  %2899 = vmatmul.mubr.f32.gmra.mxu0 %v2797
  %v2900 = vpop.f32.mrf.mxu0
  %v2901 = vadd.f32 0.0, %v2900
  %v2902 = vpop.f32.mrf.mxu0
  %2903 = vmatprep.mubr.f32.mxu0 0.0
  %2904 = vmatmul.mubr.f32.gmra.mxu0 %v2798
  %v2905 = vpop.f32.mrf.mxu0
  %v2906 = vadd.f32 0.0, %v2905
  %v2907 = vpop.f32.mrf.mxu0
  %2908 = vmatprep.mubr.f32.mxu0 0.0
  %2909 = vmatmul.mubr.f32.gmra.mxu0 %v2799
  %v2910 = vpop.f32.mrf.mxu0
  %v2911 = vadd.f32 0.0, %v2910
  %v2912 = vpop.f32.mrf.mxu0
  %2913 = vmatprep.mubr.f32.mxu0 0.0
  %2914 = vmatmul.mubr.f32.gmra.mxu0 %v2800
  %v2915 = vpop.f32.mrf.mxu0
  %v2916 = vadd.f32 0.0, %v2915
  %v2917 = vpop.f32.mrf.mxu0
  %2918 = vmatprep.mubr.f32.mxu0 0.0
  %2919 = vmatmul.mubr.f32.gmra.mxu0 %v2801
  %v2920 = vpop.f32.mrf.mxu0
  %v2921 = vadd.f32 0.0, %v2920
  %v2922 = vpop.f32.mrf.mxu0
  %2923 = vmatprep.mubr.f32.mxu0 0.0
  %2924 = vmatmul.mubr.f32.gmra.mxu0 %v2802
  %v2925 = vpop.f32.mrf.mxu0
  %v2926 = vadd.f32 0.0, %v2925
  %v2927 = vpop.f32.mrf.mxu0
  %2928 = vmatprep.mubr.f32.mxu0 0.0
  %2929 = vmatmul.mubr.f32.gmra.mxu0 %v2803
  %v2930 = vpop.f32.mrf.mxu0
  %v2931 = vadd.f32 0.0, %v2930
  %v2932 = vpop.f32.mrf.mxu0
  %2933 = vmatprep.mubr.f32.mxu0 0.0
  %2934 = vmatmul.mubr.f32.gmra.mxu0 %v2804
  %v2935 = vpop.f32.mrf.mxu0
  %v2936 = vadd.f32 0.0, %v2935
  %v2937 = vpop.f32.mrf.mxu0
  %2938 = vmatprep.mubr.f32.mxu0 0.0
  %2939 = vmatmul.mubr.f32.gmra.mxu0 %v2805
  %v2940 = vpop.f32.mrf.mxu0
  %v2941 = vadd.f32 0.0, %v2940
  %v2942 = vpop.f32.mrf.mxu0
  %2943 = vmatprep.mubr.f32.mxu0 0.0
  %2944 = vmatmul.mubr.f32.gmra.mxu0 %v2806
  %v2945 = vpop.f32.mrf.mxu0
  %v2946 = vadd.f32 0.0, %v2945
  %v2947 = vpop.f32.mrf.mxu0
  %2948 = vmatprep.mubr.f32.mxu0 0.0
  %2949 = vmatmul.mubr.f32.gmra.mxu0 %v2807
  %v2950 = vpop.f32.mrf.mxu0
  %v2951 = vadd.f32 0.0, %v2950
  %v2952 = vpop.f32.mrf.mxu0
  %2953 = vmatprep.mubr.f32.mxu0 0.0
  %2954 = vmatmul.mubr.f32.gmra.mxu0 %v2808
  %v2955 = vpop.f32.mrf.mxu0
  %v2956 = vadd.f32 0.0, %v2955
  %v2957 = vpop.f32.mrf.mxu0
  %2958 = vmatprep.mubr.f32.mxu0 0.0
  %2959 = vmatmul.mubr.f32.gmra.mxu0 %v2809
  %v2960 = vpop.f32.mrf.mxu0
  %v2961 = vadd.f32 0.0, %v2960
  %v2962 = vpop.f32.mrf.mxu0
  %2963 = vmatprep.mubr.f32.mxu0 0.0
  %2964 = vmatmul.mubr.f32.gmra.mxu0 %v2810
  %v2965 = vpop.f32.mrf.mxu0
  %v2966 = vadd.f32 0.0, %v2965
  %v2967 = vpop.f32.mrf.mxu0
  %2968 = vmatprep.mubr.f32.mxu0 0.0
  %2969 = vmatmul.mubr.f32.gmra.mxu0 %v2811
  %v2970 = vpop.f32.mrf.mxu0
  %v2971 = vadd.f32 0.0, %v2970
  %v2972 = vpop.f32.mrf.mxu0
  %2973 = vdwg.mxu0
  %v2974 = vadd.f32 %v2718, %v2896
  %v2975 = vadd.f32 %v2723, %v2901
  %v2976 = vadd.f32 %v2728, %v2906
  %v2977 = vadd.f32 %v2733, %v2911
  %v2978 = vadd.f32 %v2738, %v2916
  %v2979 = vadd.f32 %v2743, %v2921
  %v2980 = vadd.f32 %v2748, %v2926
  %v2981 = vadd.f32 %v2753, %v2931
  %v2982 = vadd.f32 %v2758, %v2936
  %v2983 = vadd.f32 %v2763, %v2941
  %v2984 = vadd.f32 %v2768, %v2946
  %v2985 = vadd.f32 %v2773, %v2951
  %v2986 = vadd.f32 %v2778, %v2956
  %v2987 = vadd.f32 %v2783, %v2961
  %v2988 = vadd.f32 %v2788, %v2966
  %v2989 = vadd.f32 %v2793, %v2971
  %v2990 = vld [vmem:[%s2424] sm:$0xff]
  %v2991 = vld [vmem:[%s2424 + $0x10] sm:$0xff]
  %v2992 = vld [vmem:[%s2424 + $0x20] sm:$0xff]
  %v2993 = vld [vmem:[%s2424 + $0x30] sm:$0xff]
  %v2994 = vld [vmem:[%s2424 + $0x40] sm:$0xff]
  %v2995 = vld [vmem:[%s2424 + $0x50] sm:$0xff]
  %v2996 = vld [vmem:[%s2424 + $0x60] sm:$0xff]
  %v2997 = vld [vmem:[%s2424 + $0x70] sm:$0xff]
  %v2998 = vld [vmem:[%s2424 + $0xa0] sm:$0xff]
  %v2999 = vld [vmem:[%s2424 + $0xb0] sm:$0xff]
  %v3000 = vld [vmem:[%s2424 + $0xc0] sm:$0xff]
  %v3001 = vld [vmem:[%s2424 + $0xd0] sm:$0xff]
  %v3002 = vld [vmem:[%s2424 + $0xe0] sm:$0xff]
  %v3003 = vld [vmem:[%s2424 + $0xf0] sm:$0xff]
  %v3004 = vld [vmem:[%s2424 + $0x100] sm:$0xff]
  %v3005 = vld [vmem:[%s2424 + $0x110] sm:$0xff]
  %s3006 = scalar_lea.vmem %s3, 384
  %v3007 = vld [vmem:[%s3006] sm:$0xff]
  %v3008 = vld [vmem:[%s3006 + $0x8] sm:$0xff]
  %v3009 = vld [vmem:[%s3006 + $0x10] sm:$0xff]
  %v3010 = vld [vmem:[%s3006 + $0x18] sm:$0xff]
  %v3011 = vld [vmem:[%s3006 + $0x20] sm:$0xff]
  %v3012 = vld [vmem:[%s3006 + $0x28] sm:$0xff]
  %v3013 = vld [vmem:[%s3006 + $0x30] sm:$0xff]
  %v3014 = vld [vmem:[%s3006 + $0x38] sm:$0xff]
  %v3015 = vld [vmem:[%s3006 + $0x40] sm:$0xff]
  %v3016 = vld [vmem:[%s3006 + $0x48] sm:$0xff]
  %v3017 = vld [vmem:[%s3006 + $0x50] sm:$0xff]
  %v3018 = vld [vmem:[%s3006 + $0x58] sm:$0xff]
  %v3019 = vld [vmem:[%s3006 + $0x60] sm:$0xff]
  %v3020 = vld [vmem:[%s3006 + $0x68] sm:$0xff]
  %v3021 = vld [vmem:[%s3006 + $0x70] sm:$0xff]
  %v3022 = vld [vmem:[%s3006 + $0x78] sm:$0xff]
  %3023 = vmatprep.subr.mxu0 0.0
  %3024 = vmatpush1.msra.mxu0 %v3022
  %3025 = vmatprep.subr.mxu0 0.0
  %3026 = vmatpush1.msra.mxu0 %v3021
  %3027 = vmatprep.subr.mxu0 0.0
  %3028 = vmatpush1.msra.mxu0 %v3020
  %3029 = vmatprep.subr.mxu0 0.0
  %3030 = vmatpush1.msra.mxu0 %v3019
  %3031 = vmatprep.subr.mxu0 0.0
  %3032 = vmatpush1.msra.mxu0 %v3018
  %3033 = vmatprep.subr.mxu0 0.0
  %3034 = vmatpush1.msra.mxu0 %v3017
  %3035 = vmatprep.subr.mxu0 0.0
  %3036 = vmatpush1.msra.mxu0 %v3016
  %3037 = vmatprep.subr.mxu0 0.0
  %3038 = vmatpush1.msra.mxu0 %v3015
  %3039 = vmatprep.subr.mxu0 0.0
  %3040 = vmatpush1.msra.mxu0 %v3014
  %3041 = vmatprep.subr.mxu0 0.0
  %3042 = vmatpush1.msra.mxu0 %v3013
  %3043 = vmatprep.subr.mxu0 0.0
  %3044 = vmatpush1.msra.mxu0 %v3012
  %3045 = vmatprep.subr.mxu0 0.0
  %3046 = vmatpush1.msra.mxu0 %v3011
  %3047 = vmatprep.subr.mxu0 0.0
  %3048 = vmatpush1.msra.mxu0 %v3010
  %3049 = vmatprep.subr.mxu0 0.0
  %3050 = vmatpush1.msra.mxu0 %v3009
  %3051 = vmatprep.subr.mxu0 0.0
  %3052 = vmatpush1.msra.mxu0 %v3008
  %3053 = vmatprep.subr.mxu0 0.0
  %3054 = vmatpush1.msra.mxu0 %v3007
  %3055 = vmatprep.subr.mxu0 0.0
  %3056 = vmatpush2.msra.mxu0 0.0
  %3057 = vmatprep.subr.mxu0 0.0
  %3058 = vmatpush2.msra.mxu0 0.0
  %3059 = vmatprep.subr.mxu0 0.0
  %3060 = vmatpush2.msra.mxu0 0.0
  %3061 = vmatprep.subr.mxu0 0.0
  %3062 = vmatpush2.msra.mxu0 0.0
  %3063 = vmatprep.subr.mxu0 0.0
  %3064 = vmatpush2.msra.mxu0 0.0
  %3065 = vmatprep.subr.mxu0 0.0
  %3066 = vmatpush2.msra.mxu0 0.0
  %3067 = vmatprep.subr.mxu0 0.0
  %3068 = vmatpush2.msra.mxu0 0.0
  %3069 = vmatprep.subr.mxu0 0.0
  %3070 = vmatpush2.msra.mxu0 0.0
  %3071 = vmatprep.subr.mxu0 0.0
  %3072 = vmatpush2.msra.mxu0 0.0
  %3073 = vmatprep.subr.mxu0 0.0
  %3074 = vmatpush2.msra.mxu0 0.0
  %3075 = vmatprep.subr.mxu0 0.0
  %3076 = vmatpush2.msra.mxu0 0.0
  %3077 = vmatprep.subr.mxu0 0.0
  %3078 = vmatpush2.msra.mxu0 0.0
  %3079 = vmatprep.subr.mxu0 0.0
  %3080 = vmatpush2.msra.mxu0 0.0
  %3081 = vmatprep.subr.mxu0 0.0
  %3082 = vmatpush2.msra.mxu0 0.0
  %3083 = vmatprep.subr.mxu0 0.0
  %3084 = vmatpush2.msra.mxu0 0.0
  %3085 = vmatprep.subr.mxu0 0.0
  %3086 = vmatpush2.msra.mxu0 0.0
  %3087 = vmatprep.mubr.f32.mxu0 0.0
  %3088 = vmatmul.mubr.f32.gmra.mxu0 %v2990
  %v3089 = vpop.f32.mrf.mxu0
  %v3090 = vadd.f32 0.0, %v3089
  %v3091 = vpop.f32.mrf.mxu0
  %3092 = vmatprep.mubr.f32.mxu0 0.0
  %3093 = vmatmul.mubr.f32.gmra.mxu0 %v2991
  %v3094 = vpop.f32.mrf.mxu0
  %v3095 = vadd.f32 0.0, %v3094
  %v3096 = vpop.f32.mrf.mxu0
  %3097 = vmatprep.mubr.f32.mxu0 0.0
  %3098 = vmatmul.mubr.f32.gmra.mxu0 %v2992
  %v3099 = vpop.f32.mrf.mxu0
  %v3100 = vadd.f32 0.0, %v3099
  %v3101 = vpop.f32.mrf.mxu0
  %3102 = vmatprep.mubr.f32.mxu0 0.0
  %3103 = vmatmul.mubr.f32.gmra.mxu0 %v2993
  %v3104 = vpop.f32.mrf.mxu0
  %v3105 = vadd.f32 0.0, %v3104
  %v3106 = vpop.f32.mrf.mxu0
  %3107 = vmatprep.mubr.f32.mxu0 0.0
  %3108 = vmatmul.mubr.f32.gmra.mxu0 %v2994
  %v3109 = vpop.f32.mrf.mxu0
  %v3110 = vadd.f32 0.0, %v3109
  %v3111 = vpop.f32.mrf.mxu0
  %3112 = vmatprep.mubr.f32.mxu0 0.0
  %3113 = vmatmul.mubr.f32.gmra.mxu0 %v2995
  %v3114 = vpop.f32.mrf.mxu0
  %v3115 = vadd.f32 0.0, %v3114
  %v3116 = vpop.f32.mrf.mxu0
  %3117 = vmatprep.mubr.f32.mxu0 0.0
  %3118 = vmatmul.mubr.f32.gmra.mxu0 %v2996
  %v3119 = vpop.f32.mrf.mxu0
  %v3120 = vadd.f32 0.0, %v3119
  %v3121 = vpop.f32.mrf.mxu0
  %3122 = vmatprep.mubr.f32.mxu0 0.0
  %3123 = vmatmul.mubr.f32.gmra.mxu0 %v2997
  %v3124 = vpop.f32.mrf.mxu0
  %v3125 = vadd.f32 0.0, %v3124
  %v3126 = vpop.f32.mrf.mxu0
  %3127 = vmatprep.mubr.f32.mxu0 0.0
  %3128 = vmatmul.mubr.f32.gmra.mxu0 %v2998
  %v3129 = vpop.f32.mrf.mxu0
  %v3130 = vadd.f32 0.0, %v3129
  %v3131 = vpop.f32.mrf.mxu0
  %3132 = vmatprep.mubr.f32.mxu0 0.0
  %3133 = vmatmul.mubr.f32.gmra.mxu0 %v2999
  %v3134 = vpop.f32.mrf.mxu0
  %v3135 = vadd.f32 0.0, %v3134
  %v3136 = vpop.f32.mrf.mxu0
  %3137 = vmatprep.mubr.f32.mxu0 0.0
  %3138 = vmatmul.mubr.f32.gmra.mxu0 %v3000
  %v3139 = vpop.f32.mrf.mxu0
  %v3140 = vadd.f32 0.0, %v3139
  %v3141 = vpop.f32.mrf.mxu0
  %3142 = vmatprep.mubr.f32.mxu0 0.0
  %3143 = vmatmul.mubr.f32.gmra.mxu0 %v3001
  %v3144 = vpop.f32.mrf.mxu0
  %v3145 = vadd.f32 0.0, %v3144
  %v3146 = vpop.f32.mrf.mxu0
  %3147 = vmatprep.mubr.f32.mxu0 0.0
  %3148 = vmatmul.mubr.f32.gmra.mxu0 %v3002
  %v3149 = vpop.f32.mrf.mxu0
  %v3150 = vadd.f32 0.0, %v3149
  %v3151 = vpop.f32.mrf.mxu0
  %3152 = vmatprep.mubr.f32.mxu0 0.0
  %3153 = vmatmul.mubr.f32.gmra.mxu0 %v3003
  %v3154 = vpop.f32.mrf.mxu0
  %v3155 = vadd.f32 0.0, %v3154
  %v3156 = vpop.f32.mrf.mxu0
  %3157 = vmatprep.mubr.f32.mxu0 0.0
  %3158 = vmatmul.mubr.f32.gmra.mxu0 %v3004
  %v3159 = vpop.f32.mrf.mxu0
  %v3160 = vadd.f32 0.0, %v3159
  %v3161 = vpop.f32.mrf.mxu0
  %3162 = vmatprep.mubr.f32.mxu0 0.0
  %3163 = vmatmul.mubr.f32.gmra.mxu0 %v3005
  %v3164 = vpop.f32.mrf.mxu0
  %v3165 = vadd.f32 0.0, %v3164
  %v3166 = vpop.f32.mrf.mxu0
  %3167 = vdwg.mxu0
  %v3168 = vadd.f32 %v2974, %v3090
  %v3169 = vadd.f32 %v2975, %v3095
  %v3170 = vadd.f32 %v2976, %v3100
  %v3171 = vadd.f32 %v2977, %v3105
  %v3172 = vadd.f32 %v2978, %v3110
  %v3173 = vadd.f32 %v2979, %v3115
  %v3174 = vadd.f32 %v2980, %v3120
  %v3175 = vadd.f32 %v2981, %v3125
  %v3176 = vadd.f32 %v2982, %v3130
  %v3177 = vadd.f32 %v2983, %v3135
  %v3178 = vadd.f32 %v2984, %v3140
  %v3179 = vadd.f32 %v2985, %v3145
  %v3180 = vadd.f32 %v2986, %v3150
  %v3181 = vadd.f32 %v2987, %v3155
  %v3182 = vadd.f32 %v2988, %v3160
  %v3183 = vadd.f32 %v2989, %v3165
  %v3184 = vld [vmem:[%s2424 + $0x1] sm:$0xff]
  %v3185 = vld [vmem:[%s2424 + $0x11] sm:$0xff]
  %v3186 = vld [vmem:[%s2424 + $0x21] sm:$0xff]
  %v3187 = vld [vmem:[%s2424 + $0x31] sm:$0xff]
  %v3188 = vld [vmem:[%s2424 + $0x41] sm:$0xff]
  %v3189 = vld [vmem:[%s2424 + $0x51] sm:$0xff]
  %v3190 = vld [vmem:[%s2424 + $0x61] sm:$0xff]
  %v3191 = vld [vmem:[%s2424 + $0x71] sm:$0xff]
  %v3192 = vld [vmem:[%s2424 + $0xa1] sm:$0xff]
  %v3193 = vld [vmem:[%s2424 + $0xb1] sm:$0xff]
  %v3194 = vld [vmem:[%s2424 + $0xc1] sm:$0xff]
  %v3195 = vld [vmem:[%s2424 + $0xd1] sm:$0xff]
  %v3196 = vld [vmem:[%s2424 + $0xe1] sm:$0xff]
  %v3197 = vld [vmem:[%s2424 + $0xf1] sm:$0xff]
  %v3198 = vld [vmem:[%s2424 + $0x101] sm:$0xff]
  %v3199 = vld [vmem:[%s2424 + $0x111] sm:$0xff]
  %s3200 = scalar_lea.vmem %s3, 512
  %v3201 = vld [vmem:[%s3200] sm:$0xff]
  %v3202 = vld [vmem:[%s3200 + $0x8] sm:$0xff]
  %v3203 = vld [vmem:[%s3200 + $0x10] sm:$0xff]
  %v3204 = vld [vmem:[%s3200 + $0x18] sm:$0xff]
  %v3205 = vld [vmem:[%s3200 + $0x20] sm:$0xff]
  %v3206 = vld [vmem:[%s3200 + $0x28] sm:$0xff]
  %v3207 = vld [vmem:[%s3200 + $0x30] sm:$0xff]
  %v3208 = vld [vmem:[%s3200 + $0x38] sm:$0xff]
  %v3209 = vld [vmem:[%s3200 + $0x40] sm:$0xff]
  %v3210 = vld [vmem:[%s3200 + $0x48] sm:$0xff]
  %v3211 = vld [vmem:[%s3200 + $0x50] sm:$0xff]
  %v3212 = vld [vmem:[%s3200 + $0x58] sm:$0xff]
  %v3213 = vld [vmem:[%s3200 + $0x60] sm:$0xff]
  %v3214 = vld [vmem:[%s3200 + $0x68] sm:$0xff]
  %v3215 = vld [vmem:[%s3200 + $0x70] sm:$0xff]
  %v3216 = vld [vmem:[%s3200 + $0x78] sm:$0xff]
  %3217 = vmatprep.subr.mxu0 0.0
  %3218 = vmatpush1.msra.mxu0 %v3216
  %3219 = vmatprep.subr.mxu0 0.0
  %3220 = vmatpush1.msra.mxu0 %v3215
  %3221 = vmatprep.subr.mxu0 0.0
  %3222 = vmatpush1.msra.mxu0 %v3214
  %3223 = vmatprep.subr.mxu0 0.0
  %3224 = vmatpush1.msra.mxu0 %v3213
  %3225 = vmatprep.subr.mxu0 0.0
  %3226 = vmatpush1.msra.mxu0 %v3212
  %3227 = vmatprep.subr.mxu0 0.0
  %3228 = vmatpush1.msra.mxu0 %v3211
  %3229 = vmatprep.subr.mxu0 0.0
  %3230 = vmatpush1.msra.mxu0 %v3210
  %3231 = vmatprep.subr.mxu0 0.0
  %3232 = vmatpush1.msra.mxu0 %v3209
  %3233 = vmatprep.subr.mxu0 0.0
  %3234 = vmatpush1.msra.mxu0 %v3208
  %3235 = vmatprep.subr.mxu0 0.0
  %3236 = vmatpush1.msra.mxu0 %v3207
  %3237 = vmatprep.subr.mxu0 0.0
  %3238 = vmatpush1.msra.mxu0 %v3206
  %3239 = vmatprep.subr.mxu0 0.0
  %3240 = vmatpush1.msra.mxu0 %v3205
  %3241 = vmatprep.subr.mxu0 0.0
  %3242 = vmatpush1.msra.mxu0 %v3204
  %3243 = vmatprep.subr.mxu0 0.0
  %3244 = vmatpush1.msra.mxu0 %v3203
  %3245 = vmatprep.subr.mxu0 0.0
  %3246 = vmatpush1.msra.mxu0 %v3202
  %3247 = vmatprep.subr.mxu0 0.0
  %3248 = vmatpush1.msra.mxu0 %v3201
  %3249 = vmatprep.subr.mxu0 0.0
  %3250 = vmatpush2.msra.mxu0 0.0
  %3251 = vmatprep.subr.mxu0 0.0
  %3252 = vmatpush2.msra.mxu0 0.0
  %3253 = vmatprep.subr.mxu0 0.0
  %3254 = vmatpush2.msra.mxu0 0.0
  %3255 = vmatprep.subr.mxu0 0.0
  %3256 = vmatpush2.msra.mxu0 0.0
  %3257 = vmatprep.subr.mxu0 0.0
  %3258 = vmatpush2.msra.mxu0 0.0
  %3259 = vmatprep.subr.mxu0 0.0
  %3260 = vmatpush2.msra.mxu0 0.0
  %3261 = vmatprep.subr.mxu0 0.0
  %3262 = vmatpush2.msra.mxu0 0.0
  %3263 = vmatprep.subr.mxu0 0.0
  %3264 = vmatpush2.msra.mxu0 0.0
  %3265 = vmatprep.subr.mxu0 0.0
  %3266 = vmatpush2.msra.mxu0 0.0
  %3267 = vmatprep.subr.mxu0 0.0
  %3268 = vmatpush2.msra.mxu0 0.0
  %3269 = vmatprep.subr.mxu0 0.0
  %3270 = vmatpush2.msra.mxu0 0.0
  %3271 = vmatprep.subr.mxu0 0.0
  %3272 = vmatpush2.msra.mxu0 0.0
  %3273 = vmatprep.subr.mxu0 0.0
  %3274 = vmatpush2.msra.mxu0 0.0
  %3275 = vmatprep.subr.mxu0 0.0
  %3276 = vmatpush2.msra.mxu0 0.0
  %3277 = vmatprep.subr.mxu0 0.0
  %3278 = vmatpush2.msra.mxu0 0.0
  %3279 = vmatprep.subr.mxu0 0.0
  %3280 = vmatpush2.msra.mxu0 0.0
  %3281 = vmatprep.mubr.f32.mxu0 0.0
  %3282 = vmatmul.mubr.f32.gmra.mxu0 %v3184
  %v3283 = vpop.f32.mrf.mxu0
  %v3284 = vadd.f32 0.0, %v3283
  %v3285 = vpop.f32.mrf.mxu0
  %3286 = vmatprep.mubr.f32.mxu0 0.0
  %3287 = vmatmul.mubr.f32.gmra.mxu0 %v3185
  %v3288 = vpop.f32.mrf.mxu0
  %v3289 = vadd.f32 0.0, %v3288
  %v3290 = vpop.f32.mrf.mxu0
  %3291 = vmatprep.mubr.f32.mxu0 0.0
  %3292 = vmatmul.mubr.f32.gmra.mxu0 %v3186
  %v3293 = vpop.f32.mrf.mxu0
  %v3294 = vadd.f32 0.0, %v3293
  %v3295 = vpop.f32.mrf.mxu0
  %3296 = vmatprep.mubr.f32.mxu0 0.0
  %3297 = vmatmul.mubr.f32.gmra.mxu0 %v3187
  %v3298 = vpop.f32.mrf.mxu0
  %v3299 = vadd.f32 0.0, %v3298
  %v3300 = vpop.f32.mrf.mxu0
  %3301 = vmatprep.mubr.f32.mxu0 0.0
  %3302 = vmatmul.mubr.f32.gmra.mxu0 %v3188
  %v3303 = vpop.f32.mrf.mxu0
  %v3304 = vadd.f32 0.0, %v3303
  %v3305 = vpop.f32.mrf.mxu0
  %3306 = vmatprep.mubr.f32.mxu0 0.0
  %3307 = vmatmul.mubr.f32.gmra.mxu0 %v3189
  %v3308 = vpop.f32.mrf.mxu0
  %v3309 = vadd.f32 0.0, %v3308
  %v3310 = vpop.f32.mrf.mxu0
  %3311 = vmatprep.mubr.f32.mxu0 0.0
  %3312 = vmatmul.mubr.f32.gmra.mxu0 %v3190
  %v3313 = vpop.f32.mrf.mxu0
  %v3314 = vadd.f32 0.0, %v3313
  %v3315 = vpop.f32.mrf.mxu0
  %3316 = vmatprep.mubr.f32.mxu0 0.0
  %3317 = vmatmul.mubr.f32.gmra.mxu0 %v3191
  %v3318 = vpop.f32.mrf.mxu0
  %v3319 = vadd.f32 0.0, %v3318
  %v3320 = vpop.f32.mrf.mxu0
  %3321 = vmatprep.mubr.f32.mxu0 0.0
  %3322 = vmatmul.mubr.f32.gmra.mxu0 %v3192
  %v3323 = vpop.f32.mrf.mxu0
  %v3324 = vadd.f32 0.0, %v3323
  %v3325 = vpop.f32.mrf.mxu0
  %3326 = vmatprep.mubr.f32.mxu0 0.0
  %3327 = vmatmul.mubr.f32.gmra.mxu0 %v3193
  %v3328 = vpop.f32.mrf.mxu0
  %v3329 = vadd.f32 0.0, %v3328
  %v3330 = vpop.f32.mrf.mxu0
  %3331 = vmatprep.mubr.f32.mxu0 0.0
  %3332 = vmatmul.mubr.f32.gmra.mxu0 %v3194
  %v3333 = vpop.f32.mrf.mxu0
  %v3334 = vadd.f32 0.0, %v3333
  %v3335 = vpop.f32.mrf.mxu0
  %3336 = vmatprep.mubr.f32.mxu0 0.0
  %3337 = vmatmul.mubr.f32.gmra.mxu0 %v3195
  %v3338 = vpop.f32.mrf.mxu0
  %v3339 = vadd.f32 0.0, %v3338
  %v3340 = vpop.f32.mrf.mxu0
  %3341 = vmatprep.mubr.f32.mxu0 0.0
  %3342 = vmatmul.mubr.f32.gmra.mxu0 %v3196
  %v3343 = vpop.f32.mrf.mxu0
  %v3344 = vadd.f32 0.0, %v3343
  %v3345 = vpop.f32.mrf.mxu0
  %3346 = vmatprep.mubr.f32.mxu0 0.0
  %3347 = vmatmul.mubr.f32.gmra.mxu0 %v3197
  %v3348 = vpop.f32.mrf.mxu0
  %v3349 = vadd.f32 0.0, %v3348
  %v3350 = vpop.f32.mrf.mxu0
  %3351 = vmatprep.mubr.f32.mxu0 0.0
  %3352 = vmatmul.mubr.f32.gmra.mxu0 %v3198
  %v3353 = vpop.f32.mrf.mxu0
  %v3354 = vadd.f32 0.0, %v3353
  %v3355 = vpop.f32.mrf.mxu0
  %3356 = vmatprep.mubr.f32.mxu0 0.0
  %3357 = vmatmul.mubr.f32.gmra.mxu0 %v3199
  %v3358 = vpop.f32.mrf.mxu0
  %v3359 = vadd.f32 0.0, %v3358
  %v3360 = vpop.f32.mrf.mxu0
  %3361 = vdwg.mxu0
  %v3362 = vadd.f32 %v3168, %v3284
  %v3363 = vadd.f32 %v3169, %v3289
  %v3364 = vadd.f32 %v3170, %v3294
  %v3365 = vadd.f32 %v3171, %v3299
  %v3366 = vadd.f32 %v3172, %v3304
  %v3367 = vadd.f32 %v3173, %v3309
  %v3368 = vadd.f32 %v3174, %v3314
  %v3369 = vadd.f32 %v3175, %v3319
  %v3370 = vadd.f32 %v3176, %v3324
  %v3371 = vadd.f32 %v3177, %v3329
  %v3372 = vadd.f32 %v3178, %v3334
  %v3373 = vadd.f32 %v3179, %v3339
  %v3374 = vadd.f32 %v3180, %v3344
  %v3375 = vadd.f32 %v3181, %v3349
  %v3376 = vadd.f32 %v3182, %v3354
  %v3377 = vadd.f32 %v3183, %v3359
  %v3378 = vld [vmem:[%s2424 + $0x2] sm:$0xff]
  %v3379 = vld [vmem:[%s2424 + $0x12] sm:$0xff]
  %v3380 = vld [vmem:[%s2424 + $0x22] sm:$0xff]
  %v3381 = vld [vmem:[%s2424 + $0x32] sm:$0xff]
  %v3382 = vld [vmem:[%s2424 + $0x42] sm:$0xff]
  %v3383 = vld [vmem:[%s2424 + $0x52] sm:$0xff]
  %v3384 = vld [vmem:[%s2424 + $0x62] sm:$0xff]
  %v3385 = vld [vmem:[%s2424 + $0x72] sm:$0xff]
  %v3386 = vld [vmem:[%s2424 + $0xa2] sm:$0xff]
  %v3387 = vld [vmem:[%s2424 + $0xb2] sm:$0xff]
  %v3388 = vld [vmem:[%s2424 + $0xc2] sm:$0xff]
  %v3389 = vld [vmem:[%s2424 + $0xd2] sm:$0xff]
  %v3390 = vld [vmem:[%s2424 + $0xe2] sm:$0xff]
  %v3391 = vld [vmem:[%s2424 + $0xf2] sm:$0xff]
  %v3392 = vld [vmem:[%s2424 + $0x102] sm:$0xff]
  %v3393 = vld [vmem:[%s2424 + $0x112] sm:$0xff]
  %s3394 = scalar_lea.vmem %s3, 640
  %v3395 = vld [vmem:[%s3394] sm:$0xff]
  %v3396 = vld [vmem:[%s3394 + $0x8] sm:$0xff]
  %v3397 = vld [vmem:[%s3394 + $0x10] sm:$0xff]
  %v3398 = vld [vmem:[%s3394 + $0x18] sm:$0xff]
  %v3399 = vld [vmem:[%s3394 + $0x20] sm:$0xff]
  %v3400 = vld [vmem:[%s3394 + $0x28] sm:$0xff]
  %v3401 = vld [vmem:[%s3394 + $0x30] sm:$0xff]
  %v3402 = vld [vmem:[%s3394 + $0x38] sm:$0xff]
  %v3403 = vld [vmem:[%s3394 + $0x40] sm:$0xff]
  %v3404 = vld [vmem:[%s3394 + $0x48] sm:$0xff]
  %v3405 = vld [vmem:[%s3394 + $0x50] sm:$0xff]
  %v3406 = vld [vmem:[%s3394 + $0x58] sm:$0xff]
  %v3407 = vld [vmem:[%s3394 + $0x60] sm:$0xff]
  %v3408 = vld [vmem:[%s3394 + $0x68] sm:$0xff]
  %v3409 = vld [vmem:[%s3394 + $0x70] sm:$0xff]
  %v3410 = vld [vmem:[%s3394 + $0x78] sm:$0xff]
  %3411 = vmatprep.subr.mxu0 0.0
  %3412 = vmatpush1.msra.mxu0 %v3410
  %3413 = vmatprep.subr.mxu0 0.0
  %3414 = vmatpush1.msra.mxu0 %v3409
  %3415 = vmatprep.subr.mxu0 0.0
  %3416 = vmatpush1.msra.mxu0 %v3408
  %3417 = vmatprep.subr.mxu0 0.0
  %3418 = vmatpush1.msra.mxu0 %v3407
  %3419 = vmatprep.subr.mxu0 0.0
  %3420 = vmatpush1.msra.mxu0 %v3406
  %3421 = vmatprep.subr.mxu0 0.0
  %3422 = vmatpush1.msra.mxu0 %v3405
  %3423 = vmatprep.subr.mxu0 0.0
  %3424 = vmatpush1.msra.mxu0 %v3404
  %3425 = vmatprep.subr.mxu0 0.0
  %3426 = vmatpush1.msra.mxu0 %v3403
  %3427 = vmatprep.subr.mxu0 0.0
  %3428 = vmatpush1.msra.mxu0 %v3402
  %3429 = vmatprep.subr.mxu0 0.0
  %3430 = vmatpush1.msra.mxu0 %v3401
  %3431 = vmatprep.subr.mxu0 0.0
  %3432 = vmatpush1.msra.mxu0 %v3400
  %3433 = vmatprep.subr.mxu0 0.0
  %3434 = vmatpush1.msra.mxu0 %v3399
  %3435 = vmatprep.subr.mxu0 0.0
  %3436 = vmatpush1.msra.mxu0 %v3398
  %3437 = vmatprep.subr.mxu0 0.0
  %3438 = vmatpush1.msra.mxu0 %v3397
  %3439 = vmatprep.subr.mxu0 0.0
  %3440 = vmatpush1.msra.mxu0 %v3396
  %3441 = vmatprep.subr.mxu0 0.0
  %3442 = vmatpush1.msra.mxu0 %v3395
  %3443 = vmatprep.subr.mxu0 0.0
  %3444 = vmatpush2.msra.mxu0 0.0
  %3445 = vmatprep.subr.mxu0 0.0
  %3446 = vmatpush2.msra.mxu0 0.0
  %3447 = vmatprep.subr.mxu0 0.0
  %3448 = vmatpush2.msra.mxu0 0.0
  %3449 = vmatprep.subr.mxu0 0.0
  %3450 = vmatpush2.msra.mxu0 0.0
  %3451 = vmatprep.subr.mxu0 0.0
  %3452 = vmatpush2.msra.mxu0 0.0
  %3453 = vmatprep.subr.mxu0 0.0
  %3454 = vmatpush2.msra.mxu0 0.0
  %3455 = vmatprep.subr.mxu0 0.0
  %3456 = vmatpush2.msra.mxu0 0.0
  %3457 = vmatprep.subr.mxu0 0.0
  %3458 = vmatpush2.msra.mxu0 0.0
  %3459 = vmatprep.subr.mxu0 0.0
  %3460 = vmatpush2.msra.mxu0 0.0
  %3461 = vmatprep.subr.mxu0 0.0
  %3462 = vmatpush2.msra.mxu0 0.0
  %3463 = vmatprep.subr.mxu0 0.0
  %3464 = vmatpush2.msra.mxu0 0.0
  %3465 = vmatprep.subr.mxu0 0.0
  %3466 = vmatpush2.msra.mxu0 0.0
  %3467 = vmatprep.subr.mxu0 0.0
  %3468 = vmatpush2.msra.mxu0 0.0
  %3469 = vmatprep.subr.mxu0 0.0
  %3470 = vmatpush2.msra.mxu0 0.0
  %3471 = vmatprep.subr.mxu0 0.0
  %3472 = vmatpush2.msra.mxu0 0.0
  %3473 = vmatprep.subr.mxu0 0.0
  %3474 = vmatpush2.msra.mxu0 0.0
  %3475 = vmatprep.mubr.f32.mxu0 0.0
  %3476 = vmatmul.mubr.f32.gmra.mxu0 %v3378
  %v3477 = vpop.f32.mrf.mxu0
  %v3478 = vadd.f32 0.0, %v3477
  %v3479 = vpop.f32.mrf.mxu0
  %3480 = vmatprep.mubr.f32.mxu0 0.0
  %3481 = vmatmul.mubr.f32.gmra.mxu0 %v3379
  %v3482 = vpop.f32.mrf.mxu0
  %v3483 = vadd.f32 0.0, %v3482
  %v3484 = vpop.f32.mrf.mxu0
  %3485 = vmatprep.mubr.f32.mxu0 0.0
  %3486 = vmatmul.mubr.f32.gmra.mxu0 %v3380
  %v3487 = vpop.f32.mrf.mxu0
  %v3488 = vadd.f32 0.0, %v3487
  %v3489 = vpop.f32.mrf.mxu0
  %3490 = vmatprep.mubr.f32.mxu0 0.0
  %3491 = vmatmul.mubr.f32.gmra.mxu0 %v3381
  %v3492 = vpop.f32.mrf.mxu0
  %v3493 = vadd.f32 0.0, %v3492
  %v3494 = vpop.f32.mrf.mxu0
  %3495 = vmatprep.mubr.f32.mxu0 0.0
  %3496 = vmatmul.mubr.f32.gmra.mxu0 %v3382
  %v3497 = vpop.f32.mrf.mxu0
  %v3498 = vadd.f32 0.0, %v3497
  %v3499 = vpop.f32.mrf.mxu0
  %3500 = vmatprep.mubr.f32.mxu0 0.0
  %3501 = vmatmul.mubr.f32.gmra.mxu0 %v3383
  %v3502 = vpop.f32.mrf.mxu0
  %v3503 = vadd.f32 0.0, %v3502
  %v3504 = vpop.f32.mrf.mxu0
  %3505 = vmatprep.mubr.f32.mxu0 0.0
  %3506 = vmatmul.mubr.f32.gmra.mxu0 %v3384
  %v3507 = vpop.f32.mrf.mxu0
  %v3508 = vadd.f32 0.0, %v3507
  %v3509 = vpop.f32.mrf.mxu0
  %3510 = vmatprep.mubr.f32.mxu0 0.0
  %3511 = vmatmul.mubr.f32.gmra.mxu0 %v3385
  %v3512 = vpop.f32.mrf.mxu0
  %v3513 = vadd.f32 0.0, %v3512
  %v3514 = vpop.f32.mrf.mxu0
  %3515 = vmatprep.mubr.f32.mxu0 0.0
  %3516 = vmatmul.mubr.f32.gmra.mxu0 %v3386
  %v3517 = vpop.f32.mrf.mxu0
  %v3518 = vadd.f32 0.0, %v3517
  %v3519 = vpop.f32.mrf.mxu0
  %3520 = vmatprep.mubr.f32.mxu0 0.0
  %3521 = vmatmul.mubr.f32.gmra.mxu0 %v3387
  %v3522 = vpop.f32.mrf.mxu0
  %v3523 = vadd.f32 0.0, %v3522
  %v3524 = vpop.f32.mrf.mxu0
  %3525 = vmatprep.mubr.f32.mxu0 0.0
  %3526 = vmatmul.mubr.f32.gmra.mxu0 %v3388
  %v3527 = vpop.f32.mrf.mxu0
  %v3528 = vadd.f32 0.0, %v3527
  %v3529 = vpop.f32.mrf.mxu0
  %3530 = vmatprep.mubr.f32.mxu0 0.0
  %3531 = vmatmul.mubr.f32.gmra.mxu0 %v3389
  %v3532 = vpop.f32.mrf.mxu0
  %v3533 = vadd.f32 0.0, %v3532
  %v3534 = vpop.f32.mrf.mxu0
  %3535 = vmatprep.mubr.f32.mxu0 0.0
  %3536 = vmatmul.mubr.f32.gmra.mxu0 %v3390
  %v3537 = vpop.f32.mrf.mxu0
  %v3538 = vadd.f32 0.0, %v3537
  %v3539 = vpop.f32.mrf.mxu0
  %3540 = vmatprep.mubr.f32.mxu0 0.0
  %3541 = vmatmul.mubr.f32.gmra.mxu0 %v3391
  %v3542 = vpop.f32.mrf.mxu0
  %v3543 = vadd.f32 0.0, %v3542
  %v3544 = vpop.f32.mrf.mxu0
  %3545 = vmatprep.mubr.f32.mxu0 0.0
  %3546 = vmatmul.mubr.f32.gmra.mxu0 %v3392
  %v3547 = vpop.f32.mrf.mxu0
  %v3548 = vadd.f32 0.0, %v3547
  %v3549 = vpop.f32.mrf.mxu0
  %3550 = vmatprep.mubr.f32.mxu0 0.0
  %3551 = vmatmul.mubr.f32.gmra.mxu0 %v3393
  %v3552 = vpop.f32.mrf.mxu0
  %v3553 = vadd.f32 0.0, %v3552
  %v3554 = vpop.f32.mrf.mxu0
  %3555 = vdwg.mxu0
  %v3556 = vadd.f32 %v3362, %v3478
  %v3557 = vadd.f32 %v3363, %v3483
  %v3558 = vadd.f32 %v3364, %v3488
  %v3559 = vadd.f32 %v3365, %v3493
  %v3560 = vadd.f32 %v3366, %v3498
  %v3561 = vadd.f32 %v3367, %v3503
  %v3562 = vadd.f32 %v3368, %v3508
  %v3563 = vadd.f32 %v3369, %v3513
  %v3564 = vadd.f32 %v3370, %v3518
  %v3565 = vadd.f32 %v3371, %v3523
  %v3566 = vadd.f32 %v3372, %v3528
  %v3567 = vadd.f32 %v3373, %v3533
  %v3568 = vadd.f32 %v3374, %v3538
  %v3569 = vadd.f32 %v3375, %v3543
  %v3570 = vadd.f32 %v3376, %v3548
  %v3571 = vadd.f32 %v3377, %v3553
  %s3572 = scalar_lea.vmem [#allocation3], 32
  %v3573 = vld [vmem:[%s3572] sm:$0xff]
  %v3574 = vld [vmem:[%s3572 + $0x10] sm:$0xff]
  %v3575 = vld [vmem:[%s3572 + $0x20] sm:$0xff]
  %v3576 = vld [vmem:[%s3572 + $0x30] sm:$0xff]
  %v3577 = vld [vmem:[%s3572 + $0x40] sm:$0xff]
  %v3578 = vld [vmem:[%s3572 + $0x50] sm:$0xff]
  %v3579 = vld [vmem:[%s3572 + $0x60] sm:$0xff]
  %v3580 = vld [vmem:[%s3572 + $0x70] sm:$0xff]
  %v3581 = vld [vmem:[%s3572 + $0xa0] sm:$0xff]
  %v3582 = vld [vmem:[%s3572 + $0xb0] sm:$0xff]
  %v3583 = vld [vmem:[%s3572 + $0xc0] sm:$0xff]
  %v3584 = vld [vmem:[%s3572 + $0xd0] sm:$0xff]
  %v3585 = vld [vmem:[%s3572 + $0xe0] sm:$0xff]
  %v3586 = vld [vmem:[%s3572 + $0xf0] sm:$0xff]
  %v3587 = vld [vmem:[%s3572 + $0x100] sm:$0xff]
  %v3588 = vld [vmem:[%s3572 + $0x110] sm:$0xff]
  %s3589 = scalar_lea.vmem %s3, 768
  %v3590 = vld [vmem:[%s3589] sm:$0xff]
  %v3591 = vld [vmem:[%s3589 + $0x8] sm:$0xff]
  %v3592 = vld [vmem:[%s3589 + $0x10] sm:$0xff]
  %v3593 = vld [vmem:[%s3589 + $0x18] sm:$0xff]
  %v3594 = vld [vmem:[%s3589 + $0x20] sm:$0xff]
  %v3595 = vld [vmem:[%s3589 + $0x28] sm:$0xff]
  %v3596 = vld [vmem:[%s3589 + $0x30] sm:$0xff]
  %v3597 = vld [vmem:[%s3589 + $0x38] sm:$0xff]
  %v3598 = vld [vmem:[%s3589 + $0x40] sm:$0xff]
  %v3599 = vld [vmem:[%s3589 + $0x48] sm:$0xff]
  %v3600 = vld [vmem:[%s3589 + $0x50] sm:$0xff]
  %v3601 = vld [vmem:[%s3589 + $0x58] sm:$0xff]
  %v3602 = vld [vmem:[%s3589 + $0x60] sm:$0xff]
  %v3603 = vld [vmem:[%s3589 + $0x68] sm:$0xff]
  %v3604 = vld [vmem:[%s3589 + $0x70] sm:$0xff]
  %v3605 = vld [vmem:[%s3589 + $0x78] sm:$0xff]
  %3606 = vmatprep.subr.mxu0 0.0
  %3607 = vmatpush1.msra.mxu0 %v3605
  %3608 = vmatprep.subr.mxu0 0.0
  %3609 = vmatpush1.msra.mxu0 %v3604
  %3610 = vmatprep.subr.mxu0 0.0
  %3611 = vmatpush1.msra.mxu0 %v3603
  %3612 = vmatprep.subr.mxu0 0.0
  %3613 = vmatpush1.msra.mxu0 %v3602
  %3614 = vmatprep.subr.mxu0 0.0
  %3615 = vmatpush1.msra.mxu0 %v3601
  %3616 = vmatprep.subr.mxu0 0.0
  %3617 = vmatpush1.msra.mxu0 %v3600
  %3618 = vmatprep.subr.mxu0 0.0
  %3619 = vmatpush1.msra.mxu0 %v3599
  %3620 = vmatprep.subr.mxu0 0.0
  %3621 = vmatpush1.msra.mxu0 %v3598
  %3622 = vmatprep.subr.mxu0 0.0
  %3623 = vmatpush1.msra.mxu0 %v3597
  %3624 = vmatprep.subr.mxu0 0.0
  %3625 = vmatpush1.msra.mxu0 %v3596
  %3626 = vmatprep.subr.mxu0 0.0
  %3627 = vmatpush1.msra.mxu0 %v3595
  %3628 = vmatprep.subr.mxu0 0.0
  %3629 = vmatpush1.msra.mxu0 %v3594
  %3630 = vmatprep.subr.mxu0 0.0
  %3631 = vmatpush1.msra.mxu0 %v3593
  %3632 = vmatprep.subr.mxu0 0.0
  %3633 = vmatpush1.msra.mxu0 %v3592
  %3634 = vmatprep.subr.mxu0 0.0
  %3635 = vmatpush1.msra.mxu0 %v3591
  %3636 = vmatprep.subr.mxu0 0.0
  %3637 = vmatpush1.msra.mxu0 %v3590
  %3638 = vmatprep.subr.mxu0 0.0
  %3639 = vmatpush2.msra.mxu0 0.0
  %3640 = vmatprep.subr.mxu0 0.0
  %3641 = vmatpush2.msra.mxu0 0.0
  %3642 = vmatprep.subr.mxu0 0.0
  %3643 = vmatpush2.msra.mxu0 0.0
  %3644 = vmatprep.subr.mxu0 0.0
  %3645 = vmatpush2.msra.mxu0 0.0
  %3646 = vmatprep.subr.mxu0 0.0
  %3647 = vmatpush2.msra.mxu0 0.0
  %3648 = vmatprep.subr.mxu0 0.0
  %3649 = vmatpush2.msra.mxu0 0.0
  %3650 = vmatprep.subr.mxu0 0.0
  %3651 = vmatpush2.msra.mxu0 0.0
  %3652 = vmatprep.subr.mxu0 0.0
  %3653 = vmatpush2.msra.mxu0 0.0
  %3654 = vmatprep.subr.mxu0 0.0
  %3655 = vmatpush2.msra.mxu0 0.0
  %3656 = vmatprep.subr.mxu0 0.0
  %3657 = vmatpush2.msra.mxu0 0.0
  %3658 = vmatprep.subr.mxu0 0.0
  %3659 = vmatpush2.msra.mxu0 0.0
  %3660 = vmatprep.subr.mxu0 0.0
  %3661 = vmatpush2.msra.mxu0 0.0
  %3662 = vmatprep.subr.mxu0 0.0
  %3663 = vmatpush2.msra.mxu0 0.0
  %3664 = vmatprep.subr.mxu0 0.0
  %3665 = vmatpush2.msra.mxu0 0.0
  %3666 = vmatprep.subr.mxu0 0.0
  %3667 = vmatpush2.msra.mxu0 0.0
  %3668 = vmatprep.subr.mxu0 0.0
  %3669 = vmatpush2.msra.mxu0 0.0
  %3670 = vmatprep.mubr.f32.mxu0 0.0
  %3671 = vmatmul.mubr.f32.gmra.mxu0 %v3573
  %v3672 = vpop.f32.mrf.mxu0
  %v3673 = vadd.f32 0.0, %v3672
  %v3674 = vpop.f32.mrf.mxu0
  %3675 = vmatprep.mubr.f32.mxu0 0.0
  %3676 = vmatmul.mubr.f32.gmra.mxu0 %v3574
  %v3677 = vpop.f32.mrf.mxu0
  %v3678 = vadd.f32 0.0, %v3677
  %v3679 = vpop.f32.mrf.mxu0
  %3680 = vmatprep.mubr.f32.mxu0 0.0
  %3681 = vmatmul.mubr.f32.gmra.mxu0 %v3575
  %v3682 = vpop.f32.mrf.mxu0
  %v3683 = vadd.f32 0.0, %v3682
  %v3684 = vpop.f32.mrf.mxu0
  %3685 = vmatprep.mubr.f32.mxu0 0.0
  %3686 = vmatmul.mubr.f32.gmra.mxu0 %v3576
  %v3687 = vpop.f32.mrf.mxu0
  %v3688 = vadd.f32 0.0, %v3687
  %v3689 = vpop.f32.mrf.mxu0
  %3690 = vmatprep.mubr.f32.mxu0 0.0
  %3691 = vmatmul.mubr.f32.gmra.mxu0 %v3577
  %v3692 = vpop.f32.mrf.mxu0
  %v3693 = vadd.f32 0.0, %v3692
  %v3694 = vpop.f32.mrf.mxu0
  %3695 = vmatprep.mubr.f32.mxu0 0.0
  %3696 = vmatmul.mubr.f32.gmra.mxu0 %v3578
  %v3697 = vpop.f32.mrf.mxu0
  %v3698 = vadd.f32 0.0, %v3697
  %v3699 = vpop.f32.mrf.mxu0
  %3700 = vmatprep.mubr.f32.mxu0 0.0
  %3701 = vmatmul.mubr.f32.gmra.mxu0 %v3579
  %v3702 = vpop.f32.mrf.mxu0
  %v3703 = vadd.f32 0.0, %v3702
  %v3704 = vpop.f32.mrf.mxu0
  %3705 = vmatprep.mubr.f32.mxu0 0.0
  %3706 = vmatmul.mubr.f32.gmra.mxu0 %v3580
  %v3707 = vpop.f32.mrf.mxu0
  %v3708 = vadd.f32 0.0, %v3707
  %v3709 = vpop.f32.mrf.mxu0
  %3710 = vmatprep.mubr.f32.mxu0 0.0
  %3711 = vmatmul.mubr.f32.gmra.mxu0 %v3581
  %v3712 = vpop.f32.mrf.mxu0
  %v3713 = vadd.f32 0.0, %v3712
  %v3714 = vpop.f32.mrf.mxu0
  %3715 = vmatprep.mubr.f32.mxu0 0.0
  %3716 = vmatmul.mubr.f32.gmra.mxu0 %v3582
  %v3717 = vpop.f32.mrf.mxu0
  %v3718 = vadd.f32 0.0, %v3717
  %v3719 = vpop.f32.mrf.mxu0
  %3720 = vmatprep.mubr.f32.mxu0 0.0
  %3721 = vmatmul.mubr.f32.gmra.mxu0 %v3583
  %v3722 = vpop.f32.mrf.mxu0
  %v3723 = vadd.f32 0.0, %v3722
  %v3724 = vpop.f32.mrf.mxu0
  %3725 = vmatprep.mubr.f32.mxu0 0.0
  %3726 = vmatmul.mubr.f32.gmra.mxu0 %v3584
  %v3727 = vpop.f32.mrf.mxu0
  %v3728 = vadd.f32 0.0, %v3727
  %v3729 = vpop.f32.mrf.mxu0
  %3730 = vmatprep.mubr.f32.mxu0 0.0
  %3731 = vmatmul.mubr.f32.gmra.mxu0 %v3585
  %v3732 = vpop.f32.mrf.mxu0
  %v3733 = vadd.f32 0.0, %v3732
  %v3734 = vpop.f32.mrf.mxu0
  %3735 = vmatprep.mubr.f32.mxu0 0.0
  %3736 = vmatmul.mubr.f32.gmra.mxu0 %v3586
  %v3737 = vpop.f32.mrf.mxu0
  %v3738 = vadd.f32 0.0, %v3737
  %v3739 = vpop.f32.mrf.mxu0
  %3740 = vmatprep.mubr.f32.mxu0 0.0
  %3741 = vmatmul.mubr.f32.gmra.mxu0 %v3587
  %v3742 = vpop.f32.mrf.mxu0
  %v3743 = vadd.f32 0.0, %v3742
  %v3744 = vpop.f32.mrf.mxu0
  %3745 = vmatprep.mubr.f32.mxu0 0.0
  %3746 = vmatmul.mubr.f32.gmra.mxu0 %v3588
  %v3747 = vpop.f32.mrf.mxu0
  %v3748 = vadd.f32 0.0, %v3747
  %v3749 = vpop.f32.mrf.mxu0
  %3750 = vdwg.mxu0
  %v3751 = vadd.f32 %v3556, %v3673
  %v3752 = vadd.f32 %v3557, %v3678
  %v3753 = vadd.f32 %v3558, %v3683
  %v3754 = vadd.f32 %v3559, %v3688
  %v3755 = vadd.f32 %v3560, %v3693
  %v3756 = vadd.f32 %v3561, %v3698
  %v3757 = vadd.f32 %v3562, %v3703
  %v3758 = vadd.f32 %v3563, %v3708
  %v3759 = vadd.f32 %v3564, %v3713
  %v3760 = vadd.f32 %v3565, %v3718
  %v3761 = vadd.f32 %v3566, %v3723
  %v3762 = vadd.f32 %v3567, %v3728
  %v3763 = vadd.f32 %v3568, %v3733
  %v3764 = vadd.f32 %v3569, %v3738
  %v3765 = vadd.f32 %v3570, %v3743
  %v3766 = vadd.f32 %v3571, %v3748
  %v3767 = vld [vmem:[%s3572 + $0x1] sm:$0xff]
  %v3768 = vld [vmem:[%s3572 + $0x11] sm:$0xff]
  %v3769 = vld [vmem:[%s3572 + $0x21] sm:$0xff]
  %v3770 = vld [vmem:[%s3572 + $0x31] sm:$0xff]
  %v3771 = vld [vmem:[%s3572 + $0x41] sm:$0xff]
  %v3772 = vld [vmem:[%s3572 + $0x51] sm:$0xff]
  %v3773 = vld [vmem:[%s3572 + $0x61] sm:$0xff]
  %v3774 = vld [vmem:[%s3572 + $0x71] sm:$0xff]
  %v3775 = vld [vmem:[%s3572 + $0xa1] sm:$0xff]
  %v3776 = vld [vmem:[%s3572 + $0xb1] sm:$0xff]
  %v3777 = vld [vmem:[%s3572 + $0xc1] sm:$0xff]
  %v3778 = vld [vmem:[%s3572 + $0xd1] sm:$0xff]
  %v3779 = vld [vmem:[%s3572 + $0xe1] sm:$0xff]
  %v3780 = vld [vmem:[%s3572 + $0xf1] sm:$0xff]
  %v3781 = vld [vmem:[%s3572 + $0x101] sm:$0xff]
  %v3782 = vld [vmem:[%s3572 + $0x111] sm:$0xff]
  %s3783 = scalar_lea.vmem %s3, 896
  %v3784 = vld [vmem:[%s3783] sm:$0xff]
  %v3785 = vld [vmem:[%s3783 + $0x8] sm:$0xff]
  %v3786 = vld [vmem:[%s3783 + $0x10] sm:$0xff]
  %v3787 = vld [vmem:[%s3783 + $0x18] sm:$0xff]
  %v3788 = vld [vmem:[%s3783 + $0x20] sm:$0xff]
  %v3789 = vld [vmem:[%s3783 + $0x28] sm:$0xff]
  %v3790 = vld [vmem:[%s3783 + $0x30] sm:$0xff]
  %v3791 = vld [vmem:[%s3783 + $0x38] sm:$0xff]
  %v3792 = vld [vmem:[%s3783 + $0x40] sm:$0xff]
  %v3793 = vld [vmem:[%s3783 + $0x48] sm:$0xff]
  %v3794 = vld [vmem:[%s3783 + $0x50] sm:$0xff]
  %v3795 = vld [vmem:[%s3783 + $0x58] sm:$0xff]
  %v3796 = vld [vmem:[%s3783 + $0x60] sm:$0xff]
  %v3797 = vld [vmem:[%s3783 + $0x68] sm:$0xff]
  %v3798 = vld [vmem:[%s3783 + $0x70] sm:$0xff]
  %v3799 = vld [vmem:[%s3783 + $0x78] sm:$0xff]
  %3800 = vmatprep.subr.mxu0 0.0
  %3801 = vmatpush1.msra.mxu0 %v3799
  %3802 = vmatprep.subr.mxu0 0.0
  %3803 = vmatpush1.msra.mxu0 %v3798
  %3804 = vmatprep.subr.mxu0 0.0
  %3805 = vmatpush1.msra.mxu0 %v3797
  %3806 = vmatprep.subr.mxu0 0.0
  %3807 = vmatpush1.msra.mxu0 %v3796
  %3808 = vmatprep.subr.mxu0 0.0
  %3809 = vmatpush1.msra.mxu0 %v3795
  %3810 = vmatprep.subr.mxu0 0.0
  %3811 = vmatpush1.msra.mxu0 %v3794
  %3812 = vmatprep.subr.mxu0 0.0
  %3813 = vmatpush1.msra.mxu0 %v3793
  %3814 = vmatprep.subr.mxu0 0.0
  %3815 = vmatpush1.msra.mxu0 %v3792
  %3816 = vmatprep.subr.mxu0 0.0
  %3817 = vmatpush1.msra.mxu0 %v3791
  %3818 = vmatprep.subr.mxu0 0.0
  %3819 = vmatpush1.msra.mxu0 %v3790
  %3820 = vmatprep.subr.mxu0 0.0
  %3821 = vmatpush1.msra.mxu0 %v3789
  %3822 = vmatprep.subr.mxu0 0.0
  %3823 = vmatpush1.msra.mxu0 %v3788
  %3824 = vmatprep.subr.mxu0 0.0
  %3825 = vmatpush1.msra.mxu0 %v3787
  %3826 = vmatprep.subr.mxu0 0.0
  %3827 = vmatpush1.msra.mxu0 %v3786
  %3828 = vmatprep.subr.mxu0 0.0
  %3829 = vmatpush1.msra.mxu0 %v3785
  %3830 = vmatprep.subr.mxu0 0.0
  %3831 = vmatpush1.msra.mxu0 %v3784
  %3832 = vmatprep.subr.mxu0 0.0
  %3833 = vmatpush2.msra.mxu0 0.0
  %3834 = vmatprep.subr.mxu0 0.0
  %3835 = vmatpush2.msra.mxu0 0.0
  %3836 = vmatprep.subr.mxu0 0.0
  %3837 = vmatpush2.msra.mxu0 0.0
  %3838 = vmatprep.subr.mxu0 0.0
  %3839 = vmatpush2.msra.mxu0 0.0
  %3840 = vmatprep.subr.mxu0 0.0
  %3841 = vmatpush2.msra.mxu0 0.0
  %3842 = vmatprep.subr.mxu0 0.0
  %3843 = vmatpush2.msra.mxu0 0.0
  %3844 = vmatprep.subr.mxu0 0.0
  %3845 = vmatpush2.msra.mxu0 0.0
  %3846 = vmatprep.subr.mxu0 0.0
  %3847 = vmatpush2.msra.mxu0 0.0
  %3848 = vmatprep.subr.mxu0 0.0
  %3849 = vmatpush2.msra.mxu0 0.0
  %3850 = vmatprep.subr.mxu0 0.0
  %3851 = vmatpush2.msra.mxu0 0.0
  %3852 = vmatprep.subr.mxu0 0.0
  %3853 = vmatpush2.msra.mxu0 0.0
  %3854 = vmatprep.subr.mxu0 0.0
  %3855 = vmatpush2.msra.mxu0 0.0
  %3856 = vmatprep.subr.mxu0 0.0
  %3857 = vmatpush2.msra.mxu0 0.0
  %3858 = vmatprep.subr.mxu0 0.0
  %3859 = vmatpush2.msra.mxu0 0.0
  %3860 = vmatprep.subr.mxu0 0.0
  %3861 = vmatpush2.msra.mxu0 0.0
  %3862 = vmatprep.subr.mxu0 0.0
  %3863 = vmatpush2.msra.mxu0 0.0
  %3864 = vmatprep.mubr.f32.mxu0 0.0
  %3865 = vmatmul.mubr.f32.gmra.mxu0 %v3767
  %v3866 = vpop.f32.mrf.mxu0
  %v3867 = vadd.f32 0.0, %v3866
  %v3868 = vpop.f32.mrf.mxu0
  %3869 = vmatprep.mubr.f32.mxu0 0.0
  %3870 = vmatmul.mubr.f32.gmra.mxu0 %v3768
  %v3871 = vpop.f32.mrf.mxu0
  %v3872 = vadd.f32 0.0, %v3871
  %v3873 = vpop.f32.mrf.mxu0
  %3874 = vmatprep.mubr.f32.mxu0 0.0
  %3875 = vmatmul.mubr.f32.gmra.mxu0 %v3769
  %v3876 = vpop.f32.mrf.mxu0
  %v3877 = vadd.f32 0.0, %v3876
  %v3878 = vpop.f32.mrf.mxu0
  %3879 = vmatprep.mubr.f32.mxu0 0.0
  %3880 = vmatmul.mubr.f32.gmra.mxu0 %v3770
  %v3881 = vpop.f32.mrf.mxu0
  %v3882 = vadd.f32 0.0, %v3881
  %v3883 = vpop.f32.mrf.mxu0
  %3884 = vmatprep.mubr.f32.mxu0 0.0
  %3885 = vmatmul.mubr.f32.gmra.mxu0 %v3771
  %v3886 = vpop.f32.mrf.mxu0
  %v3887 = vadd.f32 0.0, %v3886
  %v3888 = vpop.f32.mrf.mxu0
  %3889 = vmatprep.mubr.f32.mxu0 0.0
  %3890 = vmatmul.mubr.f32.gmra.mxu0 %v3772
  %v3891 = vpop.f32.mrf.mxu0
  %v3892 = vadd.f32 0.0, %v3891
  %v3893 = vpop.f32.mrf.mxu0
  %3894 = vmatprep.mubr.f32.mxu0 0.0
  %3895 = vmatmul.mubr.f32.gmra.mxu0 %v3773
  %v3896 = vpop.f32.mrf.mxu0
  %v3897 = vadd.f32 0.0, %v3896
  %v3898 = vpop.f32.mrf.mxu0
  %3899 = vmatprep.mubr.f32.mxu0 0.0
  %3900 = vmatmul.mubr.f32.gmra.mxu0 %v3774
  %v3901 = vpop.f32.mrf.mxu0
  %v3902 = vadd.f32 0.0, %v3901
  %v3903 = vpop.f32.mrf.mxu0
  %3904 = vmatprep.mubr.f32.mxu0 0.0
  %3905 = vmatmul.mubr.f32.gmra.mxu0 %v3775
  %v3906 = vpop.f32.mrf.mxu0
  %v3907 = vadd.f32 0.0, %v3906
  %v3908 = vpop.f32.mrf.mxu0
  %3909 = vmatprep.mubr.f32.mxu0 0.0
  %3910 = vmatmul.mubr.f32.gmra.mxu0 %v3776
  %v3911 = vpop.f32.mrf.mxu0
  %v3912 = vadd.f32 0.0, %v3911
  %v3913 = vpop.f32.mrf.mxu0
  %3914 = vmatprep.mubr.f32.mxu0 0.0
  %3915 = vmatmul.mubr.f32.gmra.mxu0 %v3777
  %v3916 = vpop.f32.mrf.mxu0
  %v3917 = vadd.f32 0.0, %v3916
  %v3918 = vpop.f32.mrf.mxu0
  %3919 = vmatprep.mubr.f32.mxu0 0.0
  %3920 = vmatmul.mubr.f32.gmra.mxu0 %v3778
  %v3921 = vpop.f32.mrf.mxu0
  %v3922 = vadd.f32 0.0, %v3921
  %v3923 = vpop.f32.mrf.mxu0
  %3924 = vmatprep.mubr.f32.mxu0 0.0
  %3925 = vmatmul.mubr.f32.gmra.mxu0 %v3779
  %v3926 = vpop.f32.mrf.mxu0
  %v3927 = vadd.f32 0.0, %v3926
  %v3928 = vpop.f32.mrf.mxu0
  %3929 = vmatprep.mubr.f32.mxu0 0.0
  %3930 = vmatmul.mubr.f32.gmra.mxu0 %v3780
  %v3931 = vpop.f32.mrf.mxu0
  %v3932 = vadd.f32 0.0, %v3931
  %v3933 = vpop.f32.mrf.mxu0
  %3934 = vmatprep.mubr.f32.mxu0 0.0
  %3935 = vmatmul.mubr.f32.gmra.mxu0 %v3781
  %v3936 = vpop.f32.mrf.mxu0
  %v3937 = vadd.f32 0.0, %v3936
  %v3938 = vpop.f32.mrf.mxu0
  %3939 = vmatprep.mubr.f32.mxu0 0.0
  %3940 = vmatmul.mubr.f32.gmra.mxu0 %v3782
  %v3941 = vpop.f32.mrf.mxu0
  %v3942 = vadd.f32 0.0, %v3941
  %v3943 = vpop.f32.mrf.mxu0
  %3944 = vdwg.mxu0
  %v3945 = vadd.f32 %v3751, %v3867
  %v3946 = vadd.f32 %v3752, %v3872
  %v3947 = vadd.f32 %v3753, %v3877
  %v3948 = vadd.f32 %v3754, %v3882
  %v3949 = vadd.f32 %v3755, %v3887
  %v3950 = vadd.f32 %v3756, %v3892
  %v3951 = vadd.f32 %v3757, %v3897
  %v3952 = vadd.f32 %v3758, %v3902
  %v3953 = vadd.f32 %v3759, %v3907
  %v3954 = vadd.f32 %v3760, %v3912
  %v3955 = vadd.f32 %v3761, %v3917
  %v3956 = vadd.f32 %v3762, %v3922
  %v3957 = vadd.f32 %v3763, %v3927
  %v3958 = vadd.f32 %v3764, %v3932
  %v3959 = vadd.f32 %v3765, %v3937
  %v3960 = vadd.f32 %v3766, %v3942
  %v3961 = vld [vmem:[%s3572 + $0x2] sm:$0xff]
  %v3962 = vld [vmem:[%s3572 + $0x12] sm:$0xff]
  %v3963 = vld [vmem:[%s3572 + $0x22] sm:$0xff]
  %v3964 = vld [vmem:[%s3572 + $0x32] sm:$0xff]
  %v3965 = vld [vmem:[%s3572 + $0x42] sm:$0xff]
  %v3966 = vld [vmem:[%s3572 + $0x52] sm:$0xff]
  %v3967 = vld [vmem:[%s3572 + $0x62] sm:$0xff]
  %v3968 = vld [vmem:[%s3572 + $0x72] sm:$0xff]
  %v3969 = vld [vmem:[%s3572 + $0xa2] sm:$0xff]
  %v3970 = vld [vmem:[%s3572 + $0xb2] sm:$0xff]
  %v3971 = vld [vmem:[%s3572 + $0xc2] sm:$0xff]
  %v3972 = vld [vmem:[%s3572 + $0xd2] sm:$0xff]
  %v3973 = vld [vmem:[%s3572 + $0xe2] sm:$0xff]
  %v3974 = vld [vmem:[%s3572 + $0xf2] sm:$0xff]
  %v3975 = vld [vmem:[%s3572 + $0x102] sm:$0xff]
  %v3976 = vld [vmem:[%s3572 + $0x112] sm:$0xff]
  %s3977 = scalar_lea.vmem %s3, 1024
  %v3978 = vld [vmem:[%s3977] sm:$0xff]
  %v3979 = vld [vmem:[%s3977 + $0x8] sm:$0xff]
  %v3980 = vld [vmem:[%s3977 + $0x10] sm:$0xff]
  %v3981 = vld [vmem:[%s3977 + $0x18] sm:$0xff]
  %v3982 = vld [vmem:[%s3977 + $0x20] sm:$0xff]
  %v3983 = vld [vmem:[%s3977 + $0x28] sm:$0xff]
  %v3984 = vld [vmem:[%s3977 + $0x30] sm:$0xff]
  %v3985 = vld [vmem:[%s3977 + $0x38] sm:$0xff]
  %v3986 = vld [vmem:[%s3977 + $0x40] sm:$0xff]
  %v3987 = vld [vmem:[%s3977 + $0x48] sm:$0xff]
  %v3988 = vld [vmem:[%s3977 + $0x50] sm:$0xff]
  %v3989 = vld [vmem:[%s3977 + $0x58] sm:$0xff]
  %v3990 = vld [vmem:[%s3977 + $0x60] sm:$0xff]
  %v3991 = vld [vmem:[%s3977 + $0x68] sm:$0xff]
  %v3992 = vld [vmem:[%s3977 + $0x70] sm:$0xff]
  %v3993 = vld [vmem:[%s3977 + $0x78] sm:$0xff]
  %3994 = vmatprep.subr.mxu0 0.0
  %3995 = vmatpush1.msra.mxu0 %v3993
  %3996 = vmatprep.subr.mxu0 0.0
  %3997 = vmatpush1.msra.mxu0 %v3992
  %3998 = vmatprep.subr.mxu0 0.0
  %3999 = vmatpush1.msra.mxu0 %v3991
  %4000 = vmatprep.subr.mxu0 0.0
  %4001 = vmatpush1.msra.mxu0 %v3990
  %4002 = vmatprep.subr.mxu0 0.0
  %4003 = vmatpush1.msra.mxu0 %v3989
  %4004 = vmatprep.subr.mxu0 0.0
  %4005 = vmatpush1.msra.mxu0 %v3988
  %4006 = vmatprep.subr.mxu0 0.0
  %4007 = vmatpush1.msra.mxu0 %v3987
  %4008 = vmatprep.subr.mxu0 0.0
  %4009 = vmatpush1.msra.mxu0 %v3986
  %4010 = vmatprep.subr.mxu0 0.0
  %4011 = vmatpush1.msra.mxu0 %v3985
  %4012 = vmatprep.subr.mxu0 0.0
  %4013 = vmatpush1.msra.mxu0 %v3984
  %4014 = vmatprep.subr.mxu0 0.0
  %4015 = vmatpush1.msra.mxu0 %v3983
  %4016 = vmatprep.subr.mxu0 0.0
  %4017 = vmatpush1.msra.mxu0 %v3982
  %4018 = vmatprep.subr.mxu0 0.0
  %4019 = vmatpush1.msra.mxu0 %v3981
  %4020 = vmatprep.subr.mxu0 0.0
  %4021 = vmatpush1.msra.mxu0 %v3980
  %4022 = vmatprep.subr.mxu0 0.0
  %4023 = vmatpush1.msra.mxu0 %v3979
  %4024 = vmatprep.subr.mxu0 0.0
  %4025 = vmatpush1.msra.mxu0 %v3978
  %4026 = vmatprep.subr.mxu0 0.0
  %4027 = vmatpush2.msra.mxu0 0.0
  %4028 = vmatprep.subr.mxu0 0.0
  %4029 = vmatpush2.msra.mxu0 0.0
  %4030 = vmatprep.subr.mxu0 0.0
  %4031 = vmatpush2.msra.mxu0 0.0
  %4032 = vmatprep.subr.mxu0 0.0
  %4033 = vmatpush2.msra.mxu0 0.0
  %4034 = vmatprep.subr.mxu0 0.0
  %4035 = vmatpush2.msra.mxu0 0.0
  %4036 = vmatprep.subr.mxu0 0.0
  %4037 = vmatpush2.msra.mxu0 0.0
  %4038 = vmatprep.subr.mxu0 0.0
  %4039 = vmatpush2.msra.mxu0 0.0
  %4040 = vmatprep.subr.mxu0 0.0
  %4041 = vmatpush2.msra.mxu0 0.0
  %4042 = vmatprep.subr.mxu0 0.0
  %4043 = vmatpush2.msra.mxu0 0.0
  %4044 = vmatprep.subr.mxu0 0.0
  %4045 = vmatpush2.msra.mxu0 0.0
  %4046 = vmatprep.subr.mxu0 0.0
  %4047 = vmatpush2.msra.mxu0 0.0
  %4048 = vmatprep.subr.mxu0 0.0
  %4049 = vmatpush2.msra.mxu0 0.0
  %4050 = vmatprep.subr.mxu0 0.0
  %4051 = vmatpush2.msra.mxu0 0.0
  %4052 = vmatprep.subr.mxu0 0.0
  %4053 = vmatpush2.msra.mxu0 0.0
  %4054 = vmatprep.subr.mxu0 0.0
  %4055 = vmatpush2.msra.mxu0 0.0
  %4056 = vmatprep.subr.mxu0 0.0
  %4057 = vmatpush2.msra.mxu0 0.0
  %4058 = vmatprep.mubr.f32.mxu0 0.0
  %4059 = vmatmul.mubr.f32.gmra.mxu0 %v3961
  %v4060 = vpop.f32.mrf.mxu0
  %v4061 = vadd.f32 0.0, %v4060
  %v4062 = vpop.f32.mrf.mxu0
  %4063 = vmatprep.mubr.f32.mxu0 0.0
  %4064 = vmatmul.mubr.f32.gmra.mxu0 %v3962
  %v4065 = vpop.f32.mrf.mxu0
  %v4066 = vadd.f32 0.0, %v4065
  %v4067 = vpop.f32.mrf.mxu0
  %4068 = vmatprep.mubr.f32.mxu0 0.0
  %4069 = vmatmul.mubr.f32.gmra.mxu0 %v3963
  %v4070 = vpop.f32.mrf.mxu0
  %v4071 = vadd.f32 0.0, %v4070
  %v4072 = vpop.f32.mrf.mxu0
  %4073 = vmatprep.mubr.f32.mxu0 0.0
  %4074 = vmatmul.mubr.f32.gmra.mxu0 %v3964
  %v4075 = vpop.f32.mrf.mxu0
  %v4076 = vadd.f32 0.0, %v4075
  %v4077 = vpop.f32.mrf.mxu0
  %4078 = vmatprep.mubr.f32.mxu0 0.0
  %4079 = vmatmul.mubr.f32.gmra.mxu0 %v3965
  %v4080 = vpop.f32.mrf.mxu0
  %v4081 = vadd.f32 0.0, %v4080
  %v4082 = vpop.f32.mrf.mxu0
  %4083 = vmatprep.mubr.f32.mxu0 0.0
  %4084 = vmatmul.mubr.f32.gmra.mxu0 %v3966
  %v4085 = vpop.f32.mrf.mxu0
  %v4086 = vadd.f32 0.0, %v4085
  %v4087 = vpop.f32.mrf.mxu0
  %4088 = vmatprep.mubr.f32.mxu0 0.0
  %4089 = vmatmul.mubr.f32.gmra.mxu0 %v3967
  %v4090 = vpop.f32.mrf.mxu0
  %v4091 = vadd.f32 0.0, %v4090
  %v4092 = vpop.f32.mrf.mxu0
  %4093 = vmatprep.mubr.f32.mxu0 0.0
  %4094 = vmatmul.mubr.f32.gmra.mxu0 %v3968
  %v4095 = vpop.f32.mrf.mxu0
  %v4096 = vadd.f32 0.0, %v4095
  %v4097 = vpop.f32.mrf.mxu0
  %4098 = vmatprep.mubr.f32.mxu0 0.0
  %4099 = vmatmul.mubr.f32.gmra.mxu0 %v3969
  %v4100 = vpop.f32.mrf.mxu0
  %v4101 = vadd.f32 0.0, %v4100
  %v4102 = vpop.f32.mrf.mxu0
  %4103 = vmatprep.mubr.f32.mxu0 0.0
  %4104 = vmatmul.mubr.f32.gmra.mxu0 %v3970
  %v4105 = vpop.f32.mrf.mxu0
  %v4106 = vadd.f32 0.0, %v4105
  %v4107 = vpop.f32.mrf.mxu0
  %4108 = vmatprep.mubr.f32.mxu0 0.0
  %4109 = vmatmul.mubr.f32.gmra.mxu0 %v3971
  %v4110 = vpop.f32.mrf.mxu0
  %v4111 = vadd.f32 0.0, %v4110
  %v4112 = vpop.f32.mrf.mxu0
  %4113 = vmatprep.mubr.f32.mxu0 0.0
  %4114 = vmatmul.mubr.f32.gmra.mxu0 %v3972
  %v4115 = vpop.f32.mrf.mxu0
  %v4116 = vadd.f32 0.0, %v4115
  %v4117 = vpop.f32.mrf.mxu0
  %4118 = vmatprep.mubr.f32.mxu0 0.0
  %4119 = vmatmul.mubr.f32.gmra.mxu0 %v3973
  %v4120 = vpop.f32.mrf.mxu0
  %v4121 = vadd.f32 0.0, %v4120
  %v4122 = vpop.f32.mrf.mxu0
  %4123 = vmatprep.mubr.f32.mxu0 0.0
  %4124 = vmatmul.mubr.f32.gmra.mxu0 %v3974
  %v4125 = vpop.f32.mrf.mxu0
  %v4126 = vadd.f32 0.0, %v4125
  %v4127 = vpop.f32.mrf.mxu0
  %4128 = vmatprep.mubr.f32.mxu0 0.0
  %4129 = vmatmul.mubr.f32.gmra.mxu0 %v3975
  %v4130 = vpop.f32.mrf.mxu0
  %v4131 = vadd.f32 0.0, %v4130
  %v4132 = vpop.f32.mrf.mxu0
  %4133 = vmatprep.mubr.f32.mxu0 0.0
  %4134 = vmatmul.mubr.f32.gmra.mxu0 %v3976
  %v4135 = vpop.f32.mrf.mxu0
  %v4136 = vadd.f32 0.0, %v4135
  %v4137 = vpop.f32.mrf.mxu0
  %4138 = vdwg.mxu0
  %v4139 = vadd.f32 %v3945, %v4061
  %v4140 = vadd.f32 %v3946, %v4066
  %v4141 = vadd.f32 %v3947, %v4071
  %v4142 = vadd.f32 %v3948, %v4076
  %v4143 = vadd.f32 %v3949, %v4081
  %v4144 = vadd.f32 %v3950, %v4086
  %v4145 = vadd.f32 %v3951, %v4091
  %v4146 = vadd.f32 %v3952, %v4096
  %v4147 = vadd.f32 %v3953, %v4101
  %v4148 = vadd.f32 %v3954, %v4106
  %v4149 = vadd.f32 %v3955, %v4111
  %v4150 = vadd.f32 %v3956, %v4116
  %v4151 = vadd.f32 %v3957, %v4121
  %v4152 = vadd.f32 %v3958, %v4126
  %v4153 = vadd.f32 %v3959, %v4131
  %v4154 = vadd.f32 %v3960, %v4136
  %v4155 = vld [vmem:[%s4] sm:$0x1]
  %v4157 = vlaneseq
  %v4158 = vshrl.u32 %v4157, 7
  %v4159 = vsub.s32 0, %v4158
  %v4160 = vrot.slane %v4155, %v4159
  %v4162 = vadd.f32 %v4139, %v4160
  %v4163 = vadd.f32 %v4140, %v4160
  %v4164 = vadd.f32 %v4141, %v4160
  %v4165 = vadd.f32 %v4142, %v4160
  %v4166 = vadd.f32 %v4143, %v4160
  %v4167 = vadd.f32 %v4144, %v4160
  %v4168 = vadd.f32 %v4145, %v4160
  %v4169 = vadd.f32 %v4146, %v4160
  %v4170 = vadd.f32 %v4147, %v4160
  %v4171 = vadd.f32 %v4148, %v4160
  %v4172 = vadd.f32 %v4149, %v4160
  %v4173 = vadd.f32 %v4150, %v4160
  %v4174 = vadd.f32 %v4151, %v4160
  %v4175 = vadd.f32 %v4152, %v4160
  %v4176 = vadd.f32 %v4153, %v4160
  %v4177 = vadd.f32 %v4154, %v4160
  %v4178 = vmax.f32 %v4162, 0.0
  %v4179 = vmax.f32 %v4163, 0.0
  %v4180 = vmax.f32 %v4164, 0.0
  %v4181 = vmax.f32 %v4165, 0.0
  %v4182 = vmax.f32 %v4166, 0.0
  %v4183 = vmax.f32 %v4167, 0.0
  %v4184 = vmax.f32 %v4168, 0.0
  %v4185 = vmax.f32 %v4169, 0.0
  %v4186 = vmax.f32 %v4170, 0.0
  %v4187 = vmax.f32 %v4171, 0.0
  %v4188 = vmax.f32 %v4172, 0.0
  %v4189 = vmax.f32 %v4173, 0.0
  %v4190 = vmax.f32 %v4174, 0.0
  %v4191 = vmax.f32 %v4175, 0.0
  %v4192 = vmax.f32 %v4176, 0.0
  %v4193 = vmax.f32 %v4177, 0.0
  %4194 = vst [vmem:[%s5] sm:$0xff] %v4178
  %4195 = vst [vmem:[%s5 + $0x8] sm:$0xff] %v4179
  %4196 = vst [vmem:[%s5 + $0x10] sm:$0xff] %v4180
  %4197 = vst [vmem:[%s5 + $0x18] sm:$0xff] %v4181
  %4198 = vst [vmem:[%s5 + $0x20] sm:$0xff] %v4182
  %4199 = vst [vmem:[%s5 + $0x28] sm:$0xff] %v4183
  %4200 = vst [vmem:[%s5 + $0x30] sm:$0xff] %v4184
  %4201 = vst [vmem:[%s5 + $0x38] sm:$0xff] %v4185
  %4202 = vst [vmem:[%s5 + $0x40] sm:$0xff] %v4186
  %4203 = vst [vmem:[%s5 + $0x48] sm:$0xff] %v4187
  %4204 = vst [vmem:[%s5 + $0x50] sm:$0xff] %v4188
  %4205 = vst [vmem:[%s5 + $0x58] sm:$0xff] %v4189
  %4206 = vst [vmem:[%s5 + $0x60] sm:$0xff] %v4190
  %4207 = vst [vmem:[%s5 + $0x68] sm:$0xff] %v4191
  %4208 = vst [vmem:[%s5 + $0x70] sm:$0xff] %v4192
  %4209 = vst [vmem:[%s5 + $0x78] sm:$0xff] %v4193
  // Predicated region
  $region22: #{down_block.1} parent=0 // pred_check
    _
  $region23: #{down_block.1} parent=0 // pred_check_branch
    %4211 = sbr.rel (0) target = $region25
  $region24: #{down_block.1} parent=0 // pred_region
    _
  $region25: #{down_block.1} parent=0 // pred_fallthru
    _
  // Predicated region
  $region26: #{down_block.1} parent=0 // pred_check
    _
  $region27: #{down_block.1} parent=0 // pred_check_branch
    %4213 = sbr.rel (0) target = $region29
  $region28: #{down_block.1} parent=0 // pred_region
    _
  $region29: #{down_block.1} parent=0 // pred_fallthru
    _

</llo_original>
